<compile_context>
chip_gen: v7x
topology: tpu7x:2x2x1
jax: 0.10.0
libtpu: 0.0.40
codegen_flags: <defaults>
</compile_context>

<pallas_src>
import functools
import math

import jax
import jax.numpy as jnp
from jax import lax
from jax.experimental import pallas as pl
from jax.experimental.pallas import tpu as pltpu


# ----------------------------- in-kernel helpers -----------------------------

def _layernorm(x, w, b, eps=1e-5):
    x = x.astype(jnp.float32)
    mu = jnp.mean(x, axis=-1, keepdims=True)
    var = jnp.mean((x - mu) ** 2, axis=-1, keepdims=True)
    return (x - mu) * lax.rsqrt(var + eps) * w + b


def _gelu_exact(x):
    # exact erf formulation (used only by the pure-JAX reference).
    return 0.5 * x * (1.0 + lax.erf(x / jnp.sqrt(2.0).astype(x.dtype)))


# ------------------------------- Pallas kernels -------------------------------

def blocks_kernel(x_ref, bias_ref,
                  ln1w_ref, ln1b_ref,
                  wq_ref, bq_ref, wk_ref, bk_ref, wv_ref, bv_ref,
                  wp_ref, bp_ref,
                  ln2w_ref, ln2b_ref,
                  w1_ref, b1_ref, w2_ref, b2_ref,
                  o_ref, acc_ref, *, n_head):
    """One grid step = one (batch block, layer).  The f32 residual stream stays
    resident in VMEM scratch across the (innermost, 'arbitrary') layer axis."""
    layer = pl.program_id(1)
    n_layer = pl.num_programs(1)
    Bb, T, C = x_ref.shape
    M = Bb * T
    hd = C // n_head
    cdt = wq_ref.dtype                       # bf16 compute dtype

    @pl.when(layer == 0)
    def _():
        acc_ref[...] = x_ref[...].reshape(M, C)   # f32 seed, leading-dim merge only

    x = acc_ref[...]                         # (M, C) f32 residual stream

    # --- attention branch ---
    h1 = _layernorm(x, ln1w_ref[0], ln1b_ref[0]).astype(cdt)       # (M, C)
    # hoist the mask broadcast out of the head loop (JAX does not CSE it)
    mask_b = jnp.broadcast_to(bias_ref[...], (Bb, T, T))           # f32 (0 / -1e30)

    attn_out = None
    for hh in range(n_head):                 # static unroll, H is small
        # head-major weights: (C, hd) / (hd, C); 1/sqrt(hd) pre-folded into wq/bq.
        q = jnp.dot(h1, wq_ref[0, hh], preferred_element_type=jnp.float32) + bq_ref[0, hh]
        k = jnp.dot(h1, wk_ref[0, hh], preferred_element_type=jnp.float32) + bk_ref[0, hh]
        v = jnp.dot(h1, wv_ref[0, hh], preferred_element_type=jnp.float32) + bv_ref[0, hh]
        # (M, hd) -> (Bb, T, hd): splits only the leading/sublane dim (T % 8 == 0).
        q = q.reshape(Bb, T, hd).astype(cdt)
        k = k.reshape(Bb, T, hd).astype(cdt)
        v = v.reshape(Bb, T, hd).astype(cdt)

        att = lax.dot_general(q, k, (((2,), (2,)), ((0,), (0,))),
                              preferred_element_type=jnp.float32)  # (Bb, T, T) f32
        att = jax.nn.softmax(att + mask_b, axis=-1)                # keep f32 pre-softmax
        y = lax.dot_general(att.astype(cdt), v, (((2,), (1,)), ((0,), (0,))),
                            preferred_element_type=jnp.float32)    # (Bb, T, hd)
        y = y.reshape(M, hd).astype(cdt)                           # leading-dim merge
        contrib = jnp.dot(y, wp_ref[0, hh], preferred_element_type=jnp.float32)
        attn_out = contrib if attn_out is None else attn_out + contrib

    x = x + attn_out + bp_ref[0]

    # --- MLP branch ---
    h2 = _layernorm(x, ln2w_ref[0], ln2b_ref[0]).astype(cdt)
    h2 = jnp.dot(h2, w1_ref[0], preferred_element_type=jnp.float32) + b1_ref[0]
    h2 = jax.nn.gelu(h2, approximate=True).astype(cdt)             # tanh form -> EUP
    x = x + jnp.dot(h2, w2_ref[0], preferred_element_type=jnp.float32) + b2_ref[0]

    @pl.when(layer < n_layer - 1)            # skip dead store on the last layer
    def _():
        acc_ref[...] = x

    @pl.when(layer == n_layer - 1)
    def _():
        o_ref[...] = x.reshape(Bb, T, C).astype(o_ref.dtype)


def head_kernel(x_ref, lnw_ref, lnb_ref, w_ref, o_ref):
    """Final LayerNorm over all (sublane-aligned) T rows + one fused,
    lane-dense head matmul; row/column selection happens in the wrapper."""
    Bb, T, C = x_ref.shape
    x = x_ref[...].reshape(Bb * T, C)                 # f32, leading-dim merge
    h = _layernorm(x, lnw_ref[0], lnb_ref[0]).astype(w_ref.dtype)
    out = jnp.dot(h, w_ref[...], preferred_element_type=jnp.float32)
    o_ref[...] = out.reshape(o_ref.shape).astype(o_ref.dtype)


# ------------------------- one-time parameter prep ---------------------------

def prepare_params(block_params, lnf_w, lnf_b, wu, wd, wr, mask, n_head,
                   compute_dtype=jnp.bfloat16):
    """Module-init style prep (call ONCE, not per forward):
      * stack per-layer params on a leading layer axis,
      * re-layout attention weights head-major (H, C, hd) / (H, hd, C),
      * fold 1/sqrt(hd) into wq/bq,
      * matmul weights -> bf16, layernorm params / biases stay f32,
      * build the additive mask bias and the concatenated+128-padded head weight."""
    f32 = jnp.float32
    C = block_params[0][2].shape[0]
    assert C % n_head == 0, "n_embd must be divisible by n_head"
    hd = C // n_head
    scale = 1.0 / math.sqrt(hd)

    def head_major_w(w):                      # (C, C) -> (H, C, hd)
        return jnp.transpose(w.reshape(C, n_head, hd), (1, 0, 2))

    def head_major_b(b):                      # (1, C) -> (H, 1, hd)
        return b.reshape(n_head, hd)[:, None, :]

    per_layer = []
    for (ln1w, ln1b, wq, bq, wk, bk, wv, bv, wp, bp,
         ln2w, ln2b, w1, b1, w2, b2) in block_params:
        per_layer.append((
            ln1w.astype(f32), ln1b.astype(f32),
            head_major_w(wq * scale).astype(compute_dtype),
            head_major_b(bq * scale).astype(f32),
            head_major_w(wk).astype(compute_dtype), head_major_b(bk).astype(f32),
            head_major_w(wv).astype(compute_dtype), head_major_b(bv).astype(f32),
            wp.reshape(n_head, hd, C).astype(compute_dtype), bp.astype(f32),
            ln2w.astype(f32), ln2b.astype(f32),
            w1.astype(compute_dtype), b1.astype(f32),
            w2.astype(compute_dtype), b2.astype(f32)))
    stacked = tuple(jnp.stack([lp[i] for lp in per_layer], axis=0)
                    for i in range(16))

    # additive mask bias: 0 where attention allowed, -1e30 where masked (f32 only)
    mask_bias = jnp.where(mask > 0.5, jnp.float32(0.0), jnp.float32(-1e30))

    v_up, v_down = wu.shape[1], wd.shape[1]
    v_tot = v_up + 2 * v_down
    v_pad = ((v_tot + 127) // 128) * 128
    w_cat = jnp.concatenate([wu, wd, wr], axis=1)
    w_cat = jnp.pad(w_cat, ((0, 0), (0, v_pad - v_tot))).astype(compute_dtype)

    return dict(blocks=stacked, mask_bias=mask_bias,
                lnf_w=lnf_w.astype(f32), lnf_b=lnf_b.astype(f32), w_cat=w_cat)


# --------------------------------- wrappers ----------------------------------

_VMEM_LIMIT = 48 * 1024 * 1024   # explicit; re-derive per generation at prod sizes


def run_blocks(x, mask_bias, stacked_params, n_head, batch_block):
    B, T, C = x.shape
    Bb = batch_block
    assert B % Bb == 0
    n_layer = stacked_params[0].shape[0]

    def act_map(bb, l):
        return (bb, 0, 0)

    def const_map(ndim):
        return lambda bb, l: (0,) * ndim

    def layer_map(ndim):
        return lambda bb, l: (l,) + (0,) * (ndim - 1)

    in_specs = [pl.BlockSpec((Bb, T, C), act_map),
                pl.BlockSpec(mask_bias.shape, const_map(mask_bias.ndim))]
    for p in stacked_params:
        in_specs.append(pl.BlockSpec((1,) + p.shape[1:], layer_map(p.ndim)))

    return pl.pallas_call(
        functools.partial(blocks_kernel, n_head=n_head),
        out_shape=jax.ShapeDtypeStruct((B, T, C), jnp.float32),
        grid=(B // Bb, n_layer),
        in_specs=in_specs,
        out_specs=pl.BlockSpec((Bb, T, C), act_map),
        scratch_shapes=[pltpu.VMEM((Bb * T, C), jnp.float32)],
        compiler_params=pltpu.CompilerParams(
            dimension_semantics=("parallel", "arbitrary"),
            vmem_limit_bytes=_VMEM_LIMIT),
    )(x.astype(jnp.float32), mask_bias, *stacked_params)


def run_head(x, lnw, lnb, w_cat, batch_block):
    B, T, C = x.shape
    Bb = batch_block
    v_pad = w_cat.shape[1]
    return pl.pallas_call(
        head_kernel,
        out_shape=jax.ShapeDtypeStruct((B, T, v_pad), jnp.float32),
        grid=(B // Bb,),
        in_specs=[pl.BlockSpec((Bb, T, C), lambda bb: (bb, 0, 0)),
                  pl.BlockSpec(lnw.shape, lambda bb: (0, 0)),
                  pl.BlockSpec(lnb.shape, lambda bb: (0, 0)),
                  pl.BlockSpec(w_cat.shape, lambda bb: (0, 0))],
        out_specs=pl.BlockSpec((Bb, T, v_pad), lambda bb: (bb, 0, 0)),
        compiler_params=pltpu.CompilerParams(
            dimension_semantics=("parallel",),
            vmem_limit_bytes=_VMEM_LIMIT),
    )(x, lnw, lnb, w_cat)


def cross_cond_gpt_head_forward(x, prepared, *, n_head, vocab_up, vocab_down,
                                batch_block):
    """Full CrossCondGPTHead.forward (targets=None path)."""
    B, T, C = x.shape
    assert T % 4 == 0, "block_size must be divisible by 4"
    t = T // 4

    x = run_blocks(x, prepared["mask_bias"], prepared["blocks"],
                   n_head, batch_block)
    out = run_head(x, prepared["lnf_w"], prepared["lnf_b"],
                   prepared["w_cat"], batch_block)

    logits_up = out[:, t:2 * t, 0:vocab_up]
    logits_down = out[:, 2 * t:3 * t, vocab_up:vocab_up + vocab_down]
    logits_root = out[:, 3 * t:4 * t, vocab_up + vocab_down:vocab_up + 2 * vocab_down]
    return logits_up, logits_down, logits_root, None, None, None


# ----------------------------- pure-JAX reference -----------------------------

def _ref_forward(x, block_params, lnf_w, lnf_b, wu, wd, wr, mask, n_head):
    B, T, C = x.shape
    hd = C // n_head
    for (ln1w, ln1b, wq, bq, wk, bk, wv, bv, wp, bp,
         ln2w, ln2b, w1, b1, w2, b2) in block_params:
        h = _layernorm(x, ln1w[0], ln1b[0])
        q = (h @ wq + bq[0]).reshape(B, T, n_head, hd)
        k = (h @ wk + bk[0]).reshape(B, T, n_head, hd)
        v = (h @ wv + bv[0]).reshape(B, T, n_head, hd)
        att = jnp.einsum('bthd,bshd->bhts', q, k) / math.sqrt(hd)
        att = jnp.where(mask[None, None] == 0.0, -jnp.inf, att)
        att = jax.nn.softmax(att, axis=-1)
        y = jnp.einsum('bhts,bshd->bthd', att, v).reshape(B, T, C)
        x = x + (y @ wp + bp[0])
        h2 = _layernorm(x, ln2w[0], ln2b[0])
        h2 = _gelu_exact(h2 @ w1 + b1[0])
        x = x + (h2 @ w2 + b2[0])
    h = _layernorm(x, lnf_w[0], lnf_b[0])
    t = T // 4
    return (h[:, t:2 * t] @ wu, h[:, 2 * t:3 * t] @ wd, h[:, 3 * t:4 * t] @ wr)


# ----------------------------------- main -------------------------------------

if __name__ == "__main__":
    # small config consistent with the module
    B, T, C = 2, 8, 32
    n_head, n_layer = 4, 2
    vocab_up, vocab_down = 16, 16
    t = T // 4

    # batch block: largest divisor of B up to 8; at production scale pick Bb so
    # that (B // Bb) is even (keeps both v7x TensorCores busy).
    Bb = next(bb for bb in (8, 4, 2, 1) if B % bb == 0)

    key = jax.random.PRNGKey(0)

    def normal(key, shape):
        return (0.02 * jax.random.normal(key, shape)).astype(jnp.float32)

    keys = iter(jax.random.split(key, 64))

    block_params = []
    for _ in range(n_layer):
        ln1w = jnp.ones((1, C), jnp.float32)
        ln1b = jnp.zeros((1, C), jnp.float32)
        wq, wk, wv = (normal(next(keys), (C, C)) for _ in range(3))
        bq = jnp.zeros((1, C), jnp.float32)
        bk = jnp.zeros((1, C), jnp.float32)
        bv = jnp.zeros((1, C), jnp.float32)
        wp = normal(next(keys), (C, C))
        bp = jnp.zeros((1, C), jnp.float32)
        ln2w = jnp.ones((1, C), jnp.float32)
        ln2b = jnp.zeros((1, C), jnp.float32)
        w1 = normal(next(keys), (C, 4 * C))
        b1 = jnp.zeros((1, 4 * C), jnp.float32)
        w2 = normal(next(keys), (4 * C, C))
        b2 = jnp.zeros((1, C), jnp.float32)
        block_params.append((ln1w, ln1b, wq, bq, wk, bk, wv, bv, wp, bp,
                             ln2w, ln2b, w1, b1, w2, b2))

    lnf_w = jnp.ones((1, C), jnp.float32)
    lnf_b = jnp.zeros((1, C), jnp.float32)
    wu = normal(next(keys), (C, vocab_up))
    wd = normal(next(keys), (C, vocab_down))
    wr = normal(next(keys), (C, vocab_down))

    # cross-conditional mask: tril(t, t) tiled 4x4 over the T x T attention map
    mask = jnp.tile(jnp.tril(jnp.ones((t, t), jnp.float32)), (4, 4))

    x = jax.random.normal(next(keys), (B, T, C), jnp.float32)

    # one-time prep (module-init style), hoisted out of the forward call
    prepared = prepare_params(block_params, lnf_w, lnf_b, wu, wd, wr, mask, n_head)

    fwd = jax.jit(functools.partial(
        cross_cond_gpt_head_forward, n_head=n_head,
        vocab_up=vocab_up, vocab_down=vocab_down, batch_block=Bb))

    logits_up, logits_down, logits_root, _, _, _ = fwd(x, prepared)
    jax.block_until_ready((logits_up, logits_down, logits_root))

    ref_up, ref_down, ref_root = _ref_forward(
        x, block_params, lnf_w, lnf_b, wu, wd, wr, mask, n_head)

    assert logits_up.shape == (B, t, vocab_up)
    assert logits_down.shape == (B, t, vocab_down)
    assert logits_root.shape == (B, t, vocab_down)
    # bf16 matmuls vs f32 reference (and tanh-GELU vs erf): loose-but-meaningful tol
    assert jnp.allclose(logits_up, ref_up, atol=1e-2, rtol=1e-2)
    assert jnp.allclose(logits_down, ref_down, atol=1e-2, rtol=1e-2)
    assert jnp.allclose(logits_root, ref_root, atol=1e-2, rtol=1e-2)

    print("KERNEL_OK")
</pallas_src>

<mosaic_0001>
module attributes {stable_mosaic.version = 11 : i64} {
  func.func @blocks_kernel(%arg0: i32, %arg1: i32, %arg2: memref<2x8x32xf32, #tpu.memory_space<vmem>>, %arg3: memref<8x8xf32, #tpu.memory_space<vmem>>, %arg4: memref<1x1x32xf32, #tpu.memory_space<vmem>>, %arg5: memref<1x1x32xf32, #tpu.memory_space<vmem>>, %arg6: memref<1x4x32x8xbf16, #tpu.memory_space<vmem>>, %arg7: memref<1x4x1x8xf32, #tpu.memory_space<vmem>>, %arg8: memref<1x4x32x8xbf16, #tpu.memory_space<vmem>>, %arg9: memref<1x4x1x8xf32, #tpu.memory_space<vmem>>, %arg10: memref<1x4x32x8xbf16, #tpu.memory_space<vmem>>, %arg11: memref<1x4x1x8xf32, #tpu.memory_space<vmem>>, %arg12: memref<1x4x8x32xbf16, #tpu.memory_space<vmem>>, %arg13: memref<1x1x32xf32, #tpu.memory_space<vmem>>, %arg14: memref<1x1x32xf32, #tpu.memory_space<vmem>>, %arg15: memref<1x1x32xf32, #tpu.memory_space<vmem>>, %arg16: memref<1x32x128xbf16, #tpu.memory_space<vmem>>, %arg17: memref<1x1x128xf32, #tpu.memory_space<vmem>>, %arg18: memref<1x128x32xbf16, #tpu.memory_space<vmem>>, %arg19: memref<1x1x32xf32, #tpu.memory_space<vmem>>, %arg20: memref<2x8x32xf32, #tpu.memory_space<vmem>>, %arg21: memref<16x32xf32, #tpu.memory_space<vmem>>) attributes {dimension_semantics = [#tpu.dimension_semantics<parallel>, #tpu.dimension_semantics<arbitrary>], iteration_bounds = array<i64: 1, 2>, scalar_prefetch = 0 : i64, scratch_operands = 1 : i64, tpu.core_type = #tpu.core_type<tc>, window_params = [{transform_indices = @transform_0, window_bounds = array<i64: 2, 8, 32>}, {pipeline_mode = #tpu.pipeline_mode<synchronous>, transform_indices = @transform_1, window_bounds = array<i64: 8, 8>}, {transform_indices = @transform_2, window_bounds = array<i64: 1, 1, 32>}, {transform_indices = @transform_3, window_bounds = array<i64: 1, 1, 32>}, {transform_indices = @transform_4, window_bounds = array<i64: 1, 4, 32, 8>}, {transform_indices = @transform_5, window_bounds = array<i64: 1, 4, 1, 8>}, {transform_indices = @transform_6, window_bounds = array<i64: 1, 4, 32, 8>}, {transform_indices = @transform_7, window_bounds = array<i64: 1, 4, 1, 8>}, {transform_indices = @transform_8, window_bounds = array<i64: 1, 4, 32, 8>}, {transform_indices = @transform_9, window_bounds = array<i64: 1, 4, 1, 8>}, {transform_indices = @transform_10, window_bounds = array<i64: 1, 4, 8, 32>}, {transform_indices = @transform_11, window_bounds = array<i64: 1, 1, 32>}, {transform_indices = @transform_12, window_bounds = array<i64: 1, 1, 32>}, {transform_indices = @transform_13, window_bounds = array<i64: 1, 1, 32>}, {transform_indices = @transform_14, window_bounds = array<i64: 1, 32, 128>}, {transform_indices = @transform_15, window_bounds = array<i64: 1, 1, 128>}, {transform_indices = @transform_16, window_bounds = array<i64: 1, 128, 32>}, {transform_indices = @transform_17, window_bounds = array<i64: 1, 1, 32>}, {transform_indices = @transform_18, window_bounds = array<i64: 2, 8, 32>}]} {
    %c0_i32 = arith.constant 0 : i32
    %0 = arith.cmpi eq, %arg1, %c0_i32 : i32
    %1 = arith.extui %0 : i1 to i32
    %c0_i32_0 = arith.constant 0 : i32
    %2 = arith.cmpi ne, %1, %c0_i32_0 : i32
    scf.if %2 {
      %c0_194 = arith.constant 0 : index
      %c0_195 = arith.constant 0 : index
      %c0_196 = arith.constant 0 : index
      %292 = vector.load %arg2[%c0_194, %c0_195, %c0_196] : memref<2x8x32xf32, #tpu.memory_space<vmem>>, vector<2x8x32xf32>
      %293 = vector.shape_cast %292 : vector<2x8x32xf32> to vector<16x32xf32>
      %c0_197 = arith.constant 0 : index
      %c0_198 = arith.constant 0 : index
      %294 = vector.load %arg21[%c0_197, %c0_198] : memref<16x32xf32, #tpu.memory_space<vmem>>, vector<16x32xf32>
      tpu.vector_store %arg21[%c0_197, %c0_198], %293 {strides = array<i32>} : memref<16x32xf32, #tpu.memory_space<vmem>>, vector<16x32xf32>,
    } else {
    }
    %c0 = arith.constant 0 : index
    %c0_1 = arith.constant 0 : index
    %3 = vector.load %arg21[%c0, %c0_1] : memref<16x32xf32, #tpu.memory_space<vmem>>, vector<16x32xf32>
    %c0_2 = arith.constant 0 : index
    %c0_3 = arith.constant 0 : index
    %c0_4 = arith.constant 0 : index
    %4 = vector.load %arg4[%c0_2, %c0_3, %c0_4] : memref<1x1x32xf32, #tpu.memory_space<vmem>>, vector<1x1x32xf32>
    %5 = vector.shape_cast %4 : vector<1x1x32xf32> to vector<1x32xf32>
    %c0_5 = arith.constant 0 : index
    %c0_6 = arith.constant 0 : index
    %c0_7 = arith.constant 0 : index
    %6 = vector.load %arg5[%c0_5, %c0_6, %c0_7] : memref<1x1x32xf32, #tpu.memory_space<vmem>>, vector<1x1x32xf32>
    %7 = vector.shape_cast %6 : vector<1x1x32xf32> to vector<1x32xf32>
    %cst = arith.constant dense<0.000000e+00> : vector<16xf32>
    %8 = vector.multi_reduction <add>, %3, %cst [1] : vector<16x32xf32> to vector<16xf32>
    %9 = vector.shape_cast %8 : vector<16xf32> to vector<16x1xf32>
    %cst_8 = arith.constant 3.200000e+01 : f32
    %10 = vector.broadcast %cst_8 : f32 to vector<16x1xf32>
    %11 = arith.divf %9, %10 : vector<16x1xf32>
    %12 = vector.broadcast %11 : vector<16x1xf32> to vector<16x32xf32>
    %13 = arith.subf %3, %12 : vector<16x32xf32>
    %14 = arith.mulf %13, %13 : vector<16x32xf32>
    %cst_9 = arith.constant dense<0.000000e+00> : vector<16xf32>
    %15 = vector.multi_reduction <add>, %14, %cst_9 [1] : vector<16x32xf32> to vector<16xf32>
    %16 = vector.shape_cast %15 : vector<16xf32> to vector<16x1xf32>
    %cst_10 = arith.constant 3.200000e+01 : f32
    %17 = vector.broadcast %cst_10 : f32 to vector<16x1xf32>
    %18 = arith.divf %16, %17 : vector<16x1xf32>
    %19 = vector.broadcast %11 : vector<16x1xf32> to vector<16x32xf32>
    %20 = arith.subf %3, %19 : vector<16x32xf32>
    %cst_11 = arith.constant 9.99999974E-6 : f32
    %21 = vector.broadcast %cst_11 : f32 to vector<16x1xf32>
    %22 = arith.addf %18, %21 : vector<16x1xf32>
    %23 = math.rsqrt %22 : vector<16x1xf32>
    %24 = vector.broadcast %23 : vector<16x1xf32> to vector<16x32xf32>
    %25 = arith.mulf %20, %24 : vector<16x32xf32>
    %26 = vector.broadcast %5 : vector<1x32xf32> to vector<16x32xf32>
    %27 = arith.mulf %25, %26 : vector<16x32xf32>
    %28 = vector.broadcast %7 : vector<1x32xf32> to vector<16x32xf32>
    %29 = arith.addf %27, %28 : vector<16x32xf32>
    %30 = arith.truncf %29 : vector<16x32xf32> to vector<16x32xbf16>
    %c0_12 = arith.constant 0 : index
    %c0_13 = arith.constant 0 : index
    %31 = vector.load %arg3[%c0_12, %c0_13] : memref<8x8xf32, #tpu.memory_space<vmem>>, vector<8x8xf32>
    %32 = vector.shape_cast %31 : vector<8x8xf32> to vector<1x8x8xf32>
    %33 = vector.broadcast %32 : vector<1x8x8xf32> to vector<2x8x8xf32>
    %c0_14 = arith.constant 0 : index
    %c0_15 = arith.constant 0 : index
    %c0_16 = arith.constant 0 : index
    %c0_17 = arith.constant 0 : index
    %34 = vector.load %arg6[%c0_14, %c0_15, %c0_16, %c0_17] : memref<1x4x32x8xbf16, #tpu.memory_space<vmem>>, vector<1x1x32x8xbf16>
    %35 = vector.shape_cast %34 : vector<1x1x32x8xbf16> to vector<32x8xbf16>
    %cst_18 = arith.constant dense<0.000000e+00> : vector<16x8xf32>
    %36 = tpu.matmul %30, %35, %cst_18 {dimension_numbers = #tpu.dot_dimension_numbers<[1], [0], [0], [1], [0, 0, 1, 1], [], []>} : vector<16x32xbf16>, vector<32x8xbf16>, vector<16x8xf32> -> vector<16x8xf32>
    %c0_19 = arith.constant 0 : index
    %c0_20 = arith.constant 0 : index
    %c0_21 = arith.constant 0 : index
    %c0_22 = arith.constant 0 : index
    %37 = vector.load %arg7[%c0_19, %c0_20, %c0_21, %c0_22] : memref<1x4x1x8xf32, #tpu.memory_space<vmem>>, vector<1x1x1x8xf32>
    %38 = vector.shape_cast %37 : vector<1x1x1x8xf32> to vector<1x8xf32>
    %39 = vector.broadcast %38 : vector<1x8xf32> to vector<16x8xf32>
    %40 = arith.addf %36, %39 : vector<16x8xf32>
    %c0_23 = arith.constant 0 : index
    %c0_24 = arith.constant 0 : index
    %c0_25 = arith.constant 0 : index
    %c0_26 = arith.constant 0 : index
    %41 = vector.load %arg8[%c0_23, %c0_24, %c0_25, %c0_26] : memref<1x4x32x8xbf16, #tpu.memory_space<vmem>>, vector<1x1x32x8xbf16>
    %42 = vector.shape_cast %41 : vector<1x1x32x8xbf16> to vector<32x8xbf16>
    %cst_27 = arith.constant dense<0.000000e+00> : vector<16x8xf32>
    %43 = tpu.matmul %30, %42, %cst_27 {dimension_numbers = #tpu.dot_dimension_numbers<[1], [0], [0], [1], [0, 0, 1, 1], [], []>} : vector<16x32xbf16>, vector<32x8xbf16>, vector<16x8xf32> -> vector<16x8xf32>
    %c0_28 = arith.constant 0 : index
    %c0_29 = arith.constant 0 : index
    %c0_30 = arith.constant 0 : index
    %c0_31 = arith.constant 0 : index
    %44 = vector.load %arg9[%c0_28, %c0_29, %c0_30, %c0_31] : memref<1x4x1x8xf32, #tpu.memory_space<vmem>>, vector<1x1x1x8xf32>
    %45 = vector.shape_cast %44 : vector<1x1x1x8xf32> to vector<1x8xf32>
    %46 = vector.broadcast %45 : vector<1x8xf32> to vector<16x8xf32>
    %47 = arith.addf %43, %46 : vector<16x8xf32>
    %c0_32 = arith.constant 0 : index
    %c0_33 = arith.constant 0 : index
    %c0_34 = arith.constant 0 : index
    %c0_35 = arith.constant 0 : index
    %48 = vector.load %arg10[%c0_32, %c0_33, %c0_34, %c0_35] : memref<1x4x32x8xbf16, #tpu.memory_space<vmem>>, vector<1x1x32x8xbf16>
    %49 = vector.shape_cast %48 : vector<1x1x32x8xbf16> to vector<32x8xbf16>
    %cst_36 = arith.constant dense<0.000000e+00> : vector<16x8xf32>
    %50 = tpu.matmul %30, %49, %cst_36 {dimension_numbers = #tpu.dot_dimension_numbers<[1], [0], [0], [1], [0, 0, 1, 1], [], []>} : vector<16x32xbf16>, vector<32x8xbf16>, vector<16x8xf32> -> vector<16x8xf32>
    %c0_37 = arith.constant 0 : index
    %c0_38 = arith.constant 0 : index
    %c0_39 = arith.constant 0 : index
    %c0_40 = arith.constant 0 : index
    %51 = vector.load %arg11[%c0_37, %c0_38, %c0_39, %c0_40] : memref<1x4x1x8xf32, #tpu.memory_space<vmem>>, vector<1x1x1x8xf32>
    %52 = vector.shape_cast %51 : vector<1x1x1x8xf32> to vector<1x8xf32>
    %53 = vector.broadcast %52 : vector<1x8xf32> to vector<16x8xf32>
    %54 = arith.addf %50, %53 : vector<16x8xf32>
    %55 = vector.shape_cast %40 : vector<16x8xf32> to vector<2x8x8xf32>
    %56 = arith.truncf %55 : vector<2x8x8xf32> to vector<2x8x8xbf16>
    %57 = vector.shape_cast %47 : vector<16x8xf32> to vector<2x8x8xf32>
    %58 = arith.truncf %57 : vector<2x8x8xf32> to vector<2x8x8xbf16>
    %59 = vector.shape_cast %54 : vector<16x8xf32> to vector<2x8x8xf32>
    %60 = arith.truncf %59 : vector<2x8x8xf32> to vector<2x8x8xbf16>
    %cst_41 = arith.constant dense<0.000000e+00> : vector<2x8x8xf32>
    %61 = tpu.matmul %56, %58, %cst_41 {dimension_numbers = #tpu.dot_dimension_numbers<[2], [2], [1], [1], [0, 0, 0, 1, 1, 1], [0], [0]>} : vector<2x8x8xbf16>, vector<2x8x8xbf16>, vector<2x8x8xf32> -> vector<2x8x8xf32>
    %62 = arith.addf %61, %33 : vector<2x8x8xf32>
    %cst_42 = arith.constant dense<0xFF800000> : vector<2x8xf32>
    %63 = vector.multi_reduction <maximumf>, %62, %cst_42 [2] : vector<2x8x8xf32> to vector<2x8xf32>
    %cst_43 = arith.constant 0xFF800000 : f32
    %64 = vector.broadcast %cst_43 : f32 to vector<2x8xf32>
    %65 = arith.maximumf %64, %63 : vector<2x8xf32>
    %66 = vector.shape_cast %65 : vector<2x8xf32> to vector<2x8x1xf32>
    %67 = vector.broadcast %66 : vector<2x8x1xf32> to vector<2x8x8xf32>
    %68 = arith.subf %62, %67 : vector<2x8x8xf32>
    %69 = math.exp %68 : vector<2x8x8xf32>
    %cst_44 = arith.constant dense<0.000000e+00> : vector<2x8xf32>
    %70 = vector.multi_reduction <add>, %69, %cst_44 [2] : vector<2x8x8xf32> to vector<2x8xf32>
    %71 = vector.shape_cast %70 : vector<2x8xf32> to vector<2x8x1xf32>
    %72 = vector.broadcast %71 : vector<2x8x1xf32> to vector<2x8x8xf32>
    %73 = arith.divf %69, %72 : vector<2x8x8xf32>
    %74 = arith.truncf %73 : vector<2x8x8xf32> to vector<2x8x8xbf16>
    %cst_45 = arith.constant dense<0.000000e+00> : vector<2x8x8xf32>
    %75 = tpu.matmul %74, %60, %cst_45 {dimension_numbers = #tpu.dot_dimension_numbers<[2], [1], [1], [2], [0, 0, 0, 1, 1, 2], [0], [0]>} : vector<2x8x8xbf16>, vector<2x8x8xbf16>, vector<2x8x8xf32> -> vector<2x8x8xf32>
    %76 = vector.shape_cast %75 : vector<2x8x8xf32> to vector<16x8xf32>
    %77 = arith.truncf %76 : vector<16x8xf32> to vector<16x8xbf16>
    %c0_46 = arith.constant 0 : index
    %c0_47 = arith.constant 0 : index
    %c0_48 = arith.constant 0 : index
    %c0_49 = arith.constant 0 : index
    %78 = vector.load %arg12[%c0_46, %c0_47, %c0_48, %c0_49] : memref<1x4x8x32xbf16, #tpu.memory_space<vmem>>, vector<1x1x8x32xbf16>
    %79 = vector.shape_cast %78 : vector<1x1x8x32xbf16> to vector<8x32xbf16>
    %cst_50 = arith.constant dense<0.000000e+00> : vector<16x32xf32>
    %80 = tpu.matmul %77, %79, %cst_50 {dimension_numbers = #tpu.dot_dimension_numbers<[1], [0], [0], [1], [0, 0, 1, 1], [], []>} : vector<16x8xbf16>, vector<8x32xbf16>, vector<16x32xf32> -> vector<16x32xf32>
    %c0_51 = arith.constant 0 : index
    %c1 = arith.constant 1 : index
    %c0_52 = arith.constant 0 : index
    %c0_53 = arith.constant 0 : index
    %81 = vector.load %arg6[%c0_51, %c1, %c0_52, %c0_53] : memref<1x4x32x8xbf16, #tpu.memory_space<vmem>>, vector<1x1x32x8xbf16>
    %82 = vector.shape_cast %81 : vector<1x1x32x8xbf16> to vector<32x8xbf16>
    %cst_54 = arith.constant dense<0.000000e+00> : vector<16x8xf32>
    %83 = tpu.matmul %30, %82, %cst_54 {dimension_numbers = #tpu.dot_dimension_numbers<[1], [0], [0], [1], [0, 0, 1, 1], [], []>} : vector<16x32xbf16>, vector<32x8xbf16>, vector<16x8xf32> -> vector<16x8xf32>
    %c0_55 = arith.constant 0 : index
    %c1_56 = arith.constant 1 : index
    %c0_57 = arith.constant 0 : index
    %c0_58 = arith.constant 0 : index
    %84 = vector.load %arg7[%c0_55, %c1_56, %c0_57, %c0_58] : memref<1x4x1x8xf32, #tpu.memory_space<vmem>>, vector<1x1x1x8xf32>
    %85 = vector.shape_cast %84 : vector<1x1x1x8xf32> to vector<1x8xf32>
    %86 = vector.broadcast %85 : vector<1x8xf32> to vector<16x8xf32>
    %87 = arith.addf %83, %86 : vector<16x8xf32>
    %c0_59 = arith.constant 0 : index
    %c1_60 = arith.constant 1 : index
    %c0_61 = arith.constant 0 : index
    %c0_62 = arith.constant 0 : index
    %88 = vector.load %arg8[%c0_59, %c1_60, %c0_61, %c0_62] : memref<1x4x32x8xbf16, #tpu.memory_space<vmem>>, vector<1x1x32x8xbf16>
    %89 = vector.shape_cast %88 : vector<1x1x32x8xbf16> to vector<32x8xbf16>
    %cst_63 = arith.constant dense<0.000000e+00> : vector<16x8xf32>
    %90 = tpu.matmul %30, %89, %cst_63 {dimension_numbers = #tpu.dot_dimension_numbers<[1], [0], [0], [1], [0, 0, 1, 1], [], []>} : vector<16x32xbf16>, vector<32x8xbf16>, vector<16x8xf32> -> vector<16x8xf32>
    %c0_64 = arith.constant 0 : index
    %c1_65 = arith.constant 1 : index
    %c0_66 = arith.constant 0 : index
    %c0_67 = arith.constant 0 : index
    %91 = vector.load %arg9[%c0_64, %c1_65, %c0_66, %c0_67] : memref<1x4x1x8xf32, #tpu.memory_space<vmem>>, vector<1x1x1x8xf32>
    %92 = vector.shape_cast %91 : vector<1x1x1x8xf32> to vector<1x8xf32>
    %93 = vector.broadcast %92 : vector<1x8xf32> to vector<16x8xf32>
    %94 = arith.addf %90, %93 : vector<16x8xf32>
    %c0_68 = arith.constant 0 : index
    %c1_69 = arith.constant 1 : index
    %c0_70 = arith.constant 0 : index
    %c0_71 = arith.constant 0 : index
    %95 = vector.load %arg10[%c0_68, %c1_69, %c0_70, %c0_71] : memref<1x4x32x8xbf16, #tpu.memory_space<vmem>>, vector<1x1x32x8xbf16>
    %96 = vector.shape_cast %95 : vector<1x1x32x8xbf16> to vector<32x8xbf16>
    %cst_72 = arith.constant dense<0.000000e+00> : vector<16x8xf32>
    %97 = tpu.matmul %30, %96, %cst_72 {dimension_numbers = #tpu.dot_dimension_numbers<[1], [0], [0], [1], [0, 0, 1, 1], [], []>} : vector<16x32xbf16>, vector<32x8xbf16>, vector<16x8xf32> -> vector<16x8xf32>
    %c0_73 = arith.constant 0 : index
    %c1_74 = arith.constant 1 : index
    %c0_75 = arith.constant 0 : index
    %c0_76 = arith.constant 0 : index
    %98 = vector.load %arg11[%c0_73, %c1_74, %c0_75, %c0_76] : memref<1x4x1x8xf32, #tpu.memory_space<vmem>>, vector<1x1x1x8xf32>
    %99 = vector.shape_cast %98 : vector<1x1x1x8xf32> to vector<1x8xf32>
    %100 = vector.broadcast %99 : vector<1x8xf32> to vector<16x8xf32>
    %101 = arith.addf %97, %100 : vector<16x8xf32>
    %102 = vector.shape_cast %87 : vector<16x8xf32> to vector<2x8x8xf32>
    %103 = arith.truncf %102 : vector<2x8x8xf32> to vector<2x8x8xbf16>
    %104 = vector.shape_cast %94 : vector<16x8xf32> to vector<2x8x8xf32>
    %105 = arith.truncf %104 : vector<2x8x8xf32> to vector<2x8x8xbf16>
    %106 = vector.shape_cast %101 : vector<16x8xf32> to vector<2x8x8xf32>
    %107 = arith.truncf %106 : vector<2x8x8xf32> to vector<2x8x8xbf16>
    %cst_77 = arith.constant dense<0.000000e+00> : vector<2x8x8xf32>
    %108 = tpu.matmul %103, %105, %cst_77 {dimension_numbers = #tpu.dot_dimension_numbers<[2], [2], [1], [1], [0, 0, 0, 1, 1, 1], [0], [0]>} : vector<2x8x8xbf16>, vector<2x8x8xbf16>, vector<2x8x8xf32> -> vector<2x8x8xf32>
    %109 = arith.addf %108, %33 : vector<2x8x8xf32>
    %cst_78 = arith.constant dense<0xFF800000> : vector<2x8xf32>
    %110 = vector.multi_reduction <maximumf>, %109, %cst_78 [2] : vector<2x8x8xf32> to vector<2x8xf32>
    %cst_79 = arith.constant 0xFF800000 : f32
    %111 = vector.broadcast %cst_79 : f32 to vector<2x8xf32>
    %112 = arith.maximumf %111, %110 : vector<2x8xf32>
    %113 = vector.shape_cast %112 : vector<2x8xf32> to vector<2x8x1xf32>
    %114 = vector.broadcast %113 : vector<2x8x1xf32> to vector<2x8x8xf32>
    %115 = arith.subf %109, %114 : vector<2x8x8xf32>
    %116 = math.exp %115 : vector<2x8x8xf32>
    %cst_80 = arith.constant dense<0.000000e+00> : vector<2x8xf32>
    %117 = vector.multi_reduction <add>, %116, %cst_80 [2] : vector<2x8x8xf32> to vector<2x8xf32>
    %118 = vector.shape_cast %117 : vector<2x8xf32> to vector<2x8x1xf32>
    %119 = vector.broadcast %118 : vector<2x8x1xf32> to vector<2x8x8xf32>
    %120 = arith.divf %116, %119 : vector<2x8x8xf32>
    %121 = arith.truncf %120 : vector<2x8x8xf32> to vector<2x8x8xbf16>
    %cst_81 = arith.constant dense<0.000000e+00> : vector<2x8x8xf32>
    %122 = tpu.matmul %121, %107, %cst_81 {dimension_numbers = #tpu.dot_dimension_numbers<[2], [1], [1], [2], [0, 0, 0, 1, 1, 2], [0], [0]>} : vector<2x8x8xbf16>, vector<2x8x8xbf16>, vector<2x8x8xf32> -> vector<2x8x8xf32>
    %123 = vector.shape_cast %122 : vector<2x8x8xf32> to vector<16x8xf32>
    %124 = arith.truncf %123 : vector<16x8xf32> to vector<16x8xbf16>
    %c0_82 = arith.constant 0 : index
    %c1_83 = arith.constant 1 : index
    %c0_84 = arith.constant 0 : index
    %c0_85 = arith.constant 0 : index
    %125 = vector.load %arg12[%c0_82, %c1_83, %c0_84, %c0_85] : memref<1x4x8x32xbf16, #tpu.memory_space<vmem>>, vector<1x1x8x32xbf16>
    %126 = vector.shape_cast %125 : vector<1x1x8x32xbf16> to vector<8x32xbf16>
    %cst_86 = arith.constant dense<0.000000e+00> : vector<16x32xf32>
    %127 = tpu.matmul %124, %126, %cst_86 {dimension_numbers = #tpu.dot_dimension_numbers<[1], [0], [0], [1], [0, 0, 1, 1], [], []>} : vector<16x8xbf16>, vector<8x32xbf16>, vector<16x32xf32> -> vector<16x32xf32>
    %128 = arith.addf %80, %127 : vector<16x32xf32>
    %c0_87 = arith.constant 0 : index
    %c2 = arith.constant 2 : index
    %c0_88 = arith.constant 0 : index
    %c0_89 = arith.constant 0 : index
    %129 = vector.load %arg6[%c0_87, %c2, %c0_88, %c0_89] : memref<1x4x32x8xbf16, #tpu.memory_space<vmem>>, vector<1x1x32x8xbf16>
    %130 = vector.shape_cast %129 : vector<1x1x32x8xbf16> to vector<32x8xbf16>
    %cst_90 = arith.constant dense<0.000000e+00> : vector<16x8xf32>
    %131 = tpu.matmul %30, %130, %cst_90 {dimension_numbers = #tpu.dot_dimension_numbers<[1], [0], [0], [1], [0, 0, 1, 1], [], []>} : vector<16x32xbf16>, vector<32x8xbf16>, vector<16x8xf32> -> vector<16x8xf32>
    %c0_91 = arith.constant 0 : index
    %c2_92 = arith.constant 2 : index
    %c0_93 = arith.constant 0 : index
    %c0_94 = arith.constant 0 : index
    %132 = vector.load %arg7[%c0_91, %c2_92, %c0_93, %c0_94] : memref<1x4x1x8xf32, #tpu.memory_space<vmem>>, vector<1x1x1x8xf32>
    %133 = vector.shape_cast %132 : vector<1x1x1x8xf32> to vector<1x8xf32>
    %134 = vector.broadcast %133 : vector<1x8xf32> to vector<16x8xf32>
    %135 = arith.addf %131, %134 : vector<16x8xf32>
    %c0_95 = arith.constant 0 : index
    %c2_96 = arith.constant 2 : index
    %c0_97 = arith.constant 0 : index
    %c0_98 = arith.constant 0 : index
    %136 = vector.load %arg8[%c0_95, %c2_96, %c0_97, %c0_98] : memref<1x4x32x8xbf16, #tpu.memory_space<vmem>>, vector<1x1x32x8xbf16>
    %137 = vector.shape_cast %136 : vector<1x1x32x8xbf16> to vector<32x8xbf16>
    %cst_99 = arith.constant dense<0.000000e+00> : vector<16x8xf32>
    %138 = tpu.matmul %30, %137, %cst_99 {dimension_numbers = #tpu.dot_dimension_numbers<[1], [0], [0], [1], [0, 0, 1, 1], [], []>} : vector<16x32xbf16>, vector<32x8xbf16>, vector<16x8xf32> -> vector<16x8xf32>
    %c0_100 = arith.constant 0 : index
    %c2_101 = arith.constant 2 : index
    %c0_102 = arith.constant 0 : index
    %c0_103 = arith.constant 0 : index
    %139 = vector.load %arg9[%c0_100, %c2_101, %c0_102, %c0_103] : memref<1x4x1x8xf32, #tpu.memory_space<vmem>>, vector<1x1x1x8xf32>
    %140 = vector.shape_cast %139 : vector<1x1x1x8xf32> to vector<1x8xf32>
    %141 = vector.broadcast %140 : vector<1x8xf32> to vector<16x8xf32>
    %142 = arith.addf %138, %141 : vector<16x8xf32>
    %c0_104 = arith.constant 0 : index
    %c2_105 = arith.constant 2 : index
    %c0_106 = arith.constant 0 : index
    %c0_107 = arith.constant 0 : index
    %143 = vector.load %arg10[%c0_104, %c2_105, %c0_106, %c0_107] : memref<1x4x32x8xbf16, #tpu.memory_space<vmem>>, vector<1x1x32x8xbf16>
    %144 = vector.shape_cast %143 : vector<1x1x32x8xbf16> to vector<32x8xbf16>
    %cst_108 = arith.constant dense<0.000000e+00> : vector<16x8xf32>
    %145 = tpu.matmul %30, %144, %cst_108 {dimension_numbers = #tpu.dot_dimension_numbers<[1], [0], [0], [1], [0, 0, 1, 1], [], []>} : vector<16x32xbf16>, vector<32x8xbf16>, vector<16x8xf32> -> vector<16x8xf32>
    %c0_109 = arith.constant 0 : index
    %c2_110 = arith.constant 2 : index
    %c0_111 = arith.constant 0 : index
    %c0_112 = arith.constant 0 : index
    %146 = vector.load %arg11[%c0_109, %c2_110, %c0_111, %c0_112] : memref<1x4x1x8xf32, #tpu.memory_space<vmem>>, vector<1x1x1x8xf32>
    %147 = vector.shape_cast %146 : vector<1x1x1x8xf32> to vector<1x8xf32>
    %148 = vector.broadcast %147 : vector<1x8xf32> to vector<16x8xf32>
    %149 = arith.addf %145, %148 : vector<16x8xf32>
    %150 = vector.shape_cast %135 : vector<16x8xf32> to vector<2x8x8xf32>
    %151 = arith.truncf %150 : vector<2x8x8xf32> to vector<2x8x8xbf16>
    %152 = vector.shape_cast %142 : vector<16x8xf32> to vector<2x8x8xf32>
    %153 = arith.truncf %152 : vector<2x8x8xf32> to vector<2x8x8xbf16>
    %154 = vector.shape_cast %149 : vector<16x8xf32> to vector<2x8x8xf32>
    %155 = arith.truncf %154 : vector<2x8x8xf32> to vector<2x8x8xbf16>
    %cst_113 = arith.constant dense<0.000000e+00> : vector<2x8x8xf32>
    %156 = tpu.matmul %151, %153, %cst_113 {dimension_numbers = #tpu.dot_dimension_numbers<[2], [2], [1], [1], [0, 0, 0, 1, 1, 1], [0], [0]>} : vector<2x8x8xbf16>, vector<2x8x8xbf16>, vector<2x8x8xf32> -> vector<2x8x8xf32>
    %157 = arith.addf %156, %33 : vector<2x8x8xf32>
    %cst_114 = arith.constant dense<0xFF800000> : vector<2x8xf32>
    %158 = vector.multi_reduction <maximumf>, %157, %cst_114 [2] : vector<2x8x8xf32> to vector<2x8xf32>
    %cst_115 = arith.constant 0xFF800000 : f32
    %159 = vector.broadcast %cst_115 : f32 to vector<2x8xf32>
    %160 = arith.maximumf %159, %158 : vector<2x8xf32>
    %161 = vector.shape_cast %160 : vector<2x8xf32> to vector<2x8x1xf32>
    %162 = vector.broadcast %161 : vector<2x8x1xf32> to vector<2x8x8xf32>
    %163 = arith.subf %157, %162 : vector<2x8x8xf32>
    %164 = math.exp %163 : vector<2x8x8xf32>
    %cst_116 = arith.constant dense<0.000000e+00> : vector<2x8xf32>
    %165 = vector.multi_reduction <add>, %164, %cst_116 [2] : vector<2x8x8xf32> to vector<2x8xf32>
    %166 = vector.shape_cast %165 : vector<2x8xf32> to vector<2x8x1xf32>
    %167 = vector.broadcast %166 : vector<2x8x1xf32> to vector<2x8x8xf32>
    %168 = arith.divf %164, %167 : vector<2x8x8xf32>
    %169 = arith.truncf %168 : vector<2x8x8xf32> to vector<2x8x8xbf16>
    %cst_117 = arith.constant dense<0.000000e+00> : vector<2x8x8xf32>
    %170 = tpu.matmul %169, %155, %cst_117 {dimension_numbers = #tpu.dot_dimension_numbers<[2], [1], [1], [2], [0, 0, 0, 1, 1, 2], [0], [0]>} : vector<2x8x8xbf16>, vector<2x8x8xbf16>, vector<2x8x8xf32> -> vector<2x8x8xf32>
    %171 = vector.shape_cast %170 : vector<2x8x8xf32> to vector<16x8xf32>
    %172 = arith.truncf %171 : vector<16x8xf32> to vector<16x8xbf16>
    %c0_118 = arith.constant 0 : index
    %c2_119 = arith.constant 2 : index
    %c0_120 = arith.constant 0 : index
    %c0_121 = arith.constant 0 : index
    %173 = vector.load %arg12[%c0_118, %c2_119, %c0_120, %c0_121] : memref<1x4x8x32xbf16, #tpu.memory_space<vmem>>, vector<1x1x8x32xbf16>
    %174 = vector.shape_cast %173 : vector<1x1x8x32xbf16> to vector<8x32xbf16>
    %cst_122 = arith.constant dense<0.000000e+00> : vector<16x32xf32>
    %175 = tpu.matmul %172, %174, %cst_122 {dimension_numbers = #tpu.dot_dimension_numbers<[1], [0], [0], [1], [0, 0, 1, 1], [], []>} : vector<16x8xbf16>, vector<8x32xbf16>, vector<16x32xf32> -> vector<16x32xf32>
    %176 = arith.addf %128, %175 : vector<16x32xf32>
    %c0_123 = arith.constant 0 : index
    %c3 = arith.constant 3 : index
    %c0_124 = arith.constant 0 : index
    %c0_125 = arith.constant 0 : index
    %177 = vector.load %arg6[%c0_123, %c3, %c0_124, %c0_125] : memref<1x4x32x8xbf16, #tpu.memory_space<vmem>>, vector<1x1x32x8xbf16>
    %178 = vector.shape_cast %177 : vector<1x1x32x8xbf16> to vector<32x8xbf16>
    %cst_126 = arith.constant dense<0.000000e+00> : vector<16x8xf32>
    %179 = tpu.matmul %30, %178, %cst_126 {dimension_numbers = #tpu.dot_dimension_numbers<[1], [0], [0], [1], [0, 0, 1, 1], [], []>} : vector<16x32xbf16>, vector<32x8xbf16>, vector<16x8xf32> -> vector<16x8xf32>
    %c0_127 = arith.constant 0 : index
    %c3_128 = arith.constant 3 : index
    %c0_129 = arith.constant 0 : index
    %c0_130 = arith.constant 0 : index
    %180 = vector.load %arg7[%c0_127, %c3_128, %c0_129, %c0_130] : memref<1x4x1x8xf32, #tpu.memory_space<vmem>>, vector<1x1x1x8xf32>
    %181 = vector.shape_cast %180 : vector<1x1x1x8xf32> to vector<1x8xf32>
    %182 = vector.broadcast %181 : vector<1x8xf32> to vector<16x8xf32>
    %183 = arith.addf %179, %182 : vector<16x8xf32>
    %c0_131 = arith.constant 0 : index
    %c3_132 = arith.constant 3 : index
    %c0_133 = arith.constant 0 : index
    %c0_134 = arith.constant 0 : index
    %184 = vector.load %arg8[%c0_131, %c3_132, %c0_133, %c0_134] : memref<1x4x32x8xbf16, #tpu.memory_space<vmem>>, vector<1x1x32x8xbf16>
    %185 = vector.shape_cast %184 : vector<1x1x32x8xbf16> to vector<32x8xbf16>
    %cst_135 = arith.constant dense<0.000000e+00> : vector<16x8xf32>
    %186 = tpu.matmul %30, %185, %cst_135 {dimension_numbers = #tpu.dot_dimension_numbers<[1], [0], [0], [1], [0, 0, 1, 1], [], []>} : vector<16x32xbf16>, vector<32x8xbf16>, vector<16x8xf32> -> vector<16x8xf32>
    %c0_136 = arith.constant 0 : index
    %c3_137 = arith.constant 3 : index
    %c0_138 = arith.constant 0 : index
    %c0_139 = arith.constant 0 : index
    %187 = vector.load %arg9[%c0_136, %c3_137, %c0_138, %c0_139] : memref<1x4x1x8xf32, #tpu.memory_space<vmem>>, vector<1x1x1x8xf32>
    %188 = vector.shape_cast %187 : vector<1x1x1x8xf32> to vector<1x8xf32>
    %189 = vector.broadcast %188 : vector<1x8xf32> to vector<16x8xf32>
    %190 = arith.addf %186, %189 : vector<16x8xf32>
    %c0_140 = arith.constant 0 : index
    %c3_141 = arith.constant 3 : index
    %c0_142 = arith.constant 0 : index
    %c0_143 = arith.constant 0 : index
    %191 = vector.load %arg10[%c0_140, %c3_141, %c0_142, %c0_143] : memref<1x4x32x8xbf16, #tpu.memory_space<vmem>>, vector<1x1x32x8xbf16>
    %192 = vector.shape_cast %191 : vector<1x1x32x8xbf16> to vector<32x8xbf16>
    %cst_144 = arith.constant dense<0.000000e+00> : vector<16x8xf32>
    %193 = tpu.matmul %30, %192, %cst_144 {dimension_numbers = #tpu.dot_dimension_numbers<[1], [0], [0], [1], [0, 0, 1, 1], [], []>} : vector<16x32xbf16>, vector<32x8xbf16>, vector<16x8xf32> -> vector<16x8xf32>
    %c0_145 = arith.constant 0 : index
    %c3_146 = arith.constant 3 : index
    %c0_147 = arith.constant 0 : index
    %c0_148 = arith.constant 0 : index
    %194 = vector.load %arg11[%c0_145, %c3_146, %c0_147, %c0_148] : memref<1x4x1x8xf32, #tpu.memory_space<vmem>>, vector<1x1x1x8xf32>
    %195 = vector.shape_cast %194 : vector<1x1x1x8xf32> to vector<1x8xf32>
    %196 = vector.broadcast %195 : vector<1x8xf32> to vector<16x8xf32>
    %197 = arith.addf %193, %196 : vector<16x8xf32>
    %198 = vector.shape_cast %183 : vector<16x8xf32> to vector<2x8x8xf32>
    %199 = arith.truncf %198 : vector<2x8x8xf32> to vector<2x8x8xbf16>
    %200 = vector.shape_cast %190 : vector<16x8xf32> to vector<2x8x8xf32>
    %201 = arith.truncf %200 : vector<2x8x8xf32> to vector<2x8x8xbf16>
    %202 = vector.shape_cast %197 : vector<16x8xf32> to vector<2x8x8xf32>
    %203 = arith.truncf %202 : vector<2x8x8xf32> to vector<2x8x8xbf16>
    %cst_149 = arith.constant dense<0.000000e+00> : vector<2x8x8xf32>
    %204 = tpu.matmul %199, %201, %cst_149 {dimension_numbers = #tpu.dot_dimension_numbers<[2], [2], [1], [1], [0, 0, 0, 1, 1, 1], [0], [0]>} : vector<2x8x8xbf16>, vector<2x8x8xbf16>, vector<2x8x8xf32> -> vector<2x8x8xf32>
    %205 = arith.addf %204, %33 : vector<2x8x8xf32>
    %cst_150 = arith.constant dense<0xFF800000> : vector<2x8xf32>
    %206 = vector.multi_reduction <maximumf>, %205, %cst_150 [2] : vector<2x8x8xf32> to vector<2x8xf32>
    %cst_151 = arith.constant 0xFF800000 : f32
    %207 = vector.broadcast %cst_151 : f32 to vector<2x8xf32>
    %208 = arith.maximumf %207, %206 : vector<2x8xf32>
    %209 = vector.shape_cast %208 : vector<2x8xf32> to vector<2x8x1xf32>
    %210 = vector.broadcast %209 : vector<2x8x1xf32> to vector<2x8x8xf32>
    %211 = arith.subf %205, %210 : vector<2x8x8xf32>
    %212 = math.exp %211 : vector<2x8x8xf32>
    %cst_152 = arith.constant dense<0.000000e+00> : vector<2x8xf32>
    %213 = vector.multi_reduction <add>, %212, %cst_152 [2] : vector<2x8x8xf32> to vector<2x8xf32>
    %214 = vector.shape_cast %213 : vector<2x8xf32> to vector<2x8x1xf32>
    %215 = vector.broadcast %214 : vector<2x8x1xf32> to vector<2x8x8xf32>
    %216 = arith.divf %212, %215 : vector<2x8x8xf32>
    %217 = arith.truncf %216 : vector<2x8x8xf32> to vector<2x8x8xbf16>
    %cst_153 = arith.constant dense<0.000000e+00> : vector<2x8x8xf32>
    %218 = tpu.matmul %217, %203, %cst_153 {dimension_numbers = #tpu.dot_dimension_numbers<[2], [1], [1], [2], [0, 0, 0, 1, 1, 2], [0], [0]>} : vector<2x8x8xbf16>, vector<2x8x8xbf16>, vector<2x8x8xf32> -> vector<2x8x8xf32>
    %219 = vector.shape_cast %218 : vector<2x8x8xf32> to vector<16x8xf32>
    %220 = arith.truncf %219 : vector<16x8xf32> to vector<16x8xbf16>
    %c0_154 = arith.constant 0 : index
    %c3_155 = arith.constant 3 : index
    %c0_156 = arith.constant 0 : index
    %c0_157 = arith.constant 0 : index
    %221 = vector.load %arg12[%c0_154, %c3_155, %c0_156, %c0_157] : memref<1x4x8x32xbf16, #tpu.memory_space<vmem>>, vector<1x1x8x32xbf16>
    %222 = vector.shape_cast %221 : vector<1x1x8x32xbf16> to vector<8x32xbf16>
    %cst_158 = arith.constant dense<0.000000e+00> : vector<16x32xf32>
    %223 = tpu.matmul %220, %222, %cst_158 {dimension_numbers = #tpu.dot_dimension_numbers<[1], [0], [0], [1], [0, 0, 1, 1], [], []>} : vector<16x8xbf16>, vector<8x32xbf16>, vector<16x32xf32> -> vector<16x32xf32>
    %224 = arith.addf %176, %223 : vector<16x32xf32>
    %225 = arith.addf %3, %224 : vector<16x32xf32>
    %c0_159 = arith.constant 0 : index
    %c0_160 = arith.constant 0 : index
    %c0_161 = arith.constant 0 : index
    %226 = vector.load %arg13[%c0_159, %c0_160, %c0_161] : memref<1x1x32xf32, #tpu.memory_space<vmem>>, vector<1x1x32xf32>
    %227 = vector.shape_cast %226 : vector<1x1x32xf32> to vector<1x32xf32>
    %228 = vector.broadcast %227 : vector<1x32xf32> to vector<16x32xf32>
    %229 = arith.addf %225, %228 : vector<16x32xf32>
    %c0_162 = arith.constant 0 : index
    %c0_163 = arith.constant 0 : index
    %c0_164 = arith.constant 0 : index
    %230 = vector.load %arg14[%c0_162, %c0_163, %c0_164] : memref<1x1x32xf32, #tpu.memory_space<vmem>>, vector<1x1x32xf32>
    %231 = vector.shape_cast %230 : vector<1x1x32xf32> to vector<1x32xf32>
    %c0_165 = arith.constant 0 : index
    %c0_166 = arith.constant 0 : index
    %c0_167 = arith.constant 0 : index
    %232 = vector.load %arg15[%c0_165, %c0_166, %c0_167] : memref<1x1x32xf32, #tpu.memory_space<vmem>>, vector<1x1x32xf32>
    %233 = vector.shape_cast %232 : vector<1x1x32xf32> to vector<1x32xf32>
    %cst_168 = arith.constant dense<0.000000e+00> : vector<16xf32>
    %234 = vector.multi_reduction <add>, %229, %cst_168 [1] : vector<16x32xf32> to vector<16xf32>
    %235 = vector.shape_cast %234 : vector<16xf32> to vector<16x1xf32>
    %cst_169 = arith.constant 3.200000e+01 : f32
    %236 = vector.broadcast %cst_169 : f32 to vector<16x1xf32>
    %237 = arith.divf %235, %236 : vector<16x1xf32>
    %238 = vector.broadcast %237 : vector<16x1xf32> to vector<16x32xf32>
    %239 = arith.subf %229, %238 : vector<16x32xf32>
    %240 = arith.mulf %239, %239 : vector<16x32xf32>
    %cst_170 = arith.constant dense<0.000000e+00> : vector<16xf32>
    %241 = vector.multi_reduction <add>, %240, %cst_170 [1] : vector<16x32xf32> to vector<16xf32>
    %242 = vector.shape_cast %241 : vector<16xf32> to vector<16x1xf32>
    %cst_171 = arith.constant 3.200000e+01 : f32
    %243 = vector.broadcast %cst_171 : f32 to vector<16x1xf32>
    %244 = arith.divf %242, %243 : vector<16x1xf32>
    %245 = vector.broadcast %237 : vector<16x1xf32> to vector<16x32xf32>
    %246 = arith.subf %229, %245 : vector<16x32xf32>
    %cst_172 = arith.constant 9.99999974E-6 : f32
    %247 = vector.broadcast %cst_172 : f32 to vector<16x1xf32>
    %248 = arith.addf %244, %247 : vector<16x1xf32>
    %249 = math.rsqrt %248 : vector<16x1xf32>
    %250 = vector.broadcast %249 : vector<16x1xf32> to vector<16x32xf32>
    %251 = arith.mulf %246, %250 : vector<16x32xf32>
    %252 = vector.broadcast %231 : vector<1x32xf32> to vector<16x32xf32>
    %253 = arith.mulf %251, %252 : vector<16x32xf32>
    %254 = vector.broadcast %233 : vector<1x32xf32> to vector<16x32xf32>
    %255 = arith.addf %253, %254 : vector<16x32xf32>
    %256 = arith.truncf %255 : vector<16x32xf32> to vector<16x32xbf16>
    %c0_173 = arith.constant 0 : index
    %c0_174 = arith.constant 0 : index
    %c0_175 = arith.constant 0 : index
    %257 = vector.load %arg16[%c0_173, %c0_174, %c0_175] : memref<1x32x128xbf16, #tpu.memory_space<vmem>>, vector<1x32x128xbf16>
    %258 = vector.shape_cast %257 : vector<1x32x128xbf16> to vector<32x128xbf16>
    %cst_176 = arith.constant dense<0.000000e+00> : vector<16x128xf32>
    %259 = tpu.matmul %256, %258, %cst_176 {dimension_numbers = #tpu.dot_dimension_numbers<[1], [0], [0], [1], [0, 0, 1, 1], [], []>} : vector<16x32xbf16>, vector<32x128xbf16>, vector<16x128xf32> -> vector<16x128xf32>
    %c0_177 = arith.constant 0 : index
    %c0_178 = arith.constant 0 : index
    %c0_179 = arith.constant 0 : index
    %260 = vector.load %arg17[%c0_177, %c0_178, %c0_179] : memref<1x1x128xf32, #tpu.memory_space<vmem>>, vector<1x1x128xf32>
    %261 = vector.shape_cast %260 : vector<1x1x128xf32> to vector<1x128xf32>
    %262 = vector.broadcast %261 : vector<1x128xf32> to vector<16x128xf32>
    %263 = arith.addf %259, %262 : vector<16x128xf32>
    %264 = arith.mulf %263, %263 : vector<16x128xf32>
    %265 = arith.mulf %263, %264 : vector<16x128xf32>
    %cst_180 = arith.constant 4.471500e-02 : f32
    %266 = vector.broadcast %cst_180 : f32 to vector<16x128xf32>
    %267 = arith.mulf %266, %265 : vector<16x128xf32>
    %268 = arith.addf %263, %267 : vector<16x128xf32>
    %cst_181 = arith.constant 0.797884583 : f32
    %269 = vector.broadcast %cst_181 : f32 to vector<16x128xf32>
    %270 = arith.mulf %269, %268 : vector<16x128xf32>
    %271 = math.tanh %270 : vector<16x128xf32>
    %cst_182 = arith.constant 1.000000e+00 : f32
    %272 = vector.broadcast %cst_182 : f32 to vector<16x128xf32>
    %273 = arith.addf %272, %271 : vector<16x128xf32>
    %cst_183 = arith.constant 5.000000e-01 : f32
    %274 = vector.broadcast %cst_183 : f32 to vector<16x128xf32>
    %275 = arith.mulf %274, %273 : vector<16x128xf32>
    %276 = arith.mulf %263, %275 : vector<16x128xf32>
    %277 = arith.truncf %276 : vector<16x128xf32> to vector<16x128xbf16>
    %c0_184 = arith.constant 0 : index
    %c0_185 = arith.constant 0 : index
    %c0_186 = arith.constant 0 : index
    %278 = vector.load %arg18[%c0_184, %c0_185, %c0_186] : memref<1x128x32xbf16, #tpu.memory_space<vmem>>, vector<1x128x32xbf16>
    %279 = vector.shape_cast %278 : vector<1x128x32xbf16> to vector<128x32xbf16>
    %cst_187 = arith.constant dense<0.000000e+00> : vector<16x32xf32>
    %280 = tpu.matmul %277, %279, %cst_187 {dimension_numbers = #tpu.dot_dimension_numbers<[1], [0], [0], [1], [0, 0, 1, 1], [], []>} : vector<16x128xbf16>, vector<128x32xbf16>, vector<16x32xf32> -> vector<16x32xf32>
    %281 = arith.addf %229, %280 : vector<16x32xf32>
    %c0_188 = arith.constant 0 : index
    %c0_189 = arith.constant 0 : index
    %c0_190 = arith.constant 0 : index
    %282 = vector.load %arg19[%c0_188, %c0_189, %c0_190] : memref<1x1x32xf32, #tpu.memory_space<vmem>>, vector<1x1x32xf32>
    %283 = vector.shape_cast %282 : vector<1x1x32xf32> to vector<1x32xf32>
    %284 = vector.broadcast %283 : vector<1x32xf32> to vector<16x32xf32>
    %285 = arith.addf %281, %284 : vector<16x32xf32>
    %c1_i32 = arith.constant 1 : i32
    %286 = arith.cmpi slt, %arg1, %c1_i32 : i32
    %287 = arith.extui %286 : i1 to i32
    %c0_i32_191 = arith.constant 0 : i32
    %288 = arith.cmpi ne, %287, %c0_i32_191 : i32
    scf.if %288 {
      %c0_194 = arith.constant 0 : index
      %c0_195 = arith.constant 0 : index
      %292 = vector.load %arg21[%c0_194, %c0_195] : memref<16x32xf32, #tpu.memory_space<vmem>>, vector<16x32xf32>
      tpu.vector_store %arg21[%c0_194, %c0_195], %285 {strides = array<i32>} : memref<16x32xf32, #tpu.memory_space<vmem>>, vector<16x32xf32>,
    } else {
    }
    %c1_i32_192 = arith.constant 1 : i32
    %289 = arith.cmpi eq, %arg1, %c1_i32_192 : i32
    %290 = arith.extui %289 : i1 to i32
    %c0_i32_193 = arith.constant 0 : i32
    %291 = arith.cmpi ne, %290, %c0_i32_193 : i32
    scf.if %291 {
      %292 = vector.shape_cast %285 : vector<16x32xf32> to vector<2x8x32xf32>
      %c0_194 = arith.constant 0 : index
      %c0_195 = arith.constant 0 : index
      %c0_196 = arith.constant 0 : index
      %293 = vector.load %arg20[%c0_194, %c0_195, %c0_196] : memref<2x8x32xf32, #tpu.memory_space<vmem>>, vector<2x8x32xf32>
      tpu.vector_store %arg20[%c0_194, %c0_195, %c0_196], %292 {strides = array<i32>} : memref<2x8x32xf32, #tpu.memory_space<vmem>>, vector<2x8x32xf32>,
    } else {
    }
    return
  }
  func.func @transform_0(%arg0: i32, %arg1: i32) -> (i32, i32, i32) {
    %c0_i32 = arith.constant 0 : i32
    %c0_i32_0 = arith.constant 0 : i32
    %c0_i32_1 = arith.constant 0 : i32
    return %arg0, %c0_i32, %c0_i32_0 : i32, i32, i32
  }
  func.func @transform_1(%arg0: i32, %arg1: i32) -> (i32, i32) {
    %c0_i32 = arith.constant 0 : i32
    %c0_i32_0 = arith.constant 0 : i32
    %c0_i32_1 = arith.constant 0 : i32
    return %c0_i32, %c0_i32_0 : i32, i32
  }
  func.func @transform_2(%arg0: i32, %arg1: i32) -> (i32, i32, i32) {
    %c0_i32 = arith.constant 0 : i32
    %c0_i32_0 = arith.constant 0 : i32
    %c0_i32_1 = arith.constant 0 : i32
    return %arg1, %c0_i32, %c0_i32_0 : i32, i32, i32
  }
  func.func @transform_3(%arg0: i32, %arg1: i32) -> (i32, i32, i32) {
    %c0_i32 = arith.constant 0 : i32
    %c0_i32_0 = arith.constant 0 : i32
    %c0_i32_1 = arith.constant 0 : i32
    return %arg1, %c0_i32, %c0_i32_0 : i32, i32, i32
  }
  func.func @transform_4(%arg0: i32, %arg1: i32) -> (i32, i32, i32, i32) {
    %c0_i32 = arith.constant 0 : i32
    %c0_i32_0 = arith.constant 0 : i32
    %c0_i32_1 = arith.constant 0 : i32
    %c0_i32_2 = arith.constant 0 : i32
    return %arg1, %c0_i32, %c0_i32_0, %c0_i32_1 : i32, i32, i32, i32
  }
  func.func @transform_5(%arg0: i32, %arg1: i32) -> (i32, i32, i32, i32) {
    %c0_i32 = arith.constant 0 : i32
    %c0_i32_0 = arith.constant 0 : i32
    %c0_i32_1 = arith.constant 0 : i32
    %c0_i32_2 = arith.constant 0 : i32
    return %arg1, %c0_i32, %c0_i32_0, %c0_i32_1 : i32, i32, i32, i32
  }
  func.func @transform_6(%arg0: i32, %arg1: i32) -> (i32, i32, i32, i32) {
    %c0_i32 = arith.constant 0 : i32
    %c0_i32_0 = arith.constant 0 : i32
    %c0_i32_1 = arith.constant 0 : i32
    %c0_i32_2 = arith.constant 0 : i32
    return %arg1, %c0_i32, %c0_i32_0, %c0_i32_1 : i32, i32, i32, i32
  }
  func.func @transform_7(%arg0: i32, %arg1: i32) -> (i32, i32, i32, i32) {
    %c0_i32 = arith.constant 0 : i32
    %c0_i32_0 = arith.constant 0 : i32
    %c0_i32_1 = arith.constant 0 : i32
    %c0_i32_2 = arith.constant 0 : i32
    return %arg1, %c0_i32, %c0_i32_0, %c0_i32_1 : i32, i32, i32, i32
  }
  func.func @transform_8(%arg0: i32, %arg1: i32) -> (i32, i32, i32, i32) {
    %c0_i32 = arith.constant 0 : i32
    %c0_i32_0 = arith.constant 0 : i32
    %c0_i32_1 = arith.constant 0 : i32
    %c0_i32_2 = arith.constant 0 : i32
    return %arg1, %c0_i32, %c0_i32_0, %c0_i32_1 : i32, i32, i32, i32
  }
  func.func @transform_9(%arg0: i32, %arg1: i32) -> (i32, i32, i32, i32) {
    %c0_i32 = arith.constant 0 : i32
    %c0_i32_0 = arith.constant 0 : i32
    %c0_i32_1 = arith.constant 0 : i32
    %c0_i32_2 = arith.constant 0 : i32
    return %arg1, %c0_i32, %c0_i32_0, %c0_i32_1 : i32, i32, i32, i32
  }
  func.func @transform_10(%arg0: i32, %arg1: i32) -> (i32, i32, i32, i32) {
    %c0_i32 = arith.constant 0 : i32
    %c0_i32_0 = arith.constant 0 : i32
    %c0_i32_1 = arith.constant 0 : i32
    %c0_i32_2 = arith.constant 0 : i32
    return %arg1, %c0_i32, %c0_i32_0, %c0_i32_1 : i32, i32, i32, i32
  }
  func.func @transform_11(%arg0: i32, %arg1: i32) -> (i32, i32, i32) {
    %c0_i32 = arith.constant 0 : i32
    %c0_i32_0 = arith.constant 0 : i32
    %c0_i32_1 = arith.constant 0 : i32
    return %arg1, %c0_i32, %c0_i32_0 : i32, i32, i32
  }
  func.func @transform_12(%arg0: i32, %arg1: i32) -> (i32, i32, i32) {
    %c0_i32 = arith.constant 0 : i32
    %c0_i32_0 = arith.constant 0 : i32
    %c0_i32_1 = arith.constant 0 : i32
    return %arg1, %c0_i32, %c0_i32_0 : i32, i32, i32
  }
  func.func @transform_13(%arg0: i32, %arg1: i32) -> (i32, i32, i32) {
    %c0_i32 = arith.constant 0 : i32
    %c0_i32_0 = arith.constant 0 : i32
    %c0_i32_1 = arith.constant 0 : i32
    return %arg1, %c0_i32, %c0_i32_0 : i32, i32, i32
  }
  func.func @transform_14(%arg0: i32, %arg1: i32) -> (i32, i32, i32) {
    %c0_i32 = arith.constant 0 : i32
    %c0_i32_0 = arith.constant 0 : i32
    %c0_i32_1 = arith.constant 0 : i32
    return %arg1, %c0_i32, %c0_i32_0 : i32, i32, i32
  }
  func.func @transform_15(%arg0: i32, %arg1: i32) -> (i32, i32, i32) {
    %c0_i32 = arith.constant 0 : i32
    %c0_i32_0 = arith.constant 0 : i32
    %c0_i32_1 = arith.constant 0 : i32
    return %arg1, %c0_i32, %c0_i32_0 : i32, i32, i32
  }
  func.func @transform_16(%arg0: i32, %arg1: i32) -> (i32, i32, i32) {
    %c0_i32 = arith.constant 0 : i32
    %c0_i32_0 = arith.constant 0 : i32
    %c0_i32_1 = arith.constant 0 : i32
    return %arg1, %c0_i32, %c0_i32_0 : i32, i32, i32
  }
  func.func @transform_17(%arg0: i32, %arg1: i32) -> (i32, i32, i32) {
    %c0_i32 = arith.constant 0 : i32
    %c0_i32_0 = arith.constant 0 : i32
    %c0_i32_1 = arith.constant 0 : i32
    return %arg1, %c0_i32, %c0_i32_0 : i32, i32, i32
  }
  func.func @transform_18(%arg0: i32, %arg1: i32) -> (i32, i32, i32) {
    %c0_i32 = arith.constant 0 : i32
    %c0_i32_0 = arith.constant 0 : i32
    %c0_i32_1 = arith.constant 0 : i32
    return %arg0, %c0_i32, %c0_i32_0 : i32, i32, i32
  }
}

module attributes {stable_mosaic.version = 11 : i64} {
  func.func @head_kernel(%arg0: i32, %arg1: memref<2x8x32xf32, #tpu.memory_space<vmem>>, %arg2: memref<1x32xf32, #tpu.memory_space<vmem>>, %arg3: memref<1x32xf32, #tpu.memory_space<vmem>>, %arg4: memref<32x128xbf16, #tpu.memory_space<vmem>>, %arg5: memref<2x8x128xf32, #tpu.memory_space<vmem>>) attributes {dimension_semantics = [#tpu.dimension_semantics<parallel>], iteration_bounds = array<i64: 1>, scalar_prefetch = 0 : i64, scratch_operands = 0 : i64, tpu.core_type = #tpu.core_type<tc>, window_params = [{transform_indices = @transform_0, window_bounds = array<i64: 2, 8, 32>}, {pipeline_mode = #tpu.pipeline_mode<synchronous>, transform_indices = @transform_1, window_bounds = array<i64: 1, 32>}, {pipeline_mode = #tpu.pipeline_mode<synchronous>, transform_indices = @transform_2, window_bounds = array<i64: 1, 32>}, {pipeline_mode = #tpu.pipeline_mode<synchronous>, transform_indices = @transform_3, window_bounds = array<i64: 32, 128>}, {transform_indices = @transform_4, window_bounds = array<i64: 2, 8, 128>}]} {
    %c0 = arith.constant 0 : index
    %c0_0 = arith.constant 0 : index
    %c0_1 = arith.constant 0 : index
    %0 = vector.load %arg1[%c0, %c0_0, %c0_1] : memref<2x8x32xf32, #tpu.memory_space<vmem>>, vector<2x8x32xf32>
    %1 = vector.shape_cast %0 : vector<2x8x32xf32> to vector<16x32xf32>
    %c0_2 = arith.constant 0 : index
    %c0_3 = arith.constant 0 : index
    %2 = vector.load %arg2[%c0_2, %c0_3] : memref<1x32xf32, #tpu.memory_space<vmem>>, vector<1x32xf32>
    %3 = vector.shape_cast %2 : vector<1x32xf32> to vector<32xf32>
    %c0_4 = arith.constant 0 : index
    %c0_5 = arith.constant 0 : index
    %4 = vector.load %arg3[%c0_4, %c0_5] : memref<1x32xf32, #tpu.memory_space<vmem>>, vector<1x32xf32>
    %5 = vector.shape_cast %4 : vector<1x32xf32> to vector<32xf32>
    %cst = arith.constant dense<0.000000e+00> : vector<16xf32>
    %6 = vector.multi_reduction <add>, %1, %cst [1] : vector<16x32xf32> to vector<16xf32>
    %7 = vector.shape_cast %6 : vector<16xf32> to vector<16x1xf32>
    %cst_6 = arith.constant 3.200000e+01 : f32
    %8 = vector.broadcast %cst_6 : f32 to vector<16x1xf32>
    %9 = arith.divf %7, %8 : vector<16x1xf32>
    %10 = vector.broadcast %9 : vector<16x1xf32> to vector<16x32xf32>
    %11 = arith.subf %1, %10 : vector<16x32xf32>
    %12 = arith.mulf %11, %11 : vector<16x32xf32>
    %cst_7 = arith.constant dense<0.000000e+00> : vector<16xf32>
    %13 = vector.multi_reduction <add>, %12, %cst_7 [1] : vector<16x32xf32> to vector<16xf32>
    %14 = vector.shape_cast %13 : vector<16xf32> to vector<16x1xf32>
    %cst_8 = arith.constant 3.200000e+01 : f32
    %15 = vector.broadcast %cst_8 : f32 to vector<16x1xf32>
    %16 = arith.divf %14, %15 : vector<16x1xf32>
    %17 = vector.broadcast %9 : vector<16x1xf32> to vector<16x32xf32>
    %18 = arith.subf %1, %17 : vector<16x32xf32>
    %cst_9 = arith.constant 9.99999974E-6 : f32
    %19 = vector.broadcast %cst_9 : f32 to vector<16x1xf32>
    %20 = arith.addf %16, %19 : vector<16x1xf32>
    %21 = math.rsqrt %20 : vector<16x1xf32>
    %22 = vector.broadcast %21 : vector<16x1xf32> to vector<16x32xf32>
    %23 = arith.mulf %18, %22 : vector<16x32xf32>
    %24 = vector.shape_cast %3 : vector<32xf32> to vector<1x32xf32>
    %25 = vector.broadcast %24 : vector<1x32xf32> to vector<16x32xf32>
    %26 = arith.mulf %23, %25 : vector<16x32xf32>
    %27 = vector.shape_cast %5 : vector<32xf32> to vector<1x32xf32>
    %28 = vector.broadcast %27 : vector<1x32xf32> to vector<16x32xf32>
    %29 = arith.addf %26, %28 : vector<16x32xf32>
    %30 = arith.truncf %29 : vector<16x32xf32> to vector<16x32xbf16>
    %c0_10 = arith.constant 0 : index
    %c0_11 = arith.constant 0 : index
    %31 = vector.load %arg4[%c0_10, %c0_11] : memref<32x128xbf16, #tpu.memory_space<vmem>>, vector<32x128xbf16>
    %cst_12 = arith.constant dense<0.000000e+00> : vector<16x128xf32>
    %32 = tpu.matmul %30, %31, %cst_12 {dimension_numbers = #tpu.dot_dimension_numbers<[1], [0], [0], [1], [0, 0, 1, 1], [], []>} : vector<16x32xbf16>, vector<32x128xbf16>, vector<16x128xf32> -> vector<16x128xf32>
    %33 = vector.shape_cast %32 : vector<16x128xf32> to vector<2x8x128xf32>
    %c0_13 = arith.constant 0 : index
    %c0_14 = arith.constant 0 : index
    %c0_15 = arith.constant 0 : index
    %34 = vector.load %arg5[%c0_13, %c0_14, %c0_15] : memref<2x8x128xf32, #tpu.memory_space<vmem>>, vector<2x8x128xf32>
    tpu.vector_store %arg5[%c0_13, %c0_14, %c0_15], %33 {strides = array<i32>} : memref<2x8x128xf32, #tpu.memory_space<vmem>>, vector<2x8x128xf32>,
    return
  }
  func.func @transform_0(%arg0: i32) -> (i32, i32, i32) {
    %c0_i32 = arith.constant 0 : i32
    %c0_i32_0 = arith.constant 0 : i32
    %c0_i32_1 = arith.constant 0 : i32
    return %arg0, %c0_i32, %c0_i32_0 : i32, i32, i32
  }
  func.func @transform_1(%arg0: i32) -> (i32, i32) {
    %c0_i32 = arith.constant 0 : i32
    %c0_i32_0 = arith.constant 0 : i32
    %c0_i32_1 = arith.constant 0 : i32
    return %c0_i32, %c0_i32_0 : i32, i32
  }
  func.func @transform_2(%arg0: i32) -> (i32, i32) {
    %c0_i32 = arith.constant 0 : i32
    %c0_i32_0 = arith.constant 0 : i32
    %c0_i32_1 = arith.constant 0 : i32
    return %c0_i32, %c0_i32_0 : i32, i32
  }
  func.func @transform_3(%arg0: i32) -> (i32, i32) {
    %c0_i32 = arith.constant 0 : i32
    %c0_i32_0 = arith.constant 0 : i32
    %c0_i32_1 = arith.constant 0 : i32
    return %c0_i32, %c0_i32_0 : i32, i32
  }
  func.func @transform_4(%arg0: i32) -> (i32, i32, i32) {
    %c0_i32 = arith.constant 0 : i32
    %c0_i32_0 = arith.constant 0 : i32
    %c0_i32_1 = arith.constant 0 : i32
    return %arg0, %c0_i32, %c0_i32_0 : i32, i32, i32
  }
}

</mosaic_0001>

<llo_original>
// kernel: cross_cond_gpt_head_forward.3
$region0: #{cross_cond_gpt_head_forward.3}
  #allocation0 [shape = 'u32[]', space=smem, size = 0x4, offset = 0x4, fixed_abs, tag = 'smem constant byte address 0x4 - core index']
  #allocation1 [shape = 'u32[144,128]{1,0:T(1,128)}', space=vmem, size = 0x12000, scoped, tag = 'internal scratch']
  %s0 = inlined_call_operand.vmem [shape: f32[2,8,32], index: 0, kind: input, shape index: {}]
  %s1 = inlined_call_operand.vmem [shape: f32[1,32], index: 1, kind: input, shape index: {}]
  %s2 = inlined_call_operand.vmem [shape: f32[1,32], index: 2, kind: input, shape index: {}]
  %s3 = inlined_call_operand.vmem [shape: bf16[32,128], index: 3, kind: input, shape index: {}]
  %s4 = inlined_call_operand.vmem [shape: f32[2,8,128], index: 4, kind: output, shape index: {}]
  %s5 = sld [smem:[#allocation0]]
  $region26: #{cross_cond_gpt_head_forward.3} parent=0
    _
  %s7 = ssub.s32 1, %s5
  %s8 = scalar_select 0, %s7, %s5
  // Predicated region
  $region2: #{cross_cond_gpt_head_forward.3} parent=0 // pred_check
    _
  $region3: #{cross_cond_gpt_head_forward.3} parent=0 // pred_check_branch
    %10 = sbr.rel (0) target = $region5
  $region4: #{cross_cond_gpt_head_forward.3} parent=0 // pred_region
    _
  $region5: #{cross_cond_gpt_head_forward.3} parent=0 // pred_fallthru
    _
  // Predicated region
  $region6: #{cross_cond_gpt_head_forward.3} parent=0 // pred_check
    _
  $region7: #{cross_cond_gpt_head_forward.3} parent=0 // pred_check_branch
    %12 = sbr.rel (0) target = $region9
  $region8: #{cross_cond_gpt_head_forward.3} parent=0 // pred_region
    _
  $region9: #{cross_cond_gpt_head_forward.3} parent=0 // pred_fallthru
    _
  // Predicated region
  $region10: #{cross_cond_gpt_head_forward.3} parent=0 // pred_check
    _
  $region11: #{cross_cond_gpt_head_forward.3} parent=0 // pred_check_branch
    %14 = sbr.rel (0) target = $region13
  $region12: #{cross_cond_gpt_head_forward.3} parent=0 // pred_region
    _
  $region13: #{cross_cond_gpt_head_forward.3} parent=0 // pred_fallthru
    _
  // Predicated region
  $region14: #{cross_cond_gpt_head_forward.3} parent=0 // pred_check
    _
  $region15: #{cross_cond_gpt_head_forward.3} parent=0 // pred_check_branch
    %16 = sbr.rel (0) target = $region17
  $region16: #{cross_cond_gpt_head_forward.3} parent=0 // pred_region
    _
  $region17: #{cross_cond_gpt_head_forward.3} parent=0 // pred_fallthru
    _
  %v18 = vld [vmem:[%s0] sm:$0xff]
  %v19 = vld [vmem:[%s0 + $0x8] sm:$0xff]
  %v20 = vld [vmem:[%s1] sm:$0x1]
  %v21 = vld [vmem:[%s2] sm:$0x1]
  %vm22 = vcmask 261120
  %v23 = vsel %vm22, %v18, 0.0
  %24 = vadd.xlane.f32.xlu0 %v23
  %v25 = vpop.xlane.xlu0 %24
  %v26 = vsel %vm22, %v19, 0.0
  %27 = vadd.xlane.f32.xlu0 %v26
  %v28 = vpop.xlane.xlu0 %27
  %v29 = vrcp.pop 32.0
  %v30 = vmul.f32 %v25, %v29
  %v31 = vmul.f32 %v28, %v29
  %v32 = vsub.f32 %v18, %v30
  %v33 = vsub.f32 %v19, %v31
  %v34 = vmul.f32 %v32, %v32
  %v35 = vmul.f32 %v33, %v33
  %v36 = vsel %vm22, %v34, 0.0
  %37 = vadd.xlane.f32.xlu0 %v36
  %v38 = vpop.xlane.xlu0 %37
  %v39 = vsel %vm22, %v35, 0.0
  %40 = vadd.xlane.f32.xlu0 %v39
  %v41 = vpop.xlane.xlu0 %40
  %v42 = vmul.f32 %v38, %v29
  %v43 = vmul.f32 %v41, %v29
  %v44 = vadd.f32 %v42, 1e-05
  %v45 = vadd.f32 %v43, 1e-05
  %v46 = vrsqrt.pop %v44
  %v47 = vrsqrt.pop %v45
  %v48 = vmul.f32 %v32, %v46
  %v49 = vmul.f32 %v33, %v47
  %v51 = vlaneseq
  %v52 = vshrl.u32 %v51, 7
  %v53 = vsub.s32 0, %v52
  %v54 = vrot.slane %v20, %v53
  %v56 = vmul.f32 %v48, %v54
  %v57 = vmul.f32 %v49, %v54
  %v59 = vlaneseq
  %v60 = vshrl.u32 %v59, 7
  %v61 = vsub.s32 0, %v60
  %v62 = vrot.slane %v21, %v61
  %v64 = vadd.f32 %v56, %v62
  %v65 = vadd.f32 %v57, %v62
  %v66 = vpack.c.bf16 %v65, %v64
  %v67 = vld [vmem:[%s3] sm:$0xf]
  %v68 = vld [vmem:[%s3 + $0x4] sm:$0xf]
  %v69 = vld [vmem:[%s3 + $0x8] sm:$0xf]
  %v70 = vld [vmem:[%s3 + $0xc] sm:$0xf]
  %v75 = vunpack.c.l.b16 %v67
  %v76 = vunpack.c.l.b16 %v68
  %v77 = vunpack.c.l.b16 %v69
  %v78 = vunpack.c.l.b16 %v70
  %v79 = vpack.c.b16 %v76, %v75
  %v80 = vpack.c.b16 %v78, %v77
  %v84 = vsel %vm22, %v66, 0
  %86 = vmatprep.subr.bf16.mxu0 0
  %87 = vmatpush1.bf16.msra.mxu0 %v79
  %88 = vmatprep.subr.bf16.mxu0 0
  %89 = vmatpush1.bf16.msra.mxu0 %v80
  %90 = vmatprep.subr.bf16.mxu0 0
  %91 = vmatpush1.bf16.msra.mxu0 0
  %92 = vmatprep.subr.bf16.mxu0 0
  %93 = vmatpush1.bf16.msra.mxu0 0
  %94 = vmatprep.subr.bf16.mxu0 0
  %95 = vmatpush1.bf16.msra.mxu0 0
  %96 = vmatprep.subr.bf16.mxu0 0
  %97 = vmatpush1.bf16.msra.mxu0 0
  %98 = vmatprep.subr.bf16.mxu0 0
  %99 = vmatpush1.bf16.msra.mxu0 0
  %100 = vmatprep.subr.bf16.mxu0 0
  %101 = vmatpush1.bf16.msra.mxu0 0
  %102 = vmatprep.subr.bf16.mxu0 0
  %103 = vmatpush1.bf16.msra.mxu0 0
  %104 = vmatprep.subr.bf16.mxu0 0
  %105 = vmatpush1.bf16.msra.mxu0 0
  %106 = vmatprep.subr.bf16.mxu0 0
  %107 = vmatpush1.bf16.msra.mxu0 0
  %108 = vmatprep.subr.bf16.mxu0 0
  %109 = vmatpush1.bf16.msra.mxu0 0
  %110 = vmatprep.subr.bf16.mxu0 0
  %111 = vmatpush1.bf16.msra.mxu0 0
  %112 = vmatprep.subr.bf16.mxu0 0
  %113 = vmatpush1.bf16.msra.mxu0 0
  %114 = vmatprep.subr.bf16.mxu0 0
  %115 = vmatpush1.bf16.msra.mxu0 0
  %116 = vmatprep.subr.bf16.mxu0 0
  %117 = vmatpush1.bf16.msra.mxu0 0
  %118 = vmatprep.mubr.bf16.mxu0 0
  %119 = vmatmul.mubr.bf16.gmra.mrb[0].mxu0 %v84
  %v120 = vpop.f32.mrb[0].mxu0
  %v121 = vadd.f32 0.0, %v120
  %v122 = vpop.f32.mrb[0].mxu0
  %v123 = vpop.f32.mrb[0].mxu0
  %v124 = vadd.f32 0.0, %v123
  %v125 = vpop.f32.mrb[0].mxu0
  %126 = vdwg.mxu0
  %127 = vst [vmem:[%s4] sm:$0xff] %v121
  %128 = vst [vmem:[%s4 + $0x8] sm:$0xff] %v124
  // Predicated region
  $region18: #{cross_cond_gpt_head_forward.3} parent=0 // pred_check
    _
  $region19: #{cross_cond_gpt_head_forward.3} parent=0 // pred_check_branch
    %130 = sbr.rel (0) target = $region21
  $region20: #{cross_cond_gpt_head_forward.3} parent=0 // pred_region
    _
  $region21: #{cross_cond_gpt_head_forward.3} parent=0 // pred_fallthru
    _
  // Predicated region
  $region22: #{cross_cond_gpt_head_forward.3} parent=0 // pred_check
    _
  $region23: #{cross_cond_gpt_head_forward.3} parent=0 // pred_check_branch
    %132 = sbr.rel (0) target = $region25
  $region24: #{cross_cond_gpt_head_forward.3} parent=0 // pred_region
    _
  $region25: #{cross_cond_gpt_head_forward.3} parent=0 // pred_fallthru
    _

// kernel: cross_cond_gpt_head_forward.2
$region0: #{cross_cond_gpt_head_forward.2}
  #allocation0 [shape = 'u32[]', space=smem, size = 0x4, offset = 0x4, fixed_abs, tag = 'smem constant byte address 0x4 - core index']
  #allocation1 [shape = 'u32[144,128]{1,0:T(1,128)}', space=vmem, size = 0x12000, scoped, tag = 'internal scratch']
  #allocation2 [shape = 'f32[16,32]{1,0:T(8,128)}', space=vmem, size = 0x2000, scoped, tag = 'scratch operand']
  %s0 = inlined_call_operand.vmem [shape: f32[2,8,32], index: 0, kind: input, shape index: {}]
  %s1 = inlined_call_operand.vmem [shape: f32[8,8], index: 1, kind: input, shape index: {}]
  %s2 = inlined_call_operand.vmem [shape: f32[2,1,32], index: 2, kind: input, shape index: {}]
  %s3 = inlined_call_operand.vmem [shape: f32[2,1,32], index: 3, kind: input, shape index: {}]
  %s4 = inlined_call_operand.vmem [shape: bf16[2,4,32,8], index: 4, kind: input, shape index: {}]
  %s5 = inlined_call_operand.vmem [shape: f32[2,4,1,8], index: 5, kind: input, shape index: {}]
  %s6 = inlined_call_operand.vmem [shape: bf16[2,4,32,8], index: 6, kind: input, shape index: {}]
  %s7 = inlined_call_operand.vmem [shape: f32[2,4,1,8], index: 7, kind: input, shape index: {}]
  %s8 = inlined_call_operand.vmem [shape: bf16[2,4,32,8], index: 8, kind: input, shape index: {}]
  %s9 = inlined_call_operand.vmem [shape: f32[2,4,1,8], index: 9, kind: input, shape index: {}]
  %s10 = inlined_call_operand.vmem [shape: bf16[2,4,8,32], index: 10, kind: input, shape index: {}]
  %s11 = inlined_call_operand.vmem [shape: f32[2,1,32], index: 11, kind: input, shape index: {}]
  %s12 = inlined_call_operand.vmem [shape: f32[2,1,32], index: 12, kind: input, shape index: {}]
  %s13 = inlined_call_operand.vmem [shape: f32[2,1,32], index: 13, kind: input, shape index: {}]
  %s14 = inlined_call_operand.vmem [shape: bf16[2,32,128], index: 14, kind: input, shape index: {}]
  %s15 = inlined_call_operand.vmem [shape: f32[2,1,128], index: 15, kind: input, shape index: {}]
  %s16 = inlined_call_operand.vmem [shape: bf16[2,128,32], index: 16, kind: input, shape index: {}]
  %s17 = inlined_call_operand.vmem [shape: f32[2,1,32], index: 17, kind: input, shape index: {}]
  %s18 = inlined_call_operand.vmem [shape: f32[2,8,32], index: 18, kind: output, shape index: {}]
  %s19 = sld [smem:[#allocation0]]
  $region117: #{cross_cond_gpt_head_forward.2} parent=0
    _
  %s21 = ssub.s32 1, %s19
  %s22 = scalar_select 0, %s21, %s19
  loop: start=0, step=1, limit=4
  $region2: #{cross_cond_gpt_head_forward.2} parent=0 // loop_pre_header
    _
  $region3: #{cross_cond_gpt_head_forward.2} parent=0 // loop_header
    %s24 = sphi 0, %s28
    %p25 = scmp.ge.s32.totalorder %s24, 4
    %s31 = sphi 0, %s43
    %s32 = sphi 0, %s39
    %s33 = sphi 0, %s31
    %s34 = sphi 0, %s32
    %s35 = sphi 0, %s33
    %s36 = sphi 0, %s34
    %s46 = sphi 0, %s48
    %s49 = sphi 0, %s46
    %s50 = sphi 0, %s49
    %s66 = sphi 0, %s50
    %s70 = sphi 0, %s70
    %s72 = sphi 0, %s70
    %s73 = sphi 0, %s72
    %s87 = sphi 0, %s73
    %s93 = sphi 0, %s95
    %s96 = sphi 0, %s93
    %s97 = sphi 0, %s96
    %s113 = sphi 0, %s97
    %s119 = sphi 0, %s121
    %s122 = sphi 0, %s119
    %s123 = sphi 0, %s122
    %s139 = sphi 0, %s123
    %s145 = sphi 0, %s147
    %s148 = sphi 0, %s145
    %s149 = sphi 0, %s148
    %s165 = sphi 0, %s149
    %s171 = sphi 0, %s173
    %s174 = sphi 0, %s171
    %s175 = sphi 0, %s174
    %s191 = sphi 0, %s175
    %s197 = sphi 0, %s199
    %s200 = sphi 0, %s197
    %s201 = sphi 0, %s200
    %s217 = sphi 0, %s201
    %s223 = sphi 0, %s225
    %s226 = sphi 0, %s223
    %s227 = sphi 0, %s226
    %s243 = sphi 0, %s227
    %s249 = sphi 0, %s251
    %s252 = sphi 0, %s249
    %s253 = sphi 0, %s252
    %s269 = sphi 0, %s253
    %s275 = sphi 0, %s277
    %s278 = sphi 0, %s275
    %s279 = sphi 0, %s278
    %s295 = sphi 0, %s279
    %s301 = sphi 0, %s303
    %s304 = sphi 0, %s301
    %s305 = sphi 0, %s304
    %s321 = sphi 0, %s305
    %s327 = sphi 0, %s329
    %s330 = sphi 0, %s327
    %s331 = sphi 0, %s330
    %s347 = sphi 0, %s331
    %s353 = sphi 0, %s355
    %s356 = sphi 0, %s353
    %s357 = sphi 0, %s356
    %s373 = sphi 0, %s357
    %s379 = sphi 0, %s381
    %s382 = sphi 0, %s379
    %s383 = sphi 0, %s382
    %s399 = sphi 0, %s383
    %s405 = sphi 0, %s407
    %s408 = sphi 0, %s405
    %s409 = sphi 0, %s408
    %s425 = sphi 0, %s409
    %s431 = sphi 0, %s433
    %s434 = sphi 0, %s431
    %s435 = sphi 0, %s434
    %s451 = sphi 0, %s435
    %s457 = sphi 0, %s459
    %s460 = sphi 0, %s457
    %s461 = sphi 0, %s460
    %s477 = sphi 0, %s461
    %s483 = sphi 0, %s485
    %s486 = sphi 0, %s483
    %s487 = sphi 0, %s486
    %s503 = sphi 0, %s487
    %s509 = sphi 0, %s511
    %s512 = sphi 0, %s509
    %s513 = sphi 0, %s512
    %s529 = sphi 0, %s513
  $region4: #{cross_cond_gpt_head_forward.2} parent=0 // loop_header_branch
    %27 = sbr.rel (%p25) target = $region8
  $region5: #{cross_cond_gpt_head_forward.2} parent=0 // loop_body
    %s29 = ssub.s32 %s24, 1
    %s30 = ssub.s32 %s24, 2
    %s37 = sadd.s32 1, %s32
    %p38 = scmp.ge.s32.totalorder %s37, 2
    %s39 = scalar_select %p38, 0, %s37
    %s40 = sadd.s32 1, %s31
    %s41 = scalar_select %p38, %s40, %s31
    %p42 = scmp.ge.s32.totalorder %s41, 1
    %s43 = scalar_select %p42, 0, %s41
    %s44 = ssub.s32 %s31, %s43
    %p45 = scmp.eq.s32.totalorder %s44, 0
    %s47 = sadd.s32 %s46, 1
    %s48 = scalar_select %p45, %s46, %s47
    %p51 = pneg %p45
    %p52 = scmp.eq.s32.totalorder %s24, 1
    %p53 = por %p51, %p52
    %p54 = scmp.ne.s32.totalorder %s46, %s49
    %p55 = scmp.eq.s32.totalorder %s24, 0
    %p56 = por %p54, %p55
    %p57 = scmp.ne.s32.totalorder %s46, %s49
    %p58 = scmp.eq.s32.totalorder %s29, 1
    %p59 = por %p57, %p58
    %p60 = scmp.ne.s32.totalorder %s49, %s50
    %p61 = scmp.eq.s32.totalorder %s29, 0
    %p62 = por %p60, %p61
    %p63 = scmp.ne.s32.totalorder %s49, %s50
    %p64 = scmp.eq.s32.totalorder %s30, 1
    %p65 = por %p63, %p64
    %p67 = scmp.ne.s32.totalorder %s50, %s66
    %p68 = scmp.eq.s32.totalorder %s30, 0
    %p69 = por %p67, %p68
    %s71 = sadd.s32 %s70, 1
    %p74 = scmp.eq.s32.totalorder %s24, 1
    %p75 = scmp.ne.s32.totalorder %s70, %s72
    %p76 = scmp.eq.s32.totalorder %s24, 0
    %p77 = por %p75, %p76
    %p78 = scmp.ne.s32.totalorder %s70, %s72
    %p79 = scmp.eq.s32.totalorder %s29, 1
    %p80 = por %p78, %p79
    %p81 = scmp.ne.s32.totalorder %s72, %s73
    %p82 = scmp.eq.s32.totalorder %s29, 0
    %p83 = por %p81, %p82
    %p84 = scmp.ne.s32.totalorder %s72, %s73
    %p85 = scmp.eq.s32.totalorder %s30, 1
    %p86 = por %p84, %p85
    %p88 = scmp.ne.s32.totalorder %s73, %s87
    %p89 = scmp.eq.s32.totalorder %s30, 0
    %p90 = por %p88, %p89
    %s91 = ssub.s32 %s32, %s39
    %p92 = scmp.eq.s32.totalorder %s91, 0
    %s94 = sadd.s32 %s93, 1
    %s95 = scalar_select %p92, %s93, %s94
    %p98 = pneg %p92
    %p99 = scmp.eq.s32.totalorder %s24, 1
    %p100 = por %p98, %p99
    %p101 = scmp.ne.s32.totalorder %s93, %s96
    %p102 = scmp.eq.s32.totalorder %s24, 0
    %p103 = por %p101, %p102
    %p104 = scmp.ne.s32.totalorder %s93, %s96
    %p105 = scmp.eq.s32.totalorder %s29, 1
    %p106 = por %p104, %p105
    %p107 = scmp.ne.s32.totalorder %s96, %s97
    %p108 = scmp.eq.s32.totalorder %s29, 0
    %p109 = por %p107, %p108
    %p110 = scmp.ne.s32.totalorder %s96, %s97
    %p111 = scmp.eq.s32.totalorder %s30, 1
    %p112 = por %p110, %p111
    %p114 = scmp.ne.s32.totalorder %s97, %s113
    %p115 = scmp.eq.s32.totalorder %s30, 0
    %p116 = por %p114, %p115
    %s117 = ssub.s32 %s32, %s39
    %p118 = scmp.eq.s32.totalorder %s117, 0
    %s120 = sadd.s32 %s119, 1
    %s121 = scalar_select %p118, %s119, %s120
    %p124 = pneg %p118
    %p125 = scmp.eq.s32.totalorder %s24, 1
    %p126 = por %p124, %p125
    %p127 = scmp.ne.s32.totalorder %s119, %s122
    %p128 = scmp.eq.s32.totalorder %s24, 0
    %p129 = por %p127, %p128
    %p130 = scmp.ne.s32.totalorder %s119, %s122
    %p131 = scmp.eq.s32.totalorder %s29, 1
    %p132 = por %p130, %p131
    %p133 = scmp.ne.s32.totalorder %s122, %s123
    %p134 = scmp.eq.s32.totalorder %s29, 0
    %p135 = por %p133, %p134
    %p136 = scmp.ne.s32.totalorder %s122, %s123
    %p137 = scmp.eq.s32.totalorder %s30, 1
    %p138 = por %p136, %p137
    %p140 = scmp.ne.s32.totalorder %s123, %s139
    %p141 = scmp.eq.s32.totalorder %s30, 0
    %p142 = por %p140, %p141
    %s143 = ssub.s32 %s32, %s39
    %p144 = scmp.eq.s32.totalorder %s143, 0
    %s146 = sadd.s32 %s145, 1
    %s147 = scalar_select %p144, %s145, %s146
    %p150 = pneg %p144
    %p151 = scmp.eq.s32.totalorder %s24, 1
    %p152 = por %p150, %p151
    %p153 = scmp.ne.s32.totalorder %s145, %s148
    %p154 = scmp.eq.s32.totalorder %s24, 0
    %p155 = por %p153, %p154
    %p156 = scmp.ne.s32.totalorder %s145, %s148
    %p157 = scmp.eq.s32.totalorder %s29, 1
    %p158 = por %p156, %p157
    %p159 = scmp.ne.s32.totalorder %s148, %s149
    %p160 = scmp.eq.s32.totalorder %s29, 0
    %p161 = por %p159, %p160
    %p162 = scmp.ne.s32.totalorder %s148, %s149
    %p163 = scmp.eq.s32.totalorder %s30, 1
    %p164 = por %p162, %p163
    %p166 = scmp.ne.s32.totalorder %s149, %s165
    %p167 = scmp.eq.s32.totalorder %s30, 0
    %p168 = por %p166, %p167
    %s169 = ssub.s32 %s32, %s39
    %p170 = scmp.eq.s32.totalorder %s169, 0
    %s172 = sadd.s32 %s171, 1
    %s173 = scalar_select %p170, %s171, %s172
    %p176 = pneg %p170
    %p177 = scmp.eq.s32.totalorder %s24, 1
    %p178 = por %p176, %p177
    %p179 = scmp.ne.s32.totalorder %s171, %s174
    %p180 = scmp.eq.s32.totalorder %s24, 0
    %p181 = por %p179, %p180
    %p182 = scmp.ne.s32.totalorder %s171, %s174
    %p183 = scmp.eq.s32.totalorder %s29, 1
    %p184 = por %p182, %p183
    %p185 = scmp.ne.s32.totalorder %s174, %s175
    %p186 = scmp.eq.s32.totalorder %s29, 0
    %p187 = por %p185, %p186
    %p188 = scmp.ne.s32.totalorder %s174, %s175
    %p189 = scmp.eq.s32.totalorder %s30, 1
    %p190 = por %p188, %p189
    %p192 = scmp.ne.s32.totalorder %s175, %s191
    %p193 = scmp.eq.s32.totalorder %s30, 0
    %p194 = por %p192, %p193
    %s195 = ssub.s32 %s32, %s39
    %p196 = scmp.eq.s32.totalorder %s195, 0
    %s198 = sadd.s32 %s197, 1
    %s199 = scalar_select %p196, %s197, %s198
    %p202 = pneg %p196
    %p203 = scmp.eq.s32.totalorder %s24, 1
    %p204 = por %p202, %p203
    %p205 = scmp.ne.s32.totalorder %s197, %s200
    %p206 = scmp.eq.s32.totalorder %s24, 0
    %p207 = por %p205, %p206
    %p208 = scmp.ne.s32.totalorder %s197, %s200
    %p209 = scmp.eq.s32.totalorder %s29, 1
    %p210 = por %p208, %p209
    %p211 = scmp.ne.s32.totalorder %s200, %s201
    %p212 = scmp.eq.s32.totalorder %s29, 0
    %p213 = por %p211, %p212
    %p214 = scmp.ne.s32.totalorder %s200, %s201
    %p215 = scmp.eq.s32.totalorder %s30, 1
    %p216 = por %p214, %p215
    %p218 = scmp.ne.s32.totalorder %s201, %s217
    %p219 = scmp.eq.s32.totalorder %s30, 0
    %p220 = por %p218, %p219
    %s221 = ssub.s32 %s32, %s39
    %p222 = scmp.eq.s32.totalorder %s221, 0
    %s224 = sadd.s32 %s223, 1
    %s225 = scalar_select %p222, %s223, %s224
    %p228 = pneg %p222
    %p229 = scmp.eq.s32.totalorder %s24, 1
    %p230 = por %p228, %p229
    %p231 = scmp.ne.s32.totalorder %s223, %s226
    %p232 = scmp.eq.s32.totalorder %s24, 0
    %p233 = por %p231, %p232
    %p234 = scmp.ne.s32.totalorder %s223, %s226
    %p235 = scmp.eq.s32.totalorder %s29, 1
    %p236 = por %p234, %p235
    %p237 = scmp.ne.s32.totalorder %s226, %s227
    %p238 = scmp.eq.s32.totalorder %s29, 0
    %p239 = por %p237, %p238
    %p240 = scmp.ne.s32.totalorder %s226, %s227
    %p241 = scmp.eq.s32.totalorder %s30, 1
    %p242 = por %p240, %p241
    %p244 = scmp.ne.s32.totalorder %s227, %s243
    %p245 = scmp.eq.s32.totalorder %s30, 0
    %p246 = por %p244, %p245
    %s247 = ssub.s32 %s32, %s39
    %p248 = scmp.eq.s32.totalorder %s247, 0
    %s250 = sadd.s32 %s249, 1
    %s251 = scalar_select %p248, %s249, %s250
    %p254 = pneg %p248
    %p255 = scmp.eq.s32.totalorder %s24, 1
    %p256 = por %p254, %p255
    %p257 = scmp.ne.s32.totalorder %s249, %s252
    %p258 = scmp.eq.s32.totalorder %s24, 0
    %p259 = por %p257, %p258
    %p260 = scmp.ne.s32.totalorder %s249, %s252
    %p261 = scmp.eq.s32.totalorder %s29, 1
    %p262 = por %p260, %p261
    %p263 = scmp.ne.s32.totalorder %s252, %s253
    %p264 = scmp.eq.s32.totalorder %s29, 0
    %p265 = por %p263, %p264
    %p266 = scmp.ne.s32.totalorder %s252, %s253
    %p267 = scmp.eq.s32.totalorder %s30, 1
    %p268 = por %p266, %p267
    %p270 = scmp.ne.s32.totalorder %s253, %s269
    %p271 = scmp.eq.s32.totalorder %s30, 0
    %p272 = por %p270, %p271
    %s273 = ssub.s32 %s32, %s39
    %p274 = scmp.eq.s32.totalorder %s273, 0
    %s276 = sadd.s32 %s275, 1
    %s277 = scalar_select %p274, %s275, %s276
    %p280 = pneg %p274
    %p281 = scmp.eq.s32.totalorder %s24, 1
    %p282 = por %p280, %p281
    %p283 = scmp.ne.s32.totalorder %s275, %s278
    %p284 = scmp.eq.s32.totalorder %s24, 0
    %p285 = por %p283, %p284
    %p286 = scmp.ne.s32.totalorder %s275, %s278
    %p287 = scmp.eq.s32.totalorder %s29, 1
    %p288 = por %p286, %p287
    %p289 = scmp.ne.s32.totalorder %s278, %s279
    %p290 = scmp.eq.s32.totalorder %s29, 0
    %p291 = por %p289, %p290
    %p292 = scmp.ne.s32.totalorder %s278, %s279
    %p293 = scmp.eq.s32.totalorder %s30, 1
    %p294 = por %p292, %p293
    %p296 = scmp.ne.s32.totalorder %s279, %s295
    %p297 = scmp.eq.s32.totalorder %s30, 0
    %p298 = por %p296, %p297
    %s299 = ssub.s32 %s32, %s39
    %p300 = scmp.eq.s32.totalorder %s299, 0
    %s302 = sadd.s32 %s301, 1
    %s303 = scalar_select %p300, %s301, %s302
    %p306 = pneg %p300
    %p307 = scmp.eq.s32.totalorder %s24, 1
    %p308 = por %p306, %p307
    %p309 = scmp.ne.s32.totalorder %s301, %s304
    %p310 = scmp.eq.s32.totalorder %s24, 0
    %p311 = por %p309, %p310
    %p312 = scmp.ne.s32.totalorder %s301, %s304
    %p313 = scmp.eq.s32.totalorder %s29, 1
    %p314 = por %p312, %p313
    %p315 = scmp.ne.s32.totalorder %s304, %s305
    %p316 = scmp.eq.s32.totalorder %s29, 0
    %p317 = por %p315, %p316
    %p318 = scmp.ne.s32.totalorder %s304, %s305
    %p319 = scmp.eq.s32.totalorder %s30, 1
    %p320 = por %p318, %p319
    %p322 = scmp.ne.s32.totalorder %s305, %s321
    %p323 = scmp.eq.s32.totalorder %s30, 0
    %p324 = por %p322, %p323
    %s325 = ssub.s32 %s32, %s39
    %p326 = scmp.eq.s32.totalorder %s325, 0
    %s328 = sadd.s32 %s327, 1
    %s329 = scalar_select %p326, %s327, %s328
    %p332 = pneg %p326
    %p333 = scmp.eq.s32.totalorder %s24, 1
    %p334 = por %p332, %p333
    %p335 = scmp.ne.s32.totalorder %s327, %s330
    %p336 = scmp.eq.s32.totalorder %s24, 0
    %p337 = por %p335, %p336
    %p338 = scmp.ne.s32.totalorder %s327, %s330
    %p339 = scmp.eq.s32.totalorder %s29, 1
    %p340 = por %p338, %p339
    %p341 = scmp.ne.s32.totalorder %s330, %s331
    %p342 = scmp.eq.s32.totalorder %s29, 0
    %p343 = por %p341, %p342
    %p344 = scmp.ne.s32.totalorder %s330, %s331
    %p345 = scmp.eq.s32.totalorder %s30, 1
    %p346 = por %p344, %p345
    %p348 = scmp.ne.s32.totalorder %s331, %s347
    %p349 = scmp.eq.s32.totalorder %s30, 0
    %p350 = por %p348, %p349
    %s351 = ssub.s32 %s32, %s39
    %p352 = scmp.eq.s32.totalorder %s351, 0
    %s354 = sadd.s32 %s353, 1
    %s355 = scalar_select %p352, %s353, %s354
    %p358 = pneg %p352
    %p359 = scmp.eq.s32.totalorder %s24, 1
    %p360 = por %p358, %p359
    %p361 = scmp.ne.s32.totalorder %s353, %s356
    %p362 = scmp.eq.s32.totalorder %s24, 0
    %p363 = por %p361, %p362
    %p364 = scmp.ne.s32.totalorder %s353, %s356
    %p365 = scmp.eq.s32.totalorder %s29, 1
    %p366 = por %p364, %p365
    %p367 = scmp.ne.s32.totalorder %s356, %s357
    %p368 = scmp.eq.s32.totalorder %s29, 0
    %p369 = por %p367, %p368
    %p370 = scmp.ne.s32.totalorder %s356, %s357
    %p371 = scmp.eq.s32.totalorder %s30, 1
    %p372 = por %p370, %p371
    %p374 = scmp.ne.s32.totalorder %s357, %s373
    %p375 = scmp.eq.s32.totalorder %s30, 0
    %p376 = por %p374, %p375
    %s377 = ssub.s32 %s32, %s39
    %p378 = scmp.eq.s32.totalorder %s377, 0
    %s380 = sadd.s32 %s379, 1
    %s381 = scalar_select %p378, %s379, %s380
    %p384 = pneg %p378
    %p385 = scmp.eq.s32.totalorder %s24, 1
    %p386 = por %p384, %p385
    %p387 = scmp.ne.s32.totalorder %s379, %s382
    %p388 = scmp.eq.s32.totalorder %s24, 0
    %p389 = por %p387, %p388
    %p390 = scmp.ne.s32.totalorder %s379, %s382
    %p391 = scmp.eq.s32.totalorder %s29, 1
    %p392 = por %p390, %p391
    %p393 = scmp.ne.s32.totalorder %s382, %s383
    %p394 = scmp.eq.s32.totalorder %s29, 0
    %p395 = por %p393, %p394
    %p396 = scmp.ne.s32.totalorder %s382, %s383
    %p397 = scmp.eq.s32.totalorder %s30, 1
    %p398 = por %p396, %p397
    %p400 = scmp.ne.s32.totalorder %s383, %s399
    %p401 = scmp.eq.s32.totalorder %s30, 0
    %p402 = por %p400, %p401
    %s403 = ssub.s32 %s32, %s39
    %p404 = scmp.eq.s32.totalorder %s403, 0
    %s406 = sadd.s32 %s405, 1
    %s407 = scalar_select %p404, %s405, %s406
    %p410 = pneg %p404
    %p411 = scmp.eq.s32.totalorder %s24, 1
    %p412 = por %p410, %p411
    %p413 = scmp.ne.s32.totalorder %s405, %s408
    %p414 = scmp.eq.s32.totalorder %s24, 0
    %p415 = por %p413, %p414
    %p416 = scmp.ne.s32.totalorder %s405, %s408
    %p417 = scmp.eq.s32.totalorder %s29, 1
    %p418 = por %p416, %p417
    %p419 = scmp.ne.s32.totalorder %s408, %s409
    %p420 = scmp.eq.s32.totalorder %s29, 0
    %p421 = por %p419, %p420
    %p422 = scmp.ne.s32.totalorder %s408, %s409
    %p423 = scmp.eq.s32.totalorder %s30, 1
    %p424 = por %p422, %p423
    %p426 = scmp.ne.s32.totalorder %s409, %s425
    %p427 = scmp.eq.s32.totalorder %s30, 0
    %p428 = por %p426, %p427
    %s429 = ssub.s32 %s32, %s39
    %p430 = scmp.eq.s32.totalorder %s429, 0
    %s432 = sadd.s32 %s431, 1
    %s433 = scalar_select %p430, %s431, %s432
    %p436 = pneg %p430
    %p437 = scmp.eq.s32.totalorder %s24, 1
    %p438 = por %p436, %p437
    %p439 = scmp.ne.s32.totalorder %s431, %s434
    %p440 = scmp.eq.s32.totalorder %s24, 0
    %p441 = por %p439, %p440
    %p442 = scmp.ne.s32.totalorder %s431, %s434
    %p443 = scmp.eq.s32.totalorder %s29, 1
    %p444 = por %p442, %p443
    %p445 = scmp.ne.s32.totalorder %s434, %s435
    %p446 = scmp.eq.s32.totalorder %s29, 0
    %p447 = por %p445, %p446
    %p448 = scmp.ne.s32.totalorder %s434, %s435
    %p449 = scmp.eq.s32.totalorder %s30, 1
    %p450 = por %p448, %p449
    %p452 = scmp.ne.s32.totalorder %s435, %s451
    %p453 = scmp.eq.s32.totalorder %s30, 0
    %p454 = por %p452, %p453
    %s455 = ssub.s32 %s32, %s39
    %p456 = scmp.eq.s32.totalorder %s455, 0
    %s458 = sadd.s32 %s457, 1
    %s459 = scalar_select %p456, %s457, %s458
    %p462 = pneg %p456
    %p463 = scmp.eq.s32.totalorder %s24, 1
    %p464 = por %p462, %p463
    %p465 = scmp.ne.s32.totalorder %s457, %s460
    %p466 = scmp.eq.s32.totalorder %s24, 0
    %p467 = por %p465, %p466
    %p468 = scmp.ne.s32.totalorder %s457, %s460
    %p469 = scmp.eq.s32.totalorder %s29, 1
    %p470 = por %p468, %p469
    %p471 = scmp.ne.s32.totalorder %s460, %s461
    %p472 = scmp.eq.s32.totalorder %s29, 0
    %p473 = por %p471, %p472
    %p474 = scmp.ne.s32.totalorder %s460, %s461
    %p475 = scmp.eq.s32.totalorder %s30, 1
    %p476 = por %p474, %p475
    %p478 = scmp.ne.s32.totalorder %s461, %s477
    %p479 = scmp.eq.s32.totalorder %s30, 0
    %p480 = por %p478, %p479
    %s481 = ssub.s32 %s32, %s39
    %p482 = scmp.eq.s32.totalorder %s481, 0
    %s484 = sadd.s32 %s483, 1
    %s485 = scalar_select %p482, %s483, %s484
    %p488 = pneg %p482
    %p489 = scmp.eq.s32.totalorder %s24, 1
    %p490 = por %p488, %p489
    %p491 = scmp.ne.s32.totalorder %s483, %s486
    %p492 = scmp.eq.s32.totalorder %s24, 0
    %p493 = por %p491, %p492
    %p494 = scmp.ne.s32.totalorder %s483, %s486
    %p495 = scmp.eq.s32.totalorder %s29, 1
    %p496 = por %p494, %p495
    %p497 = scmp.ne.s32.totalorder %s486, %s487
    %p498 = scmp.eq.s32.totalorder %s29, 0
    %p499 = por %p497, %p498
    %p500 = scmp.ne.s32.totalorder %s486, %s487
    %p501 = scmp.eq.s32.totalorder %s30, 1
    %p502 = por %p500, %p501
    %p504 = scmp.ne.s32.totalorder %s487, %s503
    %p505 = scmp.eq.s32.totalorder %s30, 0
    %p506 = por %p504, %p505
    %s507 = ssub.s32 %s31, %s43
    %p508 = scmp.eq.s32.totalorder %s507, 0
    %s510 = sadd.s32 %s509, 1
    %s511 = scalar_select %p508, %s509, %s510
    %p514 = pneg %p508
    %p515 = scmp.eq.s32.totalorder %s24, 1
    %p516 = por %p514, %p515
    %p517 = scmp.ne.s32.totalorder %s509, %s512
    %p518 = scmp.eq.s32.totalorder %s24, 0
    %p519 = por %p517, %p518
    %p520 = scmp.ne.s32.totalorder %s509, %s512
    %p521 = scmp.eq.s32.totalorder %s29, 1
    %p522 = por %p520, %p521
    %p523 = scmp.ne.s32.totalorder %s512, %s513
    %p524 = scmp.eq.s32.totalorder %s29, 0
    %p525 = por %p523, %p524
    %p526 = scmp.ne.s32.totalorder %s512, %s513
    %p527 = scmp.eq.s32.totalorder %s30, 1
    %p528 = por %p526, %p527
    %p530 = scmp.ne.s32.totalorder %s513, %s529
    %p531 = scmp.eq.s32.totalorder %s30, 0
    %p532 = por %p530, %p531
    %p533 = scmp.le.s32.totalorder 1, %s24
    %p534 = scmp.lt.s32.totalorder %s24, 3
    %p535 = pnand %p533, %p534
    %p536 = pneg %p535
    // Predicated region
    $region9: #{cross_cond_gpt_head_forward.2} parent=5 // pred_check
      _
    $region10: #{cross_cond_gpt_head_forward.2} parent=5 // pred_check_branch
      %538 = sbr.rel (%p535) target = $region12
    $region11: #{cross_cond_gpt_head_forward.2} parent=5 // pred_region
      %s539 = ssub.s32 %s24, 1
      // Predicated region
      $region13: #{cross_cond_gpt_head_forward.2} parent=11 // pred_check
        %p540 = pneg %p62
      $region14: #{cross_cond_gpt_head_forward.2} parent=11 // pred_check_branch
        %542 = sbr.rel (%p540) target = $region16
      $region15: #{cross_cond_gpt_head_forward.2} parent=11 // pred_region
        %s543 = smul.u32 2, %s33
        %p544 = scmp.lt.s32.totalorder %s543, 1
        %s545 = scalar_select %p544, %s543, 1
        %s546 = smul.addr %s545, 8
        %s547 = scalar_lea.vmem %s0, %s546
        %s548 = smul.u32 2, %s33
      $region16: #{cross_cond_gpt_head_forward.2} parent=11 // pred_fallthru
        _
      // Predicated region
      $region17: #{cross_cond_gpt_head_forward.2} parent=11 // pred_check
        %p549 = pneg %p83
      $region18: #{cross_cond_gpt_head_forward.2} parent=11 // pred_check_branch
        %551 = sbr.rel (%p549) target = $region20
      $region19: #{cross_cond_gpt_head_forward.2} parent=11 // pred_region
        _
      $region20: #{cross_cond_gpt_head_forward.2} parent=11 // pred_fallthru
        _
    $region12: #{cross_cond_gpt_head_forward.2} parent=5 // pred_fallthru
      _
    %p552 = scmp.lt.s32.totalorder %s24, 2
    // Predicated region
    $region21: #{cross_cond_gpt_head_forward.2} parent=5 // pred_check
      %p553 = pneg %p552
    $region22: #{cross_cond_gpt_head_forward.2} parent=5 // pred_check_branch
      %555 = sbr.rel (%p553) target = $region24
    $region23: #{cross_cond_gpt_head_forward.2} parent=5 // pred_region
      // Predicated region
      $region25: #{cross_cond_gpt_head_forward.2} parent=23 // pred_check
        %p556 = pneg %p103
      $region26: #{cross_cond_gpt_head_forward.2} parent=23 // pred_check_branch
        %558 = sbr.rel (%p556) target = $region28
      $region27: #{cross_cond_gpt_head_forward.2} parent=23 // pred_region
        %p559 = scmp.lt.s32.totalorder %s32, 1
        %s560 = scalar_select %p559, %s32, 1
        %s561 = scalar_lea.vmem %s2, %s560
      $region28: #{cross_cond_gpt_head_forward.2} parent=23 // pred_fallthru
        _
      // Predicated region
      $region29: #{cross_cond_gpt_head_forward.2} parent=23 // pred_check
        %p562 = pneg %p129
      $region30: #{cross_cond_gpt_head_forward.2} parent=23 // pred_check_branch
        %564 = sbr.rel (%p562) target = $region32
      $region31: #{cross_cond_gpt_head_forward.2} parent=23 // pred_region
        %p565 = scmp.lt.s32.totalorder %s32, 1
        %s566 = scalar_select %p565, %s32, 1
        %s567 = scalar_lea.vmem %s3, %s566
      $region32: #{cross_cond_gpt_head_forward.2} parent=23 // pred_fallthru
        _
      // Predicated region
      $region33: #{cross_cond_gpt_head_forward.2} parent=23 // pred_check
        %p568 = pneg %p155
      $region34: #{cross_cond_gpt_head_forward.2} parent=23 // pred_check_branch
        %570 = sbr.rel (%p568) target = $region36
      $region35: #{cross_cond_gpt_head_forward.2} parent=23 // pred_region
        %p571 = scmp.lt.s32.totalorder %s32, 1
        %s572 = scalar_select %p571, %s32, 1
        %s573 = smul.addr %s572, 16
        %s574 = smul.addr %s573, 4
        %s575 = scalar_lea.vmem %s4, %s574
      $region36: #{cross_cond_gpt_head_forward.2} parent=23 // pred_fallthru
        _
      // Predicated region
      $region37: #{cross_cond_gpt_head_forward.2} parent=23 // pred_check
        %p576 = pneg %p181
      $region38: #{cross_cond_gpt_head_forward.2} parent=23 // pred_check_branch
        %578 = sbr.rel (%p576) target = $region40
      $region39: #{cross_cond_gpt_head_forward.2} parent=23 // pred_region
        %p579 = scmp.lt.s32.totalorder %s32, 1
        %s580 = scalar_select %p579, %s32, 1
        %s581 = smul.addr %s580, 4
        %s582 = scalar_lea.vmem %s5, %s581
      $region40: #{cross_cond_gpt_head_forward.2} parent=23 // pred_fallthru
        _
      // Predicated region
      $region41: #{cross_cond_gpt_head_forward.2} parent=23 // pred_check
        %p583 = pneg %p207
      $region42: #{cross_cond_gpt_head_forward.2} parent=23 // pred_check_branch
        %585 = sbr.rel (%p583) target = $region44
      $region43: #{cross_cond_gpt_head_forward.2} parent=23 // pred_region
        %p586 = scmp.lt.s32.totalorder %s32, 1
        %s587 = scalar_select %p586, %s32, 1
        %s588 = smul.addr %s587, 16
        %s589 = smul.addr %s588, 4
        %s590 = scalar_lea.vmem %s6, %s589
      $region44: #{cross_cond_gpt_head_forward.2} parent=23 // pred_fallthru
        _
      // Predicated region
      $region45: #{cross_cond_gpt_head_forward.2} parent=23 // pred_check
        %p591 = pneg %p233
      $region46: #{cross_cond_gpt_head_forward.2} parent=23 // pred_check_branch
        %593 = sbr.rel (%p591) target = $region48
      $region47: #{cross_cond_gpt_head_forward.2} parent=23 // pred_region
        %p594 = scmp.lt.s32.totalorder %s32, 1
        %s595 = scalar_select %p594, %s32, 1
        %s596 = smul.addr %s595, 4
        %s597 = scalar_lea.vmem %s7, %s596
      $region48: #{cross_cond_gpt_head_forward.2} parent=23 // pred_fallthru
        _
      // Predicated region
      $region49: #{cross_cond_gpt_head_forward.2} parent=23 // pred_check
        %p598 = pneg %p259
      $region50: #{cross_cond_gpt_head_forward.2} parent=23 // pred_check_branch
        %600 = sbr.rel (%p598) target = $region52
      $region51: #{cross_cond_gpt_head_forward.2} parent=23 // pred_region
        %p601 = scmp.lt.s32.totalorder %s32, 1
        %s602 = scalar_select %p601, %s32, 1
        %s603 = smul.addr %s602, 16
        %s604 = smul.addr %s603, 4
        %s605 = scalar_lea.vmem %s8, %s604
      $region52: #{cross_cond_gpt_head_forward.2} parent=23 // pred_fallthru
        _
      // Predicated region
      $region53: #{cross_cond_gpt_head_forward.2} parent=23 // pred_check
        %p606 = pneg %p285
      $region54: #{cross_cond_gpt_head_forward.2} parent=23 // pred_check_branch
        %608 = sbr.rel (%p606) target = $region56
      $region55: #{cross_cond_gpt_head_forward.2} parent=23 // pred_region
        %p609 = scmp.lt.s32.totalorder %s32, 1
        %s610 = scalar_select %p609, %s32, 1
        %s611 = smul.addr %s610, 4
        %s612 = scalar_lea.vmem %s9, %s611
      $region56: #{cross_cond_gpt_head_forward.2} parent=23 // pred_fallthru
        _
      // Predicated region
      $region57: #{cross_cond_gpt_head_forward.2} parent=23 // pred_check
        %p613 = pneg %p311
      $region58: #{cross_cond_gpt_head_forward.2} parent=23 // pred_check_branch
        %615 = sbr.rel (%p613) target = $region60
      $region59: #{cross_cond_gpt_head_forward.2} parent=23 // pred_region
        %p616 = scmp.lt.s32.totalorder %s32, 1
        %s617 = scalar_select %p616, %s32, 1
        %s618 = smul.addr %s617, 4
        %s619 = smul.addr %s618, 4
        %s620 = scalar_lea.vmem %s10, %s619
      $region60: #{cross_cond_gpt_head_forward.2} parent=23 // pred_fallthru
        _
      // Predicated region
      $region61: #{cross_cond_gpt_head_forward.2} parent=23 // pred_check
        %p621 = pneg %p337
      $region62: #{cross_cond_gpt_head_forward.2} parent=23 // pred_check_branch
        %623 = sbr.rel (%p621) target = $region64
      $region63: #{cross_cond_gpt_head_forward.2} parent=23 // pred_region
        %p624 = scmp.lt.s32.totalorder %s32, 1
        %s625 = scalar_select %p624, %s32, 1
        %s626 = scalar_lea.vmem %s11, %s625
      $region64: #{cross_cond_gpt_head_forward.2} parent=23 // pred_fallthru
        _
      // Predicated region
      $region65: #{cross_cond_gpt_head_forward.2} parent=23 // pred_check
        %p627 = pneg %p363
      $region66: #{cross_cond_gpt_head_forward.2} parent=23 // pred_check_branch
        %629 = sbr.rel (%p627) target = $region68
      $region67: #{cross_cond_gpt_head_forward.2} parent=23 // pred_region
        %p630 = scmp.lt.s32.totalorder %s32, 1
        %s631 = scalar_select %p630, %s32, 1
        %s632 = scalar_lea.vmem %s12, %s631
      $region68: #{cross_cond_gpt_head_forward.2} parent=23 // pred_fallthru
        _
      // Predicated region
      $region69: #{cross_cond_gpt_head_forward.2} parent=23 // pred_check
        %p633 = pneg %p389
      $region70: #{cross_cond_gpt_head_forward.2} parent=23 // pred_check_branch
        %635 = sbr.rel (%p633) target = $region72
      $region71: #{cross_cond_gpt_head_forward.2} parent=23 // pred_region
        %p636 = scmp.lt.s32.totalorder %s32, 1
        %s637 = scalar_select %p636, %s32, 1
        %s638 = scalar_lea.vmem %s13, %s637
      $region72: #{cross_cond_gpt_head_forward.2} parent=23 // pred_fallthru
        _
      // Predicated region
      $region73: #{cross_cond_gpt_head_forward.2} parent=23 // pred_check
        %p639 = pneg %p415
      $region74: #{cross_cond_gpt_head_forward.2} parent=23 // pred_check_branch
        %641 = sbr.rel (%p639) target = $region76
      $region75: #{cross_cond_gpt_head_forward.2} parent=23 // pred_region
        %p642 = scmp.lt.s32.totalorder %s32, 1
        %s643 = scalar_select %p642, %s32, 1
        %s644 = smul.addr %s643, 4
        %s645 = smul.addr %s644, 4
        %s646 = scalar_lea.vmem %s14, %s645
      $region76: #{cross_cond_gpt_head_forward.2} parent=23 // pred_fallthru
        _
      // Predicated region
      $region77: #{cross_cond_gpt_head_forward.2} parent=23 // pred_check
        %p647 = pneg %p441
      $region78: #{cross_cond_gpt_head_forward.2} parent=23 // pred_check_branch
        %649 = sbr.rel (%p647) target = $region80
      $region79: #{cross_cond_gpt_head_forward.2} parent=23 // pred_region
        %p650 = scmp.lt.s32.totalorder %s32, 1
        %s651 = scalar_select %p650, %s32, 1
        %s652 = scalar_lea.vmem %s15, %s651
      $region80: #{cross_cond_gpt_head_forward.2} parent=23 // pred_fallthru
        _
      // Predicated region
      $region81: #{cross_cond_gpt_head_forward.2} parent=23 // pred_check
        %p653 = pneg %p467
      $region82: #{cross_cond_gpt_head_forward.2} parent=23 // pred_check_branch
        %655 = sbr.rel (%p653) target = $region84
      $region83: #{cross_cond_gpt_head_forward.2} parent=23 // pred_region
        %p656 = scmp.lt.s32.totalorder %s32, 1
        %s657 = scalar_select %p656, %s32, 1
        %s658 = smul.addr %s657, 16
        %s659 = smul.addr %s658, 4
        %s660 = scalar_lea.vmem %s16, %s659
      $region84: #{cross_cond_gpt_head_forward.2} parent=23 // pred_fallthru
        _
      // Predicated region
      $region85: #{cross_cond_gpt_head_forward.2} parent=23 // pred_check
        %p661 = pneg %p493
      $region86: #{cross_cond_gpt_head_forward.2} parent=23 // pred_check_branch
        %663 = sbr.rel (%p661) target = $region88
      $region87: #{cross_cond_gpt_head_forward.2} parent=23 // pred_region
        %p664 = scmp.lt.s32.totalorder %s32, 1
        %s665 = scalar_select %p664, %s32, 1
        %s666 = scalar_lea.vmem %s17, %s665
      $region88: #{cross_cond_gpt_head_forward.2} parent=23 // pred_fallthru
        _
    $region24: #{cross_cond_gpt_head_forward.2} parent=5 // pred_fallthru
      _
    %p667 = scmp.le.s32.totalorder 1, %s24
    %p668 = scmp.lt.s32.totalorder %s24, 3
    %p669 = pnand %p667, %p668
    %p670 = pneg %p669
    // Predicated region
    $region89: #{cross_cond_gpt_head_forward.2} parent=5 // pred_check
      _
    $region90: #{cross_cond_gpt_head_forward.2} parent=5 // pred_check_branch
      %672 = sbr.rel (%p669) target = $region92
    $region91: #{cross_cond_gpt_head_forward.2} parent=5 // pred_region
      %s673 = ssub.s32 %s24, 1
      %s674 = smul.u32 2, %s33
      %p675 = scmp.lt.s32.totalorder %s674, 1
      %s676 = scalar_select %p675, %s674, 1
      %s677 = smul.addr %s676, 8
      %s678 = scalar_lea.vmem %s0, %s677
      %p679 = pneg %p62
      %p680 = pneg %p59
      %p681 = pneg %p83
      %p682 = pneg %p80
      %p683 = scmp.lt.s32.totalorder %s34, 1
      %s684 = scalar_select %p683, %s34, 1
      %s685 = scalar_lea.vmem %s2, %s684
      %p686 = pneg %p109
      %p687 = pneg %p106
      %p688 = scmp.lt.s32.totalorder %s34, 1
      %s689 = scalar_select %p688, %s34, 1
      %s690 = scalar_lea.vmem %s3, %s689
      %p691 = pneg %p135
      %p692 = pneg %p132
      %p693 = scmp.lt.s32.totalorder %s34, 1
      %s694 = scalar_select %p693, %s34, 1
      %s695 = smul.addr %s694, 16
      %s696 = smul.addr %s695, 4
      %s697 = scalar_lea.vmem %s4, %s696
      %p698 = pneg %p161
      %p699 = pneg %p158
      %p700 = scmp.lt.s32.totalorder %s34, 1
      %s701 = scalar_select %p700, %s34, 1
      %s702 = smul.addr %s701, 4
      %s703 = scalar_lea.vmem %s5, %s702
      %p704 = pneg %p187
      %p705 = pneg %p184
      %p706 = scmp.lt.s32.totalorder %s34, 1
      %s707 = scalar_select %p706, %s34, 1
      %s708 = smul.addr %s707, 16
      %s709 = smul.addr %s708, 4
      %s710 = scalar_lea.vmem %s6, %s709
      %p711 = pneg %p213
      %p712 = pneg %p210
      %p713 = scmp.lt.s32.totalorder %s34, 1
      %s714 = scalar_select %p713, %s34, 1
      %s715 = smul.addr %s714, 4
      %s716 = scalar_lea.vmem %s7, %s715
      %p717 = pneg %p239
      %p718 = pneg %p236
      %p719 = scmp.lt.s32.totalorder %s34, 1
      %s720 = scalar_select %p719, %s34, 1
      %s721 = smul.addr %s720, 16
      %s722 = smul.addr %s721, 4
      %s723 = scalar_lea.vmem %s8, %s722
      %p724 = pneg %p265
      %p725 = pneg %p262
      %p726 = scmp.lt.s32.totalorder %s34, 1
      %s727 = scalar_select %p726, %s34, 1
      %s728 = smul.addr %s727, 4
      %s729 = scalar_lea.vmem %s9, %s728
      %p730 = pneg %p291
      %p731 = pneg %p288
      %p732 = scmp.lt.s32.totalorder %s34, 1
      %s733 = scalar_select %p732, %s34, 1
      %s734 = smul.addr %s733, 4
      %s735 = smul.addr %s734, 4
      %s736 = scalar_lea.vmem %s10, %s735
      %p737 = pneg %p317
      %p738 = pneg %p314
      %p739 = scmp.lt.s32.totalorder %s34, 1
      %s740 = scalar_select %p739, %s34, 1
      %s741 = scalar_lea.vmem %s11, %s740
      %p742 = pneg %p343
      %p743 = pneg %p340
      %p744 = scmp.lt.s32.totalorder %s34, 1
      %s745 = scalar_select %p744, %s34, 1
      %s746 = scalar_lea.vmem %s12, %s745
      %p747 = pneg %p369
      %p748 = pneg %p366
      %p749 = scmp.lt.s32.totalorder %s34, 1
      %s750 = scalar_select %p749, %s34, 1
      %s751 = scalar_lea.vmem %s13, %s750
      %p752 = pneg %p395
      %p753 = pneg %p392
      %p754 = scmp.lt.s32.totalorder %s34, 1
      %s755 = scalar_select %p754, %s34, 1
      %s756 = smul.addr %s755, 4
      %s757 = smul.addr %s756, 4
      %s758 = scalar_lea.vmem %s14, %s757
      %p759 = pneg %p421
      %p760 = pneg %p418
      %p761 = scmp.lt.s32.totalorder %s34, 1
      %s762 = scalar_select %p761, %s34, 1
      %s763 = scalar_lea.vmem %s15, %s762
      %p764 = pneg %p447
      %p765 = pneg %p444
      %p766 = scmp.lt.s32.totalorder %s34, 1
      %s767 = scalar_select %p766, %s34, 1
      %s768 = smul.addr %s767, 16
      %s769 = smul.addr %s768, 4
      %s770 = scalar_lea.vmem %s16, %s769
      %p771 = pneg %p473
      %p772 = pneg %p470
      %p773 = scmp.lt.s32.totalorder %s34, 1
      %s774 = scalar_select %p773, %s34, 1
      %s775 = scalar_lea.vmem %s17, %s774
      %p776 = pneg %p499
      %p777 = pneg %p496
      %p778 = pneg %p525
      %p779 = pneg %p522
      %s780 = smul.u32 2, %s33
      %p781 = scmp.lt.s32.totalorder %s780, 1
      %s782 = scalar_select %p781, %s780, 1
      %s783 = smul.addr %s782, 8
      %s784 = scalar_lea.vmem %s18, %s783
      %s785 = smul.u32 2, %s33
      %p786 = scmp.lt.s32.totalorder %s785, 1
      %s787 = scalar_select %p786, %s785, 1
      %s788 = smul.addr %s787, 8
      %s789 = scalar_lea.vmem %s0, %s788
      %s790 = smul.u32 2, %s33
      %p791 = scmp.lt.s32.totalorder %s34, 1
      %s792 = scalar_select %p791, %s34, 1
      %s793 = scalar_lea.vmem %s2, %s792
      %p794 = scmp.lt.s32.totalorder %s34, 1
      %s795 = scalar_select %p794, %s34, 1
      %s796 = scalar_lea.vmem %s3, %s795
      %p797 = scmp.lt.s32.totalorder %s34, 1
      %s798 = scalar_select %p797, %s34, 1
      %s799 = smul.addr %s798, 16
      %s800 = smul.addr %s799, 4
      %s801 = scalar_lea.vmem %s4, %s800
      %p802 = scmp.lt.s32.totalorder %s34, 1
      %s803 = scalar_select %p802, %s34, 1
      %s804 = smul.addr %s803, 4
      %s805 = scalar_lea.vmem %s5, %s804
      %p806 = scmp.lt.s32.totalorder %s34, 1
      %s807 = scalar_select %p806, %s34, 1
      %s808 = smul.addr %s807, 16
      %s809 = smul.addr %s808, 4
      %s810 = scalar_lea.vmem %s6, %s809
      %p811 = scmp.lt.s32.totalorder %s34, 1
      %s812 = scalar_select %p811, %s34, 1
      %s813 = smul.addr %s812, 4
      %s814 = scalar_lea.vmem %s7, %s813
      %p815 = scmp.lt.s32.totalorder %s34, 1
      %s816 = scalar_select %p815, %s34, 1
      %s817 = smul.addr %s816, 16
      %s818 = smul.addr %s817, 4
      %s819 = scalar_lea.vmem %s8, %s818
      %p820 = scmp.lt.s32.totalorder %s34, 1
      %s821 = scalar_select %p820, %s34, 1
      %s822 = smul.addr %s821, 4
      %s823 = scalar_lea.vmem %s9, %s822
      %p824 = scmp.lt.s32.totalorder %s34, 1
      %s825 = scalar_select %p824, %s34, 1
      %s826 = smul.addr %s825, 4
      %s827 = smul.addr %s826, 4
      %s828 = scalar_lea.vmem %s10, %s827
      %p829 = scmp.lt.s32.totalorder %s34, 1
      %s830 = scalar_select %p829, %s34, 1
      %s831 = scalar_lea.vmem %s11, %s830
      %p832 = scmp.lt.s32.totalorder %s34, 1
      %s833 = scalar_select %p832, %s34, 1
      %s834 = scalar_lea.vmem %s12, %s833
      %p835 = scmp.lt.s32.totalorder %s34, 1
      %s836 = scalar_select %p835, %s34, 1
      %s837 = scalar_lea.vmem %s13, %s836
      %p838 = scmp.lt.s32.totalorder %s34, 1
      %s839 = scalar_select %p838, %s34, 1
      %s840 = smul.addr %s839, 4
      %s841 = smul.addr %s840, 4
      %s842 = scalar_lea.vmem %s14, %s841
      %p843 = scmp.lt.s32.totalorder %s34, 1
      %s844 = scalar_select %p843, %s34, 1
      %s845 = scalar_lea.vmem %s15, %s844
      %p846 = scmp.lt.s32.totalorder %s34, 1
      %s847 = scalar_select %p846, %s34, 1
      %s848 = smul.addr %s847, 16
      %s849 = smul.addr %s848, 4
      %s850 = scalar_lea.vmem %s16, %s849
      %p851 = scmp.lt.s32.totalorder %s34, 1
      %s852 = scalar_select %p851, %s34, 1
      %s853 = scalar_lea.vmem %s17, %s852
      %s854 = smul.u32 2, %s33
      %p855 = scmp.lt.s32.totalorder %s854, 1
      %s856 = scalar_select %p855, %s854, 1
      %s857 = smul.addr %s856, 8
      %s858 = scalar_lea.vmem %s18, %s857
      %s859 = smul.u32 2, %s33
      %p861 = scmp.eq.s32.totalorder %s34, 0
      // Predicated region
      $region93: #{cross_cond_gpt_head_forward.2} parent=91 // pred_check
        %p862 = pneg %p861
      $region94: #{cross_cond_gpt_head_forward.2} parent=91 // pred_check_branch
        %864 = sbr.rel (%p862) target = $region96
      $region95: #{cross_cond_gpt_head_forward.2} parent=91 // pred_region
        %v865 = vld [vmem:[%s789] sm:$0xff]
        %v866 = vld [vmem:[%s789 + $0x8] sm:$0xff]
        %vm867 = vcmask 261120
        %868 = vst.msk [vmem:[#allocation2] sm:$0xff] %vm867, %v865
        %869 = vst.msk [vmem:[#allocation2 + $0x8] sm:$0xff] %vm867, %v866
      $region96: #{cross_cond_gpt_head_forward.2} parent=91 // pred_fallthru
        _
      %v870 = vld [vmem:[#allocation2] sm:$0xff]
      %v871 = vld [vmem:[#allocation2 + $0x8] sm:$0xff]
      %v872 = vld [vmem:[%s793] sm:$0x1]
      %v873 = vld [vmem:[%s796] sm:$0x1]
      %vm874 = vcmask 261120
      %v875 = vsel %vm874, %v870, 0.0
      %876 = vadd.xlane.f32.xlu0 %v875
      %v877 = vpop.xlane.xlu0 %876
      %v878 = vsel %vm874, %v871, 0.0
      %879 = vadd.xlane.f32.xlu0 %v878
      %v880 = vpop.xlane.xlu0 %879
      %v881 = vrcp.pop 32.0
      %v882 = vmul.f32 %v877, %v881
      %v883 = vmul.f32 %v880, %v881
      %v884 = vsub.f32 %v870, %v882
      %v885 = vsub.f32 %v871, %v883
      %v886 = vmul.f32 %v884, %v884
      %v887 = vmul.f32 %v885, %v885
      %v888 = vsel %vm874, %v886, 0.0
      %889 = vadd.xlane.f32.xlu0 %v888
      %v890 = vpop.xlane.xlu0 %889
      %v891 = vsel %vm874, %v887, 0.0
      %892 = vadd.xlane.f32.xlu0 %v891
      %v893 = vpop.xlane.xlu0 %892
      %v894 = vmul.f32 %v890, %v881
      %v895 = vmul.f32 %v893, %v881
      %v896 = vadd.f32 %v894, 1e-05
      %v897 = vadd.f32 %v895, 1e-05
      %v898 = vrsqrt.pop %v896
      %v899 = vrsqrt.pop %v897
      %v900 = vmul.f32 %v884, %v898
      %v901 = vmul.f32 %v885, %v899
      %v903 = vlaneseq
      %v904 = vshrl.u32 %v903, 7
      %v905 = vsub.s32 0, %v904
      %v906 = vrot.slane %v872, %v905
      %v908 = vmul.f32 %v900, %v906
      %v909 = vmul.f32 %v901, %v906
      %v911 = vlaneseq
      %v912 = vshrl.u32 %v911, 7
      %v913 = vsub.s32 0, %v912
      %v914 = vrot.slane %v873, %v913
      %v916 = vadd.f32 %v908, %v914
      %v917 = vadd.f32 %v909, %v914
      %v918 = vpack.c.bf16 %v917, %v916
      %v919 = vld [vmem:[%s1] sm:$0xff]
      %v920 = vld [vmem:[%s801] sm:$0xf]
      %v921 = vld [vmem:[%s801 + $0x4] sm:$0xf]
      %v922 = vld [vmem:[%s801 + $0x8] sm:$0xf]
      %v923 = vld [vmem:[%s801 + $0xc] sm:$0xf]
      %v924 = vld [vmem:[%s805] sm:$0x1]
      %v926 = vlaneseq
      %v927 = vshrl.u32 %v926, 7
      %v928 = vsub.s32 0, %v927
      %v929 = vrot.slane %v924, %v928
      %v935 = vunpack.c.l.b16 %v920
      %v936 = vunpack.c.l.b16 %v921
      %v937 = vunpack.c.l.b16 %v922
      %v938 = vunpack.c.l.b16 %v923
      %v939 = vpack.c.b16 %v936, %v935
      %v940 = vpack.c.b16 %v938, %v937
      %v944 = vsel %vm874, %v918, 0
      %946 = vmatprep.subr.bf16.mxu0 0
      %947 = vmatpush1.bf16.msra.mxu0 %v939
      %948 = vmatprep.subr.bf16.mxu0 0
      %949 = vmatpush1.bf16.msra.mxu0 %v940
      %950 = vmatprep.subr.bf16.mxu0 0
      %951 = vmatpush1.bf16.msra.mxu0 0
      %952 = vmatprep.subr.bf16.mxu0 0
      %953 = vmatpush1.bf16.msra.mxu0 0
      %954 = vmatprep.subr.bf16.mxu0 0
      %955 = vmatpush1.bf16.msra.mxu0 0
      %956 = vmatprep.subr.bf16.mxu0 0
      %957 = vmatpush1.bf16.msra.mxu0 0
      %958 = vmatprep.subr.bf16.mxu0 0
      %959 = vmatpush1.bf16.msra.mxu0 0
      %960 = vmatprep.subr.bf16.mxu0 0
      %961 = vmatpush1.bf16.msra.mxu0 0
      %962 = vmatprep.subr.bf16.mxu0 0
      %963 = vmatpush1.bf16.msra.mxu0 0
      %964 = vmatprep.subr.bf16.mxu0 0
      %965 = vmatpush1.bf16.msra.mxu0 0
      %966 = vmatprep.subr.bf16.mxu0 0
      %967 = vmatpush1.bf16.msra.mxu0 0
      %968 = vmatprep.subr.bf16.mxu0 0
      %969 = vmatpush1.bf16.msra.mxu0 0
      %970 = vmatprep.subr.bf16.mxu0 0
      %971 = vmatpush1.bf16.msra.mxu0 0
      %972 = vmatprep.subr.bf16.mxu0 0
      %973 = vmatpush1.bf16.msra.mxu0 0
      %974 = vmatprep.subr.bf16.mxu0 0
      %975 = vmatpush1.bf16.msra.mxu0 0
      %976 = vmatprep.subr.bf16.mxu0 0
      %977 = vmatpush1.bf16.msra.mxu0 0
      %978 = vmatprep.mubr.bf16.mxu0 0
      %979 = vmatmul.mubr.bf16.gmra.mrb[0].mxu0 %v944
      %v980 = vpop.f32.mrb[0].mxu0
      %v981 = vadd.f32 %v929, %v980
      %v982 = vpop.f32.mrb[0].mxu0
      %v983 = vpop.f32.mrb[0].mxu0
      %v984 = vadd.f32 %v929, %v983
      %v985 = vpop.f32.mrb[0].mxu0
      %986 = vdwg.mxu0
      %v987 = vld [vmem:[%s810] sm:$0xf]
      %v988 = vld [vmem:[%s810 + $0x4] sm:$0xf]
      %v989 = vld [vmem:[%s810 + $0x8] sm:$0xf]
      %v990 = vld [vmem:[%s810 + $0xc] sm:$0xf]
      %v991 = vld [vmem:[%s814] sm:$0x1]
      %v993 = vlaneseq
      %v994 = vshrl.u32 %v993, 7
      %v995 = vsub.s32 0, %v994
      %v996 = vrot.slane %v991, %v995
      %v1002 = vunpack.c.l.b16 %v987
      %v1003 = vunpack.c.l.b16 %v988
      %v1004 = vunpack.c.l.b16 %v989
      %v1005 = vunpack.c.l.b16 %v990
      %v1006 = vpack.c.b16 %v1003, %v1002
      %v1007 = vpack.c.b16 %v1005, %v1004
      %1010 = vmatprep.subr.bf16.mxu0 0
      %1011 = vmatpush1.bf16.msra.mxu0 %v1006
      %1012 = vmatprep.subr.bf16.mxu0 0
      %1013 = vmatpush1.bf16.msra.mxu0 %v1007
      %1014 = vmatprep.subr.bf16.mxu0 0
      %1015 = vmatpush1.bf16.msra.mxu0 0
      %1016 = vmatprep.subr.bf16.mxu0 0
      %1017 = vmatpush1.bf16.msra.mxu0 0
      %1018 = vmatprep.subr.bf16.mxu0 0
      %1019 = vmatpush1.bf16.msra.mxu0 0
      %1020 = vmatprep.subr.bf16.mxu0 0
      %1021 = vmatpush1.bf16.msra.mxu0 0
      %1022 = vmatprep.subr.bf16.mxu0 0
      %1023 = vmatpush1.bf16.msra.mxu0 0
      %1024 = vmatprep.subr.bf16.mxu0 0
      %1025 = vmatpush1.bf16.msra.mxu0 0
      %1026 = vmatprep.subr.bf16.mxu0 0
      %1027 = vmatpush1.bf16.msra.mxu0 0
      %1028 = vmatprep.subr.bf16.mxu0 0
      %1029 = vmatpush1.bf16.msra.mxu0 0
      %1030 = vmatprep.subr.bf16.mxu0 0
      %1031 = vmatpush1.bf16.msra.mxu0 0
      %1032 = vmatprep.subr.bf16.mxu0 0
      %1033 = vmatpush1.bf16.msra.mxu0 0
      %1034 = vmatprep.subr.bf16.mxu0 0
      %1035 = vmatpush1.bf16.msra.mxu0 0
      %1036 = vmatprep.subr.bf16.mxu0 0
      %1037 = vmatpush1.bf16.msra.mxu0 0
      %1038 = vmatprep.subr.bf16.mxu0 0
      %1039 = vmatpush1.bf16.msra.mxu0 0
      %1040 = vmatprep.subr.bf16.mxu0 0
      %1041 = vmatpush1.bf16.msra.mxu0 0
      %1042 = vmatprep.mubr.bf16.mxu0 0
      %1043 = vmatmul.mubr.bf16.gmra.mrb[0].mxu0 %v944
      %v1044 = vpop.f32.mrb[0].mxu0
      %v1045 = vadd.f32 %v996, %v1044
      %v1046 = vpop.f32.mrb[0].mxu0
      %v1047 = vpop.f32.mrb[0].mxu0
      %v1048 = vadd.f32 %v996, %v1047
      %v1049 = vpop.f32.mrb[0].mxu0
      %1050 = vdwg.mxu0
      %v1051 = vld [vmem:[%s819] sm:$0xf]
      %v1052 = vld [vmem:[%s819 + $0x4] sm:$0xf]
      %v1053 = vld [vmem:[%s819 + $0x8] sm:$0xf]
      %v1054 = vld [vmem:[%s819 + $0xc] sm:$0xf]
      %v1055 = vld [vmem:[%s823] sm:$0x1]
      %v1057 = vlaneseq
      %v1058 = vshrl.u32 %v1057, 7
      %v1059 = vsub.s32 0, %v1058
      %v1060 = vrot.slane %v1055, %v1059
      %v1066 = vunpack.c.l.b16 %v1051
      %v1067 = vunpack.c.l.b16 %v1052
      %v1068 = vunpack.c.l.b16 %v1053
      %v1069 = vunpack.c.l.b16 %v1054
      %v1070 = vpack.c.b16 %v1067, %v1066
      %v1071 = vpack.c.b16 %v1069, %v1068
      %1074 = vmatprep.subr.bf16.mxu0 0
      %1075 = vmatpush1.bf16.msra.mxu0 %v1070
      %1076 = vmatprep.subr.bf16.mxu0 0
      %1077 = vmatpush1.bf16.msra.mxu0 %v1071
      %1078 = vmatprep.subr.bf16.mxu0 0
      %1079 = vmatpush1.bf16.msra.mxu0 0
      %1080 = vmatprep.subr.bf16.mxu0 0
      %1081 = vmatpush1.bf16.msra.mxu0 0
      %1082 = vmatprep.subr.bf16.mxu0 0
      %1083 = vmatpush1.bf16.msra.mxu0 0
      %1084 = vmatprep.subr.bf16.mxu0 0
      %1085 = vmatpush1.bf16.msra.mxu0 0
      %1086 = vmatprep.subr.bf16.mxu0 0
      %1087 = vmatpush1.bf16.msra.mxu0 0
      %1088 = vmatprep.subr.bf16.mxu0 0
      %1089 = vmatpush1.bf16.msra.mxu0 0
      %1090 = vmatprep.subr.bf16.mxu0 0
      %1091 = vmatpush1.bf16.msra.mxu0 0
      %1092 = vmatprep.subr.bf16.mxu0 0
      %1093 = vmatpush1.bf16.msra.mxu0 0
      %1094 = vmatprep.subr.bf16.mxu0 0
      %1095 = vmatpush1.bf16.msra.mxu0 0
      %1096 = vmatprep.subr.bf16.mxu0 0
      %1097 = vmatpush1.bf16.msra.mxu0 0
      %1098 = vmatprep.subr.bf16.mxu0 0
      %1099 = vmatpush1.bf16.msra.mxu0 0
      %1100 = vmatprep.subr.bf16.mxu0 0
      %1101 = vmatpush1.bf16.msra.mxu0 0
      %1102 = vmatprep.subr.bf16.mxu0 0
      %1103 = vmatpush1.bf16.msra.mxu0 0
      %1104 = vmatprep.subr.bf16.mxu0 0
      %1105 = vmatpush1.bf16.msra.mxu0 0
      %1106 = vmatprep.mubr.bf16.mxu0 0
      %1107 = vmatmul.mubr.bf16.gmra.mrb[0].mxu0 %v944
      %v1108 = vpop.f32.mrb[0].mxu0
      %v1109 = vadd.f32 %v1060, %v1108
      %v1110 = vpop.f32.mrb[0].mxu0
      %v1111 = vpop.f32.mrb[0].mxu0
      %v1112 = vadd.f32 %v1060, %v1111
      %v1113 = vpop.f32.mrb[0].mxu0
      %1114 = vdwg.mxu0
      %v1115 = vpack.c.bf16 %v981, %v981
      %v1116 = vpack.c.bf16 %v984, %v984
      %v1117 = vpack.c.bf16 %v1045, %v1045
      %v1118 = vpack.c.bf16 %v1048, %v1048
      %v1119 = vpack.c.bf16 %v1109, %v1109
      %v1120 = vpack.c.bf16 %v1112, %v1112
      %vm1121 = vcmask 64512
      %v1123 = vsel %vm1121, %v1115, 0
      %v1126 = vsel %vm1121, %v1117, 0
      %1128 = vmatprep.subr.bf16.mxu0 0
      %1129 = vmatpush1.bf16.xpose.msra.mxu0 %v1126
      %1130 = vmatprep.subr.bf16.mxu0 0
      %1131 = vmatpush1.bf16.xpose.msra.mxu0 0
      %1132 = vmatprep.subr.bf16.mxu0 0
      %1133 = vmatpush1.bf16.xpose.msra.mxu0 0
      %1134 = vmatprep.subr.bf16.mxu0 0
      %1135 = vmatpush1.bf16.xpose.msra.mxu0 0
      %1136 = vmatprep.subr.bf16.mxu0 0
      %1137 = vmatpush1.bf16.xpose.msra.mxu0 0
      %1138 = vmatprep.subr.bf16.mxu0 0
      %1139 = vmatpush1.bf16.xpose.msra.mxu0 0
      %1140 = vmatprep.subr.bf16.mxu0 0
      %1141 = vmatpush1.bf16.xpose.msra.mxu0 0
      %1142 = vmatprep.subr.bf16.mxu0 0
      %1143 = vmatpush1.bf16.xpose.msra.mxu0 0
      %1144 = vmatprep.subr.bf16.mxu0 0
      %1145 = vmatpush1.bf16.xpose.msra.mxu0 0
      %1146 = vmatprep.subr.bf16.mxu0 0
      %1147 = vmatpush1.bf16.xpose.msra.mxu0 0
      %1148 = vmatprep.subr.bf16.mxu0 0
      %1149 = vmatpush1.bf16.xpose.msra.mxu0 0
      %1150 = vmatprep.subr.bf16.mxu0 0
      %1151 = vmatpush1.bf16.xpose.msra.mxu0 0
      %1152 = vmatprep.subr.bf16.mxu0 0
      %1153 = vmatpush1.bf16.xpose.msra.mxu0 0
      %1154 = vmatprep.subr.bf16.mxu0 0
      %1155 = vmatpush1.bf16.xpose.msra.mxu0 0
      %1156 = vmatprep.subr.bf16.mxu0 0
      %1157 = vmatpush1.bf16.xpose.msra.mxu0 0
      %1158 = vmatprep.subr.bf16.mxu0 0
      %1159 = vmatpush1.bf16.xpose.msra.mxu0 0
      %1160 = vmatprep.mubr.bf16.mxu0 0
      %1161 = vmatmul.mubr.bf16.gmra.mrb[0].mxu0 %v1123
      %v1162 = vpop.f32.mrb[0].mxu0
      %v1163 = vadd.f32 %v919, %v1162
      %v1164 = vpop.f32.mrb[0].mxu0
      %v1165 = vpop.f32.mrb[0].mxu0
      %v1166 = vpop.f32.mrb[0].mxu0
      %1167 = vdwg.mxu0
      %v1169 = vsel %vm1121, %v1116, 0
      %v1172 = vsel %vm1121, %v1118, 0
      %1174 = vmatprep.subr.bf16.mxu0 0
      %1175 = vmatpush1.bf16.xpose.msra.mxu0 %v1172
      %1176 = vmatprep.subr.bf16.mxu0 0
      %1177 = vmatpush1.bf16.xpose.msra.mxu0 0
      %1178 = vmatprep.subr.bf16.mxu0 0
      %1179 = vmatpush1.bf16.xpose.msra.mxu0 0
      %1180 = vmatprep.subr.bf16.mxu0 0
      %1181 = vmatpush1.bf16.xpose.msra.mxu0 0
      %1182 = vmatprep.subr.bf16.mxu0 0
      %1183 = vmatpush1.bf16.xpose.msra.mxu0 0
      %1184 = vmatprep.subr.bf16.mxu0 0
      %1185 = vmatpush1.bf16.xpose.msra.mxu0 0
      %1186 = vmatprep.subr.bf16.mxu0 0
      %1187 = vmatpush1.bf16.xpose.msra.mxu0 0
      %1188 = vmatprep.subr.bf16.mxu0 0
      %1189 = vmatpush1.bf16.xpose.msra.mxu0 0
      %1190 = vmatprep.subr.bf16.mxu0 0
      %1191 = vmatpush1.bf16.xpose.msra.mxu0 0
      %1192 = vmatprep.subr.bf16.mxu0 0
      %1193 = vmatpush1.bf16.xpose.msra.mxu0 0
      %1194 = vmatprep.subr.bf16.mxu0 0
      %1195 = vmatpush1.bf16.xpose.msra.mxu0 0
      %1196 = vmatprep.subr.bf16.mxu0 0
      %1197 = vmatpush1.bf16.xpose.msra.mxu0 0
      %1198 = vmatprep.subr.bf16.mxu0 0
      %1199 = vmatpush1.bf16.xpose.msra.mxu0 0
      %1200 = vmatprep.subr.bf16.mxu0 0
      %1201 = vmatpush1.bf16.xpose.msra.mxu0 0
      %1202 = vmatprep.subr.bf16.mxu0 0
      %1203 = vmatpush1.bf16.xpose.msra.mxu0 0
      %1204 = vmatprep.subr.bf16.mxu0 0
      %1205 = vmatpush1.bf16.xpose.msra.mxu0 0
      %1206 = vmatprep.mubr.bf16.mxu0 0
      %1207 = vmatmul.mubr.bf16.gmra.mrb[0].mxu0 %v1169
      %v1208 = vpop.f32.mrb[0].mxu0
      %v1209 = vadd.f32 %v919, %v1208
      %v1210 = vpop.f32.mrb[0].mxu0
      %v1211 = vpop.f32.mrb[0].mxu0
      %v1212 = vpop.f32.mrb[0].mxu0
      %1213 = vdwg.mxu0
      %v1214 = vsel %vm1121, %v1163, -inf
      %1215 = vmax.xlane.f32.xlu0 %v1214
      %v1216 = vpop.xlane.xlu0 %1215
      %v1217 = vsel %vm1121, %v1209, -inf
      %1218 = vmax.xlane.f32.xlu0 %v1217
      %v1219 = vpop.xlane.xlu0 %1218
      %v1220 = vsub.f32 %v1163, %v1216
      %v1221 = vsub.f32 %v1209, %v1219
      %v1222 = vmul.f32 %v1220, 1.442695
      %v1223 = vpow.pop %v1222
      %v1224 = vmul.f32 %v1221, 1.442695
      %v1225 = vpow.pop %v1224
      %v1226 = vsel %vm1121, %v1223, 0.0
      %1227 = vadd.xlane.f32.xlu0 %v1226
      %v1228 = vpop.xlane.xlu0 %1227
      %v1229 = vsel %vm1121, %v1225, 0.0
      %1230 = vadd.xlane.f32.xlu0 %v1229
      %v1231 = vpop.xlane.xlu0 %1230
      %v1232 = vrcp.pop %v1228
      %v1233 = vmul.f32 %v1223, %v1232
      %v1234 = vrcp.pop %v1231
      %v1235 = vmul.f32 %v1225, %v1234
      %v1236 = vpack.c.bf16 %v1233, %v1233
      %v1237 = vpack.c.bf16 %v1235, %v1235
      %v1239 = vsel %vm1121, %v1236, 0
      %vm1241 = vcmask 1043456
      %v1243 = vsel %vm1241, %v1119, 0
      %1245 = vmatprep.subr.bf16.mxu0 0
      %1246 = vmatpush1.bf16.msra.mxu0 %v1243
      %1247 = vmatprep.subr.bf16.mxu0 0
      %1248 = vmatpush1.bf16.msra.mxu0 0
      %1249 = vmatprep.subr.bf16.mxu0 0
      %1250 = vmatpush1.bf16.msra.mxu0 0
      %1251 = vmatprep.subr.bf16.mxu0 0
      %1252 = vmatpush1.bf16.msra.mxu0 0
      %1253 = vmatprep.subr.bf16.mxu0 0
      %1254 = vmatpush1.bf16.msra.mxu0 0
      %1255 = vmatprep.subr.bf16.mxu0 0
      %1256 = vmatpush1.bf16.msra.mxu0 0
      %1257 = vmatprep.subr.bf16.mxu0 0
      %1258 = vmatpush1.bf16.msra.mxu0 0
      %1259 = vmatprep.subr.bf16.mxu0 0
      %1260 = vmatpush1.bf16.msra.mxu0 0
      %1261 = vmatprep.subr.bf16.mxu0 0
      %1262 = vmatpush1.bf16.msra.mxu0 0
      %1263 = vmatprep.subr.bf16.mxu0 0
      %1264 = vmatpush1.bf16.msra.mxu0 0
      %1265 = vmatprep.subr.bf16.mxu0 0
      %1266 = vmatpush1.bf16.msra.mxu0 0
      %1267 = vmatprep.subr.bf16.mxu0 0
      %1268 = vmatpush1.bf16.msra.mxu0 0
      %1269 = vmatprep.subr.bf16.mxu0 0
      %1270 = vmatpush1.bf16.msra.mxu0 0
      %1271 = vmatprep.subr.bf16.mxu0 0
      %1272 = vmatpush1.bf16.msra.mxu0 0
      %1273 = vmatprep.subr.bf16.mxu0 0
      %1274 = vmatpush1.bf16.msra.mxu0 0
      %1275 = vmatprep.subr.bf16.mxu0 0
      %1276 = vmatpush1.bf16.msra.mxu0 0
      %1277 = vmatprep.mubr.bf16.mxu0 0
      %1278 = vmatmul.mubr.bf16.gmra.mrb[0].mxu0 %v1239
      %v1279 = vpop.f32.mrb[0].mxu0
      %v1280 = vadd.f32 0.0, %v1279
      %v1281 = vpop.f32.mrb[0].mxu0
      %v1282 = vpop.f32.mrb[0].mxu0
      %v1283 = vpop.f32.mrb[0].mxu0
      %1284 = vdwg.mxu0
      %v1286 = vsel %vm1121, %v1237, 0
      %v1289 = vsel %vm1241, %v1120, 0
      %1291 = vmatprep.subr.bf16.mxu0 0
      %1292 = vmatpush1.bf16.msra.mxu0 %v1289
      %1293 = vmatprep.subr.bf16.mxu0 0
      %1294 = vmatpush1.bf16.msra.mxu0 0
      %1295 = vmatprep.subr.bf16.mxu0 0
      %1296 = vmatpush1.bf16.msra.mxu0 0
      %1297 = vmatprep.subr.bf16.mxu0 0
      %1298 = vmatpush1.bf16.msra.mxu0 0
      %1299 = vmatprep.subr.bf16.mxu0 0
      %1300 = vmatpush1.bf16.msra.mxu0 0
      %1301 = vmatprep.subr.bf16.mxu0 0
      %1302 = vmatpush1.bf16.msra.mxu0 0
      %1303 = vmatprep.subr.bf16.mxu0 0
      %1304 = vmatpush1.bf16.msra.mxu0 0
      %1305 = vmatprep.subr.bf16.mxu0 0
      %1306 = vmatpush1.bf16.msra.mxu0 0
      %1307 = vmatprep.subr.bf16.mxu0 0
      %1308 = vmatpush1.bf16.msra.mxu0 0
      %1309 = vmatprep.subr.bf16.mxu0 0
      %1310 = vmatpush1.bf16.msra.mxu0 0
      %1311 = vmatprep.subr.bf16.mxu0 0
      %1312 = vmatpush1.bf16.msra.mxu0 0
      %1313 = vmatprep.subr.bf16.mxu0 0
      %1314 = vmatpush1.bf16.msra.mxu0 0
      %1315 = vmatprep.subr.bf16.mxu0 0
      %1316 = vmatpush1.bf16.msra.mxu0 0
      %1317 = vmatprep.subr.bf16.mxu0 0
      %1318 = vmatpush1.bf16.msra.mxu0 0
      %1319 = vmatprep.subr.bf16.mxu0 0
      %1320 = vmatpush1.bf16.msra.mxu0 0
      %1321 = vmatprep.subr.bf16.mxu0 0
      %1322 = vmatpush1.bf16.msra.mxu0 0
      %1323 = vmatprep.mubr.bf16.mxu0 0
      %1324 = vmatmul.mubr.bf16.gmra.mrb[0].mxu0 %v1286
      %v1325 = vpop.f32.mrb[0].mxu0
      %v1326 = vadd.f32 0.0, %v1325
      %v1327 = vpop.f32.mrb[0].mxu0
      %v1328 = vpop.f32.mrb[0].mxu0
      %v1329 = vpop.f32.mrb[0].mxu0
      %1330 = vdwg.mxu0
      %v1331 = vpack.c.bf16 %v1326, %v1280
      %v1332 = vld [vmem:[%s828] sm:$0xf]
      %s1333 = scalar_lea.vmem %s801, 16
      %v1334 = vld [vmem:[%s1333] sm:$0xf]
      %v1335 = vld [vmem:[%s1333 + $0x4] sm:$0xf]
      %v1336 = vld [vmem:[%s1333 + $0x8] sm:$0xf]
      %v1337 = vld [vmem:[%s1333 + $0xc] sm:$0xf]
      %s1338 = scalar_lea.vmem %s805, 1
      %v1339 = vld [vmem:[%s1338] sm:$0x1]
      %v1341 = vlaneseq
      %v1342 = vshrl.u32 %v1341, 7
      %v1343 = vsub.s32 0, %v1342
      %v1344 = vrot.slane %v1339, %v1343
      %v1350 = vunpack.c.l.b16 %v1334
      %v1351 = vunpack.c.l.b16 %v1335
      %v1352 = vunpack.c.l.b16 %v1336
      %v1353 = vunpack.c.l.b16 %v1337
      %v1354 = vpack.c.b16 %v1351, %v1350
      %v1355 = vpack.c.b16 %v1353, %v1352
      %1358 = vmatprep.subr.bf16.mxu0 0
      %1359 = vmatpush1.bf16.msra.mxu0 %v1354
      %1360 = vmatprep.subr.bf16.mxu0 0
      %1361 = vmatpush1.bf16.msra.mxu0 %v1355
      %1362 = vmatprep.subr.bf16.mxu0 0
      %1363 = vmatpush1.bf16.msra.mxu0 0
      %1364 = vmatprep.subr.bf16.mxu0 0
      %1365 = vmatpush1.bf16.msra.mxu0 0
      %1366 = vmatprep.subr.bf16.mxu0 0
      %1367 = vmatpush1.bf16.msra.mxu0 0
      %1368 = vmatprep.subr.bf16.mxu0 0
      %1369 = vmatpush1.bf16.msra.mxu0 0
      %1370 = vmatprep.subr.bf16.mxu0 0
      %1371 = vmatpush1.bf16.msra.mxu0 0
      %1372 = vmatprep.subr.bf16.mxu0 0
      %1373 = vmatpush1.bf16.msra.mxu0 0
      %1374 = vmatprep.subr.bf16.mxu0 0
      %1375 = vmatpush1.bf16.msra.mxu0 0
      %1376 = vmatprep.subr.bf16.mxu0 0
      %1377 = vmatpush1.bf16.msra.mxu0 0
      %1378 = vmatprep.subr.bf16.mxu0 0
      %1379 = vmatpush1.bf16.msra.mxu0 0
      %1380 = vmatprep.subr.bf16.mxu0 0
      %1381 = vmatpush1.bf16.msra.mxu0 0
      %1382 = vmatprep.subr.bf16.mxu0 0
      %1383 = vmatpush1.bf16.msra.mxu0 0
      %1384 = vmatprep.subr.bf16.mxu0 0
      %1385 = vmatpush1.bf16.msra.mxu0 0
      %1386 = vmatprep.subr.bf16.mxu0 0
      %1387 = vmatpush1.bf16.msra.mxu0 0
      %1388 = vmatprep.subr.bf16.mxu0 0
      %1389 = vmatpush1.bf16.msra.mxu0 0
      %1390 = vmatprep.mubr.bf16.mxu0 0
      %1391 = vmatmul.mubr.bf16.gmra.mrb[0].mxu0 %v944
      %v1392 = vpop.f32.mrb[0].mxu0
      %v1393 = vadd.f32 %v1344, %v1392
      %v1394 = vpop.f32.mrb[0].mxu0
      %v1395 = vpop.f32.mrb[0].mxu0
      %v1396 = vadd.f32 %v1344, %v1395
      %v1397 = vpop.f32.mrb[0].mxu0
      %1398 = vdwg.mxu0
      %s1399 = scalar_lea.vmem %s810, 16
      %v1400 = vld [vmem:[%s1399] sm:$0xf]
      %v1401 = vld [vmem:[%s1399 + $0x4] sm:$0xf]
      %v1402 = vld [vmem:[%s1399 + $0x8] sm:$0xf]
      %v1403 = vld [vmem:[%s1399 + $0xc] sm:$0xf]
      %s1404 = scalar_lea.vmem %s814, 1
      %v1405 = vld [vmem:[%s1404] sm:$0x1]
      %v1407 = vlaneseq
      %v1408 = vshrl.u32 %v1407, 7
      %v1409 = vsub.s32 0, %v1408
      %v1410 = vrot.slane %v1405, %v1409
      %v1416 = vunpack.c.l.b16 %v1400
      %v1417 = vunpack.c.l.b16 %v1401
      %v1418 = vunpack.c.l.b16 %v1402
      %v1419 = vunpack.c.l.b16 %v1403
      %v1420 = vpack.c.b16 %v1417, %v1416
      %v1421 = vpack.c.b16 %v1419, %v1418
      %1424 = vmatprep.subr.bf16.mxu0 0
      %1425 = vmatpush1.bf16.msra.mxu0 %v1420
      %1426 = vmatprep.subr.bf16.mxu0 0
      %1427 = vmatpush1.bf16.msra.mxu0 %v1421
      %1428 = vmatprep.subr.bf16.mxu0 0
      %1429 = vmatpush1.bf16.msra.mxu0 0
      %1430 = vmatprep.subr.bf16.mxu0 0
      %1431 = vmatpush1.bf16.msra.mxu0 0
      %1432 = vmatprep.subr.bf16.mxu0 0
      %1433 = vmatpush1.bf16.msra.mxu0 0
      %1434 = vmatprep.subr.bf16.mxu0 0
      %1435 = vmatpush1.bf16.msra.mxu0 0
      %1436 = vmatprep.subr.bf16.mxu0 0
      %1437 = vmatpush1.bf16.msra.mxu0 0
      %1438 = vmatprep.subr.bf16.mxu0 0
      %1439 = vmatpush1.bf16.msra.mxu0 0
      %1440 = vmatprep.subr.bf16.mxu0 0
      %1441 = vmatpush1.bf16.msra.mxu0 0
      %1442 = vmatprep.subr.bf16.mxu0 0
      %1443 = vmatpush1.bf16.msra.mxu0 0
      %1444 = vmatprep.subr.bf16.mxu0 0
      %1445 = vmatpush1.bf16.msra.mxu0 0
      %1446 = vmatprep.subr.bf16.mxu0 0
      %1447 = vmatpush1.bf16.msra.mxu0 0
      %1448 = vmatprep.subr.bf16.mxu0 0
      %1449 = vmatpush1.bf16.msra.mxu0 0
      %1450 = vmatprep.subr.bf16.mxu0 0
      %1451 = vmatpush1.bf16.msra.mxu0 0
      %1452 = vmatprep.subr.bf16.mxu0 0
      %1453 = vmatpush1.bf16.msra.mxu0 0
      %1454 = vmatprep.subr.bf16.mxu0 0
      %1455 = vmatpush1.bf16.msra.mxu0 0
      %1456 = vmatprep.mubr.bf16.mxu0 0
      %1457 = vmatmul.mubr.bf16.gmra.mrb[0].mxu0 %v944
      %v1458 = vpop.f32.mrb[0].mxu0
      %v1459 = vadd.f32 %v1410, %v1458
      %v1460 = vpop.f32.mrb[0].mxu0
      %v1461 = vpop.f32.mrb[0].mxu0
      %v1462 = vadd.f32 %v1410, %v1461
      %v1463 = vpop.f32.mrb[0].mxu0
      %1464 = vdwg.mxu0
      %s1465 = scalar_lea.vmem %s819, 16
      %v1466 = vld [vmem:[%s1465] sm:$0xf]
      %v1467 = vld [vmem:[%s1465 + $0x4] sm:$0xf]
      %v1468 = vld [vmem:[%s1465 + $0x8] sm:$0xf]
      %v1469 = vld [vmem:[%s1465 + $0xc] sm:$0xf]
      %s1470 = scalar_lea.vmem %s823, 1
      %v1471 = vld [vmem:[%s1470] sm:$0x1]
      %v1473 = vlaneseq
      %v1474 = vshrl.u32 %v1473, 7
      %v1475 = vsub.s32 0, %v1474
      %v1476 = vrot.slane %v1471, %v1475
      %v1482 = vunpack.c.l.b16 %v1466
      %v1483 = vunpack.c.l.b16 %v1467
      %v1484 = vunpack.c.l.b16 %v1468
      %v1485 = vunpack.c.l.b16 %v1469
      %v1486 = vpack.c.b16 %v1483, %v1482
      %v1487 = vpack.c.b16 %v1485, %v1484
      %1490 = vmatprep.subr.bf16.mxu0 0
      %1491 = vmatpush1.bf16.msra.mxu0 %v1486
      %1492 = vmatprep.subr.bf16.mxu0 0
      %1493 = vmatpush1.bf16.msra.mxu0 %v1487
      %1494 = vmatprep.subr.bf16.mxu0 0
      %1495 = vmatpush1.bf16.msra.mxu0 0
      %1496 = vmatprep.subr.bf16.mxu0 0
      %1497 = vmatpush1.bf16.msra.mxu0 0
      %1498 = vmatprep.subr.bf16.mxu0 0
      %1499 = vmatpush1.bf16.msra.mxu0 0
      %1500 = vmatprep.subr.bf16.mxu0 0
      %1501 = vmatpush1.bf16.msra.mxu0 0
      %1502 = vmatprep.subr.bf16.mxu0 0
      %1503 = vmatpush1.bf16.msra.mxu0 0
      %1504 = vmatprep.subr.bf16.mxu0 0
      %1505 = vmatpush1.bf16.msra.mxu0 0
      %1506 = vmatprep.subr.bf16.mxu0 0
      %1507 = vmatpush1.bf16.msra.mxu0 0
      %1508 = vmatprep.subr.bf16.mxu0 0
      %1509 = vmatpush1.bf16.msra.mxu0 0
      %1510 = vmatprep.subr.bf16.mxu0 0
      %1511 = vmatpush1.bf16.msra.mxu0 0
      %1512 = vmatprep.subr.bf16.mxu0 0
      %1513 = vmatpush1.bf16.msra.mxu0 0
      %1514 = vmatprep.subr.bf16.mxu0 0
      %1515 = vmatpush1.bf16.msra.mxu0 0
      %1516 = vmatprep.subr.bf16.mxu0 0
      %1517 = vmatpush1.bf16.msra.mxu0 0
      %1518 = vmatprep.subr.bf16.mxu0 0
      %1519 = vmatpush1.bf16.msra.mxu0 0
      %1520 = vmatprep.subr.bf16.mxu0 0
      %1521 = vmatpush1.bf16.msra.mxu0 0
      %1522 = vmatprep.mubr.bf16.mxu0 0
      %1523 = vmatmul.mubr.bf16.gmra.mrb[0].mxu0 %v944
      %v1524 = vpop.f32.mrb[0].mxu0
      %v1525 = vadd.f32 %v1476, %v1524
      %v1526 = vpop.f32.mrb[0].mxu0
      %v1527 = vpop.f32.mrb[0].mxu0
      %v1528 = vadd.f32 %v1476, %v1527
      %v1529 = vpop.f32.mrb[0].mxu0
      %1530 = vdwg.mxu0
      %v1531 = vpack.c.bf16 %v1393, %v1393
      %v1532 = vpack.c.bf16 %v1396, %v1396
      %v1533 = vpack.c.bf16 %v1459, %v1459
      %v1534 = vpack.c.bf16 %v1462, %v1462
      %v1535 = vpack.c.bf16 %v1525, %v1525
      %v1536 = vpack.c.bf16 %v1528, %v1528
      %v1538 = vsel %vm1121, %v1531, 0
      %v1541 = vsel %vm1121, %v1533, 0
      %1543 = vmatprep.subr.bf16.mxu0 0
      %1544 = vmatpush1.bf16.xpose.msra.mxu0 %v1541
      %1545 = vmatprep.subr.bf16.mxu0 0
      %1546 = vmatpush1.bf16.xpose.msra.mxu0 0
      %1547 = vmatprep.subr.bf16.mxu0 0
      %1548 = vmatpush1.bf16.xpose.msra.mxu0 0
      %1549 = vmatprep.subr.bf16.mxu0 0
      %1550 = vmatpush1.bf16.xpose.msra.mxu0 0
      %1551 = vmatprep.subr.bf16.mxu0 0
      %1552 = vmatpush1.bf16.xpose.msra.mxu0 0
      %1553 = vmatprep.subr.bf16.mxu0 0
      %1554 = vmatpush1.bf16.xpose.msra.mxu0 0
      %1555 = vmatprep.subr.bf16.mxu0 0
      %1556 = vmatpush1.bf16.xpose.msra.mxu0 0
      %1557 = vmatprep.subr.bf16.mxu0 0
      %1558 = vmatpush1.bf16.xpose.msra.mxu0 0
      %1559 = vmatprep.subr.bf16.mxu0 0
      %1560 = vmatpush1.bf16.xpose.msra.mxu0 0
      %1561 = vmatprep.subr.bf16.mxu0 0
      %1562 = vmatpush1.bf16.xpose.msra.mxu0 0
      %1563 = vmatprep.subr.bf16.mxu0 0
      %1564 = vmatpush1.bf16.xpose.msra.mxu0 0
      %1565 = vmatprep.subr.bf16.mxu0 0
      %1566 = vmatpush1.bf16.xpose.msra.mxu0 0
      %1567 = vmatprep.subr.bf16.mxu0 0
      %1568 = vmatpush1.bf16.xpose.msra.mxu0 0
      %1569 = vmatprep.subr.bf16.mxu0 0
      %1570 = vmatpush1.bf16.xpose.msra.mxu0 0
      %1571 = vmatprep.subr.bf16.mxu0 0
      %1572 = vmatpush1.bf16.xpose.msra.mxu0 0
      %1573 = vmatprep.subr.bf16.mxu0 0
      %1574 = vmatpush1.bf16.xpose.msra.mxu0 0
      %1575 = vmatprep.mubr.bf16.mxu0 0
      %1576 = vmatmul.mubr.bf16.gmra.mrb[0].mxu0 %v1538
      %v1577 = vpop.f32.mrb[0].mxu0
      %v1578 = vadd.f32 %v919, %v1577
      %v1579 = vpop.f32.mrb[0].mxu0
      %v1580 = vpop.f32.mrb[0].mxu0
      %v1581 = vpop.f32.mrb[0].mxu0
      %1582 = vdwg.mxu0
      %v1584 = vsel %vm1121, %v1532, 0
      %v1587 = vsel %vm1121, %v1534, 0
      %1589 = vmatprep.subr.bf16.mxu0 0
      %1590 = vmatpush1.bf16.xpose.msra.mxu0 %v1587
      %1591 = vmatprep.subr.bf16.mxu0 0
      %1592 = vmatpush1.bf16.xpose.msra.mxu0 0
      %1593 = vmatprep.subr.bf16.mxu0 0
      %1594 = vmatpush1.bf16.xpose.msra.mxu0 0
      %1595 = vmatprep.subr.bf16.mxu0 0
      %1596 = vmatpush1.bf16.xpose.msra.mxu0 0
      %1597 = vmatprep.subr.bf16.mxu0 0
      %1598 = vmatpush1.bf16.xpose.msra.mxu0 0
      %1599 = vmatprep.subr.bf16.mxu0 0
      %1600 = vmatpush1.bf16.xpose.msra.mxu0 0
      %1601 = vmatprep.subr.bf16.mxu0 0
      %1602 = vmatpush1.bf16.xpose.msra.mxu0 0
      %1603 = vmatprep.subr.bf16.mxu0 0
      %1604 = vmatpush1.bf16.xpose.msra.mxu0 0
      %1605 = vmatprep.subr.bf16.mxu0 0
      %1606 = vmatpush1.bf16.xpose.msra.mxu0 0
      %1607 = vmatprep.subr.bf16.mxu0 0
      %1608 = vmatpush1.bf16.xpose.msra.mxu0 0
      %1609 = vmatprep.subr.bf16.mxu0 0
      %1610 = vmatpush1.bf16.xpose.msra.mxu0 0
      %1611 = vmatprep.subr.bf16.mxu0 0
      %1612 = vmatpush1.bf16.xpose.msra.mxu0 0
      %1613 = vmatprep.subr.bf16.mxu0 0
      %1614 = vmatpush1.bf16.xpose.msra.mxu0 0
      %1615 = vmatprep.subr.bf16.mxu0 0
      %1616 = vmatpush1.bf16.xpose.msra.mxu0 0
      %1617 = vmatprep.subr.bf16.mxu0 0
      %1618 = vmatpush1.bf16.xpose.msra.mxu0 0
      %1619 = vmatprep.subr.bf16.mxu0 0
      %1620 = vmatpush1.bf16.xpose.msra.mxu0 0
      %1621 = vmatprep.mubr.bf16.mxu0 0
      %1622 = vmatmul.mubr.bf16.gmra.mrb[0].mxu0 %v1584
      %v1623 = vpop.f32.mrb[0].mxu0
      %v1624 = vadd.f32 %v919, %v1623
      %v1625 = vpop.f32.mrb[0].mxu0
      %v1626 = vpop.f32.mrb[0].mxu0
      %v1627 = vpop.f32.mrb[0].mxu0
      %1628 = vdwg.mxu0
      %v1629 = vsel %vm1121, %v1578, -inf
      %1630 = vmax.xlane.f32.xlu0 %v1629
      %v1631 = vpop.xlane.xlu0 %1630
      %v1632 = vsel %vm1121, %v1624, -inf
      %1633 = vmax.xlane.f32.xlu0 %v1632
      %v1634 = vpop.xlane.xlu0 %1633
      %v1635 = vsub.f32 %v1578, %v1631
      %v1636 = vsub.f32 %v1624, %v1634
      %v1637 = vmul.f32 %v1635, 1.442695
      %v1638 = vpow.pop %v1637
      %v1639 = vmul.f32 %v1636, 1.442695
      %v1640 = vpow.pop %v1639
      %v1641 = vsel %vm1121, %v1638, 0.0
      %1642 = vadd.xlane.f32.xlu0 %v1641
      %v1643 = vpop.xlane.xlu0 %1642
      %v1644 = vsel %vm1121, %v1640, 0.0
      %1645 = vadd.xlane.f32.xlu0 %v1644
      %v1646 = vpop.xlane.xlu0 %1645
      %v1647 = vrcp.pop %v1643
      %v1648 = vmul.f32 %v1638, %v1647
      %v1649 = vrcp.pop %v1646
      %v1650 = vmul.f32 %v1640, %v1649
      %v1651 = vpack.c.bf16 %v1648, %v1648
      %v1652 = vpack.c.bf16 %v1650, %v1650
      %v1654 = vsel %vm1121, %v1651, 0
      %v1657 = vsel %vm1241, %v1535, 0
      %1659 = vmatprep.subr.bf16.mxu0 0
      %1660 = vmatpush1.bf16.msra.mxu0 %v1657
      %1661 = vmatprep.subr.bf16.mxu0 0
      %1662 = vmatpush1.bf16.msra.mxu0 0
      %1663 = vmatprep.subr.bf16.mxu0 0
      %1664 = vmatpush1.bf16.msra.mxu0 0
      %1665 = vmatprep.subr.bf16.mxu0 0
      %1666 = vmatpush1.bf16.msra.mxu0 0
      %1667 = vmatprep.subr.bf16.mxu0 0
      %1668 = vmatpush1.bf16.msra.mxu0 0
      %1669 = vmatprep.subr.bf16.mxu0 0
      %1670 = vmatpush1.bf16.msra.mxu0 0
      %1671 = vmatprep.subr.bf16.mxu0 0
      %1672 = vmatpush1.bf16.msra.mxu0 0
      %1673 = vmatprep.subr.bf16.mxu0 0
      %1674 = vmatpush1.bf16.msra.mxu0 0
      %1675 = vmatprep.subr.bf16.mxu0 0
      %1676 = vmatpush1.bf16.msra.mxu0 0
      %1677 = vmatprep.subr.bf16.mxu0 0
      %1678 = vmatpush1.bf16.msra.mxu0 0
      %1679 = vmatprep.subr.bf16.mxu0 0
      %1680 = vmatpush1.bf16.msra.mxu0 0
      %1681 = vmatprep.subr.bf16.mxu0 0
      %1682 = vmatpush1.bf16.msra.mxu0 0
      %1683 = vmatprep.subr.bf16.mxu0 0
      %1684 = vmatpush1.bf16.msra.mxu0 0
      %1685 = vmatprep.subr.bf16.mxu0 0
      %1686 = vmatpush1.bf16.msra.mxu0 0
      %1687 = vmatprep.subr.bf16.mxu0 0
      %1688 = vmatpush1.bf16.msra.mxu0 0
      %1689 = vmatprep.subr.bf16.mxu0 0
      %1690 = vmatpush1.bf16.msra.mxu0 0
      %1691 = vmatprep.mubr.bf16.mxu0 0
      %1692 = vmatmul.mubr.bf16.gmra.mrb[0].mxu0 %v1654
      %v1693 = vpop.f32.mrb[0].mxu0
      %v1694 = vadd.f32 0.0, %v1693
      %v1695 = vpop.f32.mrb[0].mxu0
      %v1696 = vpop.f32.mrb[0].mxu0
      %v1697 = vpop.f32.mrb[0].mxu0
      %1698 = vdwg.mxu0
      %v1700 = vsel %vm1121, %v1652, 0
      %v1703 = vsel %vm1241, %v1536, 0
      %1705 = vmatprep.subr.bf16.mxu0 0
      %1706 = vmatpush1.bf16.msra.mxu0 %v1703
      %1707 = vmatprep.subr.bf16.mxu0 0
      %1708 = vmatpush1.bf16.msra.mxu0 0
      %1709 = vmatprep.subr.bf16.mxu0 0
      %1710 = vmatpush1.bf16.msra.mxu0 0
      %1711 = vmatprep.subr.bf16.mxu0 0
      %1712 = vmatpush1.bf16.msra.mxu0 0
      %1713 = vmatprep.subr.bf16.mxu0 0
      %1714 = vmatpush1.bf16.msra.mxu0 0
      %1715 = vmatprep.subr.bf16.mxu0 0
      %1716 = vmatpush1.bf16.msra.mxu0 0
      %1717 = vmatprep.subr.bf16.mxu0 0
      %1718 = vmatpush1.bf16.msra.mxu0 0
      %1719 = vmatprep.subr.bf16.mxu0 0
      %1720 = vmatpush1.bf16.msra.mxu0 0
      %1721 = vmatprep.subr.bf16.mxu0 0
      %1722 = vmatpush1.bf16.msra.mxu0 0
      %1723 = vmatprep.subr.bf16.mxu0 0
      %1724 = vmatpush1.bf16.msra.mxu0 0
      %1725 = vmatprep.subr.bf16.mxu0 0
      %1726 = vmatpush1.bf16.msra.mxu0 0
      %1727 = vmatprep.subr.bf16.mxu0 0
      %1728 = vmatpush1.bf16.msra.mxu0 0
      %1729 = vmatprep.subr.bf16.mxu0 0
      %1730 = vmatpush1.bf16.msra.mxu0 0
      %1731 = vmatprep.subr.bf16.mxu0 0
      %1732 = vmatpush1.bf16.msra.mxu0 0
      %1733 = vmatprep.subr.bf16.mxu0 0
      %1734 = vmatpush1.bf16.msra.mxu0 0
      %1735 = vmatprep.subr.bf16.mxu0 0
      %1736 = vmatpush1.bf16.msra.mxu0 0
      %1737 = vmatprep.mubr.bf16.mxu0 0
      %1738 = vmatmul.mubr.bf16.gmra.mrb[0].mxu0 %v1700
      %v1739 = vpop.f32.mrb[0].mxu0
      %v1740 = vadd.f32 0.0, %v1739
      %v1741 = vpop.f32.mrb[0].mxu0
      %v1742 = vpop.f32.mrb[0].mxu0
      %v1743 = vpop.f32.mrb[0].mxu0
      %1744 = vdwg.mxu0
      %v1745 = vpack.c.bf16 %v1740, %v1694
      %s1746 = scalar_lea.vmem %s828, 4
      %v1747 = vld [vmem:[%s1746] sm:$0xf]
      %v1749 = vsel %vm1121, %v1745, 0
      %v1752 = vsel %vm1241, %v1747, 0
      %1754 = vmatprep.subr.bf16.mxu0 0
      %1755 = vmatpush1.bf16.msra.mxu0 %v1752
      %1756 = vmatprep.subr.bf16.mxu0 0
      %1757 = vmatpush1.bf16.msra.mxu0 0
      %1758 = vmatprep.subr.bf16.mxu0 0
      %1759 = vmatpush1.bf16.msra.mxu0 0
      %1760 = vmatprep.subr.bf16.mxu0 0
      %1761 = vmatpush1.bf16.msra.mxu0 0
      %1762 = vmatprep.subr.bf16.mxu0 0
      %1763 = vmatpush1.bf16.msra.mxu0 0
      %1764 = vmatprep.subr.bf16.mxu0 0
      %1765 = vmatpush1.bf16.msra.mxu0 0
      %1766 = vmatprep.subr.bf16.mxu0 0
      %1767 = vmatpush1.bf16.msra.mxu0 0
      %1768 = vmatprep.subr.bf16.mxu0 0
      %1769 = vmatpush1.bf16.msra.mxu0 0
      %1770 = vmatprep.subr.bf16.mxu0 0
      %1771 = vmatpush1.bf16.msra.mxu0 0
      %1772 = vmatprep.subr.bf16.mxu0 0
      %1773 = vmatpush1.bf16.msra.mxu0 0
      %1774 = vmatprep.subr.bf16.mxu0 0
      %1775 = vmatpush1.bf16.msra.mxu0 0
      %1776 = vmatprep.subr.bf16.mxu0 0
      %1777 = vmatpush1.bf16.msra.mxu0 0
      %1778 = vmatprep.subr.bf16.mxu0 0
      %1779 = vmatpush1.bf16.msra.mxu0 0
      %1780 = vmatprep.subr.bf16.mxu0 0
      %1781 = vmatpush1.bf16.msra.mxu0 0
      %1782 = vmatprep.subr.bf16.mxu0 0
      %1783 = vmatpush1.bf16.msra.mxu0 0
      %1784 = vmatprep.subr.bf16.mxu0 0
      %1785 = vmatpush1.bf16.msra.mxu0 0
      %1786 = vmatprep.mubr.bf16.mxu0 0
      %1787 = vmatmul.mubr.bf16.gmra.mrb[0].mxu0 %v1749
      %v1788 = vpop.f32.mrb[0].mxu0
      %v1789 = vadd.f32 0.0, %v1788
      %v1790 = vpop.f32.mrb[0].mxu0
      %v1791 = vpop.f32.mrb[0].mxu0
      %v1792 = vadd.f32 0.0, %v1791
      %v1793 = vpop.f32.mrb[0].mxu0
      %1794 = vdwg.mxu0
      %v1796 = vsel %vm1121, %v1331, 0
      %v1799 = vsel %vm1241, %v1332, 0
      %1801 = vmatprep.subr.bf16.mxu0 0
      %1802 = vmatpush1.bf16.msra.mxu0 %v1799
      %1803 = vmatprep.subr.bf16.mxu0 0
      %1804 = vmatpush1.bf16.msra.mxu0 0
      %1805 = vmatprep.subr.bf16.mxu0 0
      %1806 = vmatpush1.bf16.msra.mxu0 0
      %1807 = vmatprep.subr.bf16.mxu0 0
      %1808 = vmatpush1.bf16.msra.mxu0 0
      %1809 = vmatprep.subr.bf16.mxu0 0
      %1810 = vmatpush1.bf16.msra.mxu0 0
      %1811 = vmatprep.subr.bf16.mxu0 0
      %1812 = vmatpush1.bf16.msra.mxu0 0
      %1813 = vmatprep.subr.bf16.mxu0 0
      %1814 = vmatpush1.bf16.msra.mxu0 0
      %1815 = vmatprep.subr.bf16.mxu0 0
      %1816 = vmatpush1.bf16.msra.mxu0 0
      %1817 = vmatprep.subr.bf16.mxu0 0
      %1818 = vmatpush1.bf16.msra.mxu0 0
      %1819 = vmatprep.subr.bf16.mxu0 0
      %1820 = vmatpush1.bf16.msra.mxu0 0
      %1821 = vmatprep.subr.bf16.mxu0 0
      %1822 = vmatpush1.bf16.msra.mxu0 0
      %1823 = vmatprep.subr.bf16.mxu0 0
      %1824 = vmatpush1.bf16.msra.mxu0 0
      %1825 = vmatprep.subr.bf16.mxu0 0
      %1826 = vmatpush1.bf16.msra.mxu0 0
      %1827 = vmatprep.subr.bf16.mxu0 0
      %1828 = vmatpush1.bf16.msra.mxu0 0
      %1829 = vmatprep.subr.bf16.mxu0 0
      %1830 = vmatpush1.bf16.msra.mxu0 0
      %1831 = vmatprep.subr.bf16.mxu0 0
      %1832 = vmatpush1.bf16.msra.mxu0 0
      %1833 = vmatprep.mubr.bf16.mxu0 0
      %1834 = vmatmul.mubr.bf16.gmra.mrb[0].mxu0 %v1796
      %v1835 = vpop.f32.mrb[0].mxu0
      %v1836 = vadd.f32 %v1789, %v1835
      %v1837 = vpop.f32.mrb[0].mxu0
      %v1838 = vpop.f32.mrb[0].mxu0
      %v1839 = vadd.f32 %v1792, %v1838
      %v1840 = vpop.f32.mrb[0].mxu0
      %1841 = vdwg.mxu0
      %s1842 = scalar_lea.vmem %s801, 32
      %v1843 = vld [vmem:[%s1842] sm:$0xf]
      %v1844 = vld [vmem:[%s1842 + $0x4] sm:$0xf]
      %v1845 = vld [vmem:[%s1842 + $0x8] sm:$0xf]
      %v1846 = vld [vmem:[%s1842 + $0xc] sm:$0xf]
      %s1847 = scalar_lea.vmem %s805, 2
      %v1848 = vld [vmem:[%s1847] sm:$0x1]
      %v1850 = vlaneseq
      %v1851 = vshrl.u32 %v1850, 7
      %v1852 = vsub.s32 0, %v1851
      %v1853 = vrot.slane %v1848, %v1852
      %v1859 = vunpack.c.l.b16 %v1843
      %v1860 = vunpack.c.l.b16 %v1844
      %v1861 = vunpack.c.l.b16 %v1845
      %v1862 = vunpack.c.l.b16 %v1846
      %v1863 = vpack.c.b16 %v1860, %v1859
      %v1864 = vpack.c.b16 %v1862, %v1861
      %1867 = vmatprep.subr.bf16.mxu0 0
      %1868 = vmatpush1.bf16.msra.mxu0 %v1863
      %1869 = vmatprep.subr.bf16.mxu0 0
      %1870 = vmatpush1.bf16.msra.mxu0 %v1864
      %1871 = vmatprep.subr.bf16.mxu0 0
      %1872 = vmatpush1.bf16.msra.mxu0 0
      %1873 = vmatprep.subr.bf16.mxu0 0
      %1874 = vmatpush1.bf16.msra.mxu0 0
      %1875 = vmatprep.subr.bf16.mxu0 0
      %1876 = vmatpush1.bf16.msra.mxu0 0
      %1877 = vmatprep.subr.bf16.mxu0 0
      %1878 = vmatpush1.bf16.msra.mxu0 0
      %1879 = vmatprep.subr.bf16.mxu0 0
      %1880 = vmatpush1.bf16.msra.mxu0 0
      %1881 = vmatprep.subr.bf16.mxu0 0
      %1882 = vmatpush1.bf16.msra.mxu0 0
      %1883 = vmatprep.subr.bf16.mxu0 0
      %1884 = vmatpush1.bf16.msra.mxu0 0
      %1885 = vmatprep.subr.bf16.mxu0 0
      %1886 = vmatpush1.bf16.msra.mxu0 0
      %1887 = vmatprep.subr.bf16.mxu0 0
      %1888 = vmatpush1.bf16.msra.mxu0 0
      %1889 = vmatprep.subr.bf16.mxu0 0
      %1890 = vmatpush1.bf16.msra.mxu0 0
      %1891 = vmatprep.subr.bf16.mxu0 0
      %1892 = vmatpush1.bf16.msra.mxu0 0
      %1893 = vmatprep.subr.bf16.mxu0 0
      %1894 = vmatpush1.bf16.msra.mxu0 0
      %1895 = vmatprep.subr.bf16.mxu0 0
      %1896 = vmatpush1.bf16.msra.mxu0 0
      %1897 = vmatprep.subr.bf16.mxu0 0
      %1898 = vmatpush1.bf16.msra.mxu0 0
      %1899 = vmatprep.mubr.bf16.mxu0 0
      %1900 = vmatmul.mubr.bf16.gmra.mrb[0].mxu0 %v944
      %v1901 = vpop.f32.mrb[0].mxu0
      %v1902 = vadd.f32 %v1853, %v1901
      %v1903 = vpop.f32.mrb[0].mxu0
      %v1904 = vpop.f32.mrb[0].mxu0
      %v1905 = vadd.f32 %v1853, %v1904
      %v1906 = vpop.f32.mrb[0].mxu0
      %1907 = vdwg.mxu0
      %s1908 = scalar_lea.vmem %s810, 32
      %v1909 = vld [vmem:[%s1908] sm:$0xf]
      %v1910 = vld [vmem:[%s1908 + $0x4] sm:$0xf]
      %v1911 = vld [vmem:[%s1908 + $0x8] sm:$0xf]
      %v1912 = vld [vmem:[%s1908 + $0xc] sm:$0xf]
      %s1913 = scalar_lea.vmem %s814, 2
      %v1914 = vld [vmem:[%s1913] sm:$0x1]
      %v1916 = vlaneseq
      %v1917 = vshrl.u32 %v1916, 7
      %v1918 = vsub.s32 0, %v1917
      %v1919 = vrot.slane %v1914, %v1918
      %v1925 = vunpack.c.l.b16 %v1909
      %v1926 = vunpack.c.l.b16 %v1910
      %v1927 = vunpack.c.l.b16 %v1911
      %v1928 = vunpack.c.l.b16 %v1912
      %v1929 = vpack.c.b16 %v1926, %v1925
      %v1930 = vpack.c.b16 %v1928, %v1927
      %1933 = vmatprep.subr.bf16.mxu0 0
      %1934 = vmatpush1.bf16.msra.mxu0 %v1929
      %1935 = vmatprep.subr.bf16.mxu0 0
      %1936 = vmatpush1.bf16.msra.mxu0 %v1930
      %1937 = vmatprep.subr.bf16.mxu0 0
      %1938 = vmatpush1.bf16.msra.mxu0 0
      %1939 = vmatprep.subr.bf16.mxu0 0
      %1940 = vmatpush1.bf16.msra.mxu0 0
      %1941 = vmatprep.subr.bf16.mxu0 0
      %1942 = vmatpush1.bf16.msra.mxu0 0
      %1943 = vmatprep.subr.bf16.mxu0 0
      %1944 = vmatpush1.bf16.msra.mxu0 0
      %1945 = vmatprep.subr.bf16.mxu0 0
      %1946 = vmatpush1.bf16.msra.mxu0 0
      %1947 = vmatprep.subr.bf16.mxu0 0
      %1948 = vmatpush1.bf16.msra.mxu0 0
      %1949 = vmatprep.subr.bf16.mxu0 0
      %1950 = vmatpush1.bf16.msra.mxu0 0
      %1951 = vmatprep.subr.bf16.mxu0 0
      %1952 = vmatpush1.bf16.msra.mxu0 0
      %1953 = vmatprep.subr.bf16.mxu0 0
      %1954 = vmatpush1.bf16.msra.mxu0 0
      %1955 = vmatprep.subr.bf16.mxu0 0
      %1956 = vmatpush1.bf16.msra.mxu0 0
      %1957 = vmatprep.subr.bf16.mxu0 0
      %1958 = vmatpush1.bf16.msra.mxu0 0
      %1959 = vmatprep.subr.bf16.mxu0 0
      %1960 = vmatpush1.bf16.msra.mxu0 0
      %1961 = vmatprep.subr.bf16.mxu0 0
      %1962 = vmatpush1.bf16.msra.mxu0 0
      %1963 = vmatprep.subr.bf16.mxu0 0
      %1964 = vmatpush1.bf16.msra.mxu0 0
      %1965 = vmatprep.mubr.bf16.mxu0 0
      %1966 = vmatmul.mubr.bf16.gmra.mrb[0].mxu0 %v944
      %v1967 = vpop.f32.mrb[0].mxu0
      %v1968 = vadd.f32 %v1919, %v1967
      %v1969 = vpop.f32.mrb[0].mxu0
      %v1970 = vpop.f32.mrb[0].mxu0
      %v1971 = vadd.f32 %v1919, %v1970
      %v1972 = vpop.f32.mrb[0].mxu0
      %1973 = vdwg.mxu0
      %s1974 = scalar_lea.vmem %s819, 32
      %v1975 = vld [vmem:[%s1974] sm:$0xf]
      %v1976 = vld [vmem:[%s1974 + $0x4] sm:$0xf]
      %v1977 = vld [vmem:[%s1974 + $0x8] sm:$0xf]
      %v1978 = vld [vmem:[%s1974 + $0xc] sm:$0xf]
      %s1979 = scalar_lea.vmem %s823, 2
      %v1980 = vld [vmem:[%s1979] sm:$0x1]
      %v1982 = vlaneseq
      %v1983 = vshrl.u32 %v1982, 7
      %v1984 = vsub.s32 0, %v1983
      %v1985 = vrot.slane %v1980, %v1984
      %v1991 = vunpack.c.l.b16 %v1975
      %v1992 = vunpack.c.l.b16 %v1976
      %v1993 = vunpack.c.l.b16 %v1977
      %v1994 = vunpack.c.l.b16 %v1978
      %v1995 = vpack.c.b16 %v1992, %v1991
      %v1996 = vpack.c.b16 %v1994, %v1993
      %1999 = vmatprep.subr.bf16.mxu0 0
      %2000 = vmatpush1.bf16.msra.mxu0 %v1995
      %2001 = vmatprep.subr.bf16.mxu0 0
      %2002 = vmatpush1.bf16.msra.mxu0 %v1996
      %2003 = vmatprep.subr.bf16.mxu0 0
      %2004 = vmatpush1.bf16.msra.mxu0 0
      %2005 = vmatprep.subr.bf16.mxu0 0
      %2006 = vmatpush1.bf16.msra.mxu0 0
      %2007 = vmatprep.subr.bf16.mxu0 0
      %2008 = vmatpush1.bf16.msra.mxu0 0
      %2009 = vmatprep.subr.bf16.mxu0 0
      %2010 = vmatpush1.bf16.msra.mxu0 0
      %2011 = vmatprep.subr.bf16.mxu0 0
      %2012 = vmatpush1.bf16.msra.mxu0 0
      %2013 = vmatprep.subr.bf16.mxu0 0
      %2014 = vmatpush1.bf16.msra.mxu0 0
      %2015 = vmatprep.subr.bf16.mxu0 0
      %2016 = vmatpush1.bf16.msra.mxu0 0
      %2017 = vmatprep.subr.bf16.mxu0 0
      %2018 = vmatpush1.bf16.msra.mxu0 0
      %2019 = vmatprep.subr.bf16.mxu0 0
      %2020 = vmatpush1.bf16.msra.mxu0 0
      %2021 = vmatprep.subr.bf16.mxu0 0
      %2022 = vmatpush1.bf16.msra.mxu0 0
      %2023 = vmatprep.subr.bf16.mxu0 0
      %2024 = vmatpush1.bf16.msra.mxu0 0
      %2025 = vmatprep.subr.bf16.mxu0 0
      %2026 = vmatpush1.bf16.msra.mxu0 0
      %2027 = vmatprep.subr.bf16.mxu0 0
      %2028 = vmatpush1.bf16.msra.mxu0 0
      %2029 = vmatprep.subr.bf16.mxu0 0
      %2030 = vmatpush1.bf16.msra.mxu0 0
      %2031 = vmatprep.mubr.bf16.mxu0 0
      %2032 = vmatmul.mubr.bf16.gmra.mrb[0].mxu0 %v944
      %v2033 = vpop.f32.mrb[0].mxu0
      %v2034 = vadd.f32 %v1985, %v2033
      %v2035 = vpop.f32.mrb[0].mxu0
      %v2036 = vpop.f32.mrb[0].mxu0
      %v2037 = vadd.f32 %v1985, %v2036
      %v2038 = vpop.f32.mrb[0].mxu0
      %2039 = vdwg.mxu0
      %v2040 = vpack.c.bf16 %v1902, %v1902
      %v2041 = vpack.c.bf16 %v1905, %v1905
      %v2042 = vpack.c.bf16 %v1968, %v1968
      %v2043 = vpack.c.bf16 %v1971, %v1971
      %v2044 = vpack.c.bf16 %v2034, %v2034
      %v2045 = vpack.c.bf16 %v2037, %v2037
      %v2047 = vsel %vm1121, %v2040, 0
      %v2050 = vsel %vm1121, %v2042, 0
      %2052 = vmatprep.subr.bf16.mxu0 0
      %2053 = vmatpush1.bf16.xpose.msra.mxu0 %v2050
      %2054 = vmatprep.subr.bf16.mxu0 0
      %2055 = vmatpush1.bf16.xpose.msra.mxu0 0
      %2056 = vmatprep.subr.bf16.mxu0 0
      %2057 = vmatpush1.bf16.xpose.msra.mxu0 0
      %2058 = vmatprep.subr.bf16.mxu0 0
      %2059 = vmatpush1.bf16.xpose.msra.mxu0 0
      %2060 = vmatprep.subr.bf16.mxu0 0
      %2061 = vmatpush1.bf16.xpose.msra.mxu0 0
      %2062 = vmatprep.subr.bf16.mxu0 0
      %2063 = vmatpush1.bf16.xpose.msra.mxu0 0
      %2064 = vmatprep.subr.bf16.mxu0 0
      %2065 = vmatpush1.bf16.xpose.msra.mxu0 0
      %2066 = vmatprep.subr.bf16.mxu0 0
      %2067 = vmatpush1.bf16.xpose.msra.mxu0 0
      %2068 = vmatprep.subr.bf16.mxu0 0
      %2069 = vmatpush1.bf16.xpose.msra.mxu0 0
      %2070 = vmatprep.subr.bf16.mxu0 0
      %2071 = vmatpush1.bf16.xpose.msra.mxu0 0
      %2072 = vmatprep.subr.bf16.mxu0 0
      %2073 = vmatpush1.bf16.xpose.msra.mxu0 0
      %2074 = vmatprep.subr.bf16.mxu0 0
      %2075 = vmatpush1.bf16.xpose.msra.mxu0 0
      %2076 = vmatprep.subr.bf16.mxu0 0
      %2077 = vmatpush1.bf16.xpose.msra.mxu0 0
      %2078 = vmatprep.subr.bf16.mxu0 0
      %2079 = vmatpush1.bf16.xpose.msra.mxu0 0
      %2080 = vmatprep.subr.bf16.mxu0 0
      %2081 = vmatpush1.bf16.xpose.msra.mxu0 0
      %2082 = vmatprep.subr.bf16.mxu0 0
      %2083 = vmatpush1.bf16.xpose.msra.mxu0 0
      %2084 = vmatprep.mubr.bf16.mxu0 0
      %2085 = vmatmul.mubr.bf16.gmra.mrb[0].mxu0 %v2047
      %v2086 = vpop.f32.mrb[0].mxu0
      %v2087 = vadd.f32 %v919, %v2086
      %v2088 = vpop.f32.mrb[0].mxu0
      %v2089 = vpop.f32.mrb[0].mxu0
      %v2090 = vpop.f32.mrb[0].mxu0
      %2091 = vdwg.mxu0
      %v2093 = vsel %vm1121, %v2041, 0
      %v2096 = vsel %vm1121, %v2043, 0
      %2098 = vmatprep.subr.bf16.mxu0 0
      %2099 = vmatpush1.bf16.xpose.msra.mxu0 %v2096
      %2100 = vmatprep.subr.bf16.mxu0 0
      %2101 = vmatpush1.bf16.xpose.msra.mxu0 0
      %2102 = vmatprep.subr.bf16.mxu0 0
      %2103 = vmatpush1.bf16.xpose.msra.mxu0 0
      %2104 = vmatprep.subr.bf16.mxu0 0
      %2105 = vmatpush1.bf16.xpose.msra.mxu0 0
      %2106 = vmatprep.subr.bf16.mxu0 0
      %2107 = vmatpush1.bf16.xpose.msra.mxu0 0
      %2108 = vmatprep.subr.bf16.mxu0 0
      %2109 = vmatpush1.bf16.xpose.msra.mxu0 0
      %2110 = vmatprep.subr.bf16.mxu0 0
      %2111 = vmatpush1.bf16.xpose.msra.mxu0 0
      %2112 = vmatprep.subr.bf16.mxu0 0
      %2113 = vmatpush1.bf16.xpose.msra.mxu0 0
      %2114 = vmatprep.subr.bf16.mxu0 0
      %2115 = vmatpush1.bf16.xpose.msra.mxu0 0
      %2116 = vmatprep.subr.bf16.mxu0 0
      %2117 = vmatpush1.bf16.xpose.msra.mxu0 0
      %2118 = vmatprep.subr.bf16.mxu0 0
      %2119 = vmatpush1.bf16.xpose.msra.mxu0 0
      %2120 = vmatprep.subr.bf16.mxu0 0
      %2121 = vmatpush1.bf16.xpose.msra.mxu0 0
      %2122 = vmatprep.subr.bf16.mxu0 0
      %2123 = vmatpush1.bf16.xpose.msra.mxu0 0
      %2124 = vmatprep.subr.bf16.mxu0 0
      %2125 = vmatpush1.bf16.xpose.msra.mxu0 0
      %2126 = vmatprep.subr.bf16.mxu0 0
      %2127 = vmatpush1.bf16.xpose.msra.mxu0 0
      %2128 = vmatprep.subr.bf16.mxu0 0
      %2129 = vmatpush1.bf16.xpose.msra.mxu0 0
      %2130 = vmatprep.mubr.bf16.mxu0 0
      %2131 = vmatmul.mubr.bf16.gmra.mrb[0].mxu0 %v2093
      %v2132 = vpop.f32.mrb[0].mxu0
      %v2133 = vadd.f32 %v919, %v2132
      %v2134 = vpop.f32.mrb[0].mxu0
      %v2135 = vpop.f32.mrb[0].mxu0
      %v2136 = vpop.f32.mrb[0].mxu0
      %2137 = vdwg.mxu0
      %v2138 = vsel %vm1121, %v2087, -inf
      %2139 = vmax.xlane.f32.xlu0 %v2138
      %v2140 = vpop.xlane.xlu0 %2139
      %v2141 = vsel %vm1121, %v2133, -inf
      %2142 = vmax.xlane.f32.xlu0 %v2141
      %v2143 = vpop.xlane.xlu0 %2142
      %v2144 = vsub.f32 %v2087, %v2140
      %v2145 = vsub.f32 %v2133, %v2143
      %v2146 = vmul.f32 %v2144, 1.442695
      %v2147 = vpow.pop %v2146
      %v2148 = vmul.f32 %v2145, 1.442695
      %v2149 = vpow.pop %v2148
      %v2150 = vsel %vm1121, %v2147, 0.0
      %2151 = vadd.xlane.f32.xlu0 %v2150
      %v2152 = vpop.xlane.xlu0 %2151
      %v2153 = vsel %vm1121, %v2149, 0.0
      %2154 = vadd.xlane.f32.xlu0 %v2153
      %v2155 = vpop.xlane.xlu0 %2154
      %v2156 = vrcp.pop %v2152
      %v2157 = vmul.f32 %v2147, %v2156
      %v2158 = vrcp.pop %v2155
      %v2159 = vmul.f32 %v2149, %v2158
      %v2160 = vpack.c.bf16 %v2157, %v2157
      %v2161 = vpack.c.bf16 %v2159, %v2159
      %v2163 = vsel %vm1121, %v2160, 0
      %v2166 = vsel %vm1241, %v2044, 0
      %2168 = vmatprep.subr.bf16.mxu0 0
      %2169 = vmatpush1.bf16.msra.mxu0 %v2166
      %2170 = vmatprep.subr.bf16.mxu0 0
      %2171 = vmatpush1.bf16.msra.mxu0 0
      %2172 = vmatprep.subr.bf16.mxu0 0
      %2173 = vmatpush1.bf16.msra.mxu0 0
      %2174 = vmatprep.subr.bf16.mxu0 0
      %2175 = vmatpush1.bf16.msra.mxu0 0
      %2176 = vmatprep.subr.bf16.mxu0 0
      %2177 = vmatpush1.bf16.msra.mxu0 0
      %2178 = vmatprep.subr.bf16.mxu0 0
      %2179 = vmatpush1.bf16.msra.mxu0 0
      %2180 = vmatprep.subr.bf16.mxu0 0
      %2181 = vmatpush1.bf16.msra.mxu0 0
      %2182 = vmatprep.subr.bf16.mxu0 0
      %2183 = vmatpush1.bf16.msra.mxu0 0
      %2184 = vmatprep.subr.bf16.mxu0 0
      %2185 = vmatpush1.bf16.msra.mxu0 0
      %2186 = vmatprep.subr.bf16.mxu0 0
      %2187 = vmatpush1.bf16.msra.mxu0 0
      %2188 = vmatprep.subr.bf16.mxu0 0
      %2189 = vmatpush1.bf16.msra.mxu0 0
      %2190 = vmatprep.subr.bf16.mxu0 0
      %2191 = vmatpush1.bf16.msra.mxu0 0
      %2192 = vmatprep.subr.bf16.mxu0 0
      %2193 = vmatpush1.bf16.msra.mxu0 0
      %2194 = vmatprep.subr.bf16.mxu0 0
      %2195 = vmatpush1.bf16.msra.mxu0 0
      %2196 = vmatprep.subr.bf16.mxu0 0
      %2197 = vmatpush1.bf16.msra.mxu0 0
      %2198 = vmatprep.subr.bf16.mxu0 0
      %2199 = vmatpush1.bf16.msra.mxu0 0
      %2200 = vmatprep.mubr.bf16.mxu0 0
      %2201 = vmatmul.mubr.bf16.gmra.mrb[0].mxu0 %v2163
      %v2202 = vpop.f32.mrb[0].mxu0
      %v2203 = vadd.f32 0.0, %v2202
      %v2204 = vpop.f32.mrb[0].mxu0
      %v2205 = vpop.f32.mrb[0].mxu0
      %v2206 = vpop.f32.mrb[0].mxu0
      %2207 = vdwg.mxu0
      %v2209 = vsel %vm1121, %v2161, 0
      %v2212 = vsel %vm1241, %v2045, 0
      %2214 = vmatprep.subr.bf16.mxu0 0
      %2215 = vmatpush1.bf16.msra.mxu0 %v2212
      %2216 = vmatprep.subr.bf16.mxu0 0
      %2217 = vmatpush1.bf16.msra.mxu0 0
      %2218 = vmatprep.subr.bf16.mxu0 0
      %2219 = vmatpush1.bf16.msra.mxu0 0
      %2220 = vmatprep.subr.bf16.mxu0 0
      %2221 = vmatpush1.bf16.msra.mxu0 0
      %2222 = vmatprep.subr.bf16.mxu0 0
      %2223 = vmatpush1.bf16.msra.mxu0 0
      %2224 = vmatprep.subr.bf16.mxu0 0
      %2225 = vmatpush1.bf16.msra.mxu0 0
      %2226 = vmatprep.subr.bf16.mxu0 0
      %2227 = vmatpush1.bf16.msra.mxu0 0
      %2228 = vmatprep.subr.bf16.mxu0 0
      %2229 = vmatpush1.bf16.msra.mxu0 0
      %2230 = vmatprep.subr.bf16.mxu0 0
      %2231 = vmatpush1.bf16.msra.mxu0 0
      %2232 = vmatprep.subr.bf16.mxu0 0
      %2233 = vmatpush1.bf16.msra.mxu0 0
      %2234 = vmatprep.subr.bf16.mxu0 0
      %2235 = vmatpush1.bf16.msra.mxu0 0
      %2236 = vmatprep.subr.bf16.mxu0 0
      %2237 = vmatpush1.bf16.msra.mxu0 0
      %2238 = vmatprep.subr.bf16.mxu0 0
      %2239 = vmatpush1.bf16.msra.mxu0 0
      %2240 = vmatprep.subr.bf16.mxu0 0
      %2241 = vmatpush1.bf16.msra.mxu0 0
      %2242 = vmatprep.subr.bf16.mxu0 0
      %2243 = vmatpush1.bf16.msra.mxu0 0
      %2244 = vmatprep.subr.bf16.mxu0 0
      %2245 = vmatpush1.bf16.msra.mxu0 0
      %2246 = vmatprep.mubr.bf16.mxu0 0
      %2247 = vmatmul.mubr.bf16.gmra.mrb[0].mxu0 %v2209
      %v2248 = vpop.f32.mrb[0].mxu0
      %v2249 = vadd.f32 0.0, %v2248
      %v2250 = vpop.f32.mrb[0].mxu0
      %v2251 = vpop.f32.mrb[0].mxu0
      %v2252 = vpop.f32.mrb[0].mxu0
      %2253 = vdwg.mxu0
      %v2254 = vpack.c.bf16 %v2249, %v2203
      %s2255 = scalar_lea.vmem %s828, 8
      %v2256 = vld [vmem:[%s2255] sm:$0xf]
      %v2258 = vsel %vm1121, %v2254, 0
      %v2261 = vsel %vm1241, %v2256, 0
      %2263 = vmatprep.subr.bf16.mxu0 0
      %2264 = vmatpush1.bf16.msra.mxu0 %v2261
      %2265 = vmatprep.subr.bf16.mxu0 0
      %2266 = vmatpush1.bf16.msra.mxu0 0
      %2267 = vmatprep.subr.bf16.mxu0 0
      %2268 = vmatpush1.bf16.msra.mxu0 0
      %2269 = vmatprep.subr.bf16.mxu0 0
      %2270 = vmatpush1.bf16.msra.mxu0 0
      %2271 = vmatprep.subr.bf16.mxu0 0
      %2272 = vmatpush1.bf16.msra.mxu0 0
      %2273 = vmatprep.subr.bf16.mxu0 0
      %2274 = vmatpush1.bf16.msra.mxu0 0
      %2275 = vmatprep.subr.bf16.mxu0 0
      %2276 = vmatpush1.bf16.msra.mxu0 0
      %2277 = vmatprep.subr.bf16.mxu0 0
      %2278 = vmatpush1.bf16.msra.mxu0 0
      %2279 = vmatprep.subr.bf16.mxu0 0
      %2280 = vmatpush1.bf16.msra.mxu0 0
      %2281 = vmatprep.subr.bf16.mxu0 0
      %2282 = vmatpush1.bf16.msra.mxu0 0
      %2283 = vmatprep.subr.bf16.mxu0 0
      %2284 = vmatpush1.bf16.msra.mxu0 0
      %2285 = vmatprep.subr.bf16.mxu0 0
      %2286 = vmatpush1.bf16.msra.mxu0 0
      %2287 = vmatprep.subr.bf16.mxu0 0
      %2288 = vmatpush1.bf16.msra.mxu0 0
      %2289 = vmatprep.subr.bf16.mxu0 0
      %2290 = vmatpush1.bf16.msra.mxu0 0
      %2291 = vmatprep.subr.bf16.mxu0 0
      %2292 = vmatpush1.bf16.msra.mxu0 0
      %2293 = vmatprep.subr.bf16.mxu0 0
      %2294 = vmatpush1.bf16.msra.mxu0 0
      %2295 = vmatprep.mubr.bf16.mxu0 0
      %2296 = vmatmul.mubr.bf16.gmra.mrb[0].mxu0 %v2258
      %v2297 = vpop.f32.mrb[0].mxu0
      %v2298 = vadd.f32 0.0, %v2297
      %v2299 = vpop.f32.mrb[0].mxu0
      %v2300 = vpop.f32.mrb[0].mxu0
      %v2301 = vadd.f32 0.0, %v2300
      %v2302 = vpop.f32.mrb[0].mxu0
      %2303 = vdwg.mxu0
      %v2304 = vadd.f32 %v1836, %v2298
      %v2305 = vadd.f32 %v1839, %v2301
      %s2306 = scalar_lea.vmem %s801, 48
      %v2307 = vld [vmem:[%s2306] sm:$0xf]
      %v2308 = vld [vmem:[%s2306 + $0x4] sm:$0xf]
      %v2309 = vld [vmem:[%s2306 + $0x8] sm:$0xf]
      %v2310 = vld [vmem:[%s2306 + $0xc] sm:$0xf]
      %s2311 = scalar_lea.vmem %s805, 3
      %v2312 = vld [vmem:[%s2311] sm:$0x1]
      %v2314 = vlaneseq
      %v2315 = vshrl.u32 %v2314, 7
      %v2316 = vsub.s32 0, %v2315
      %v2317 = vrot.slane %v2312, %v2316
      %v2323 = vunpack.c.l.b16 %v2307
      %v2324 = vunpack.c.l.b16 %v2308
      %v2325 = vunpack.c.l.b16 %v2309
      %v2326 = vunpack.c.l.b16 %v2310
      %v2327 = vpack.c.b16 %v2324, %v2323
      %v2328 = vpack.c.b16 %v2326, %v2325
      %2331 = vmatprep.subr.bf16.mxu0 0
      %2332 = vmatpush1.bf16.msra.mxu0 %v2327
      %2333 = vmatprep.subr.bf16.mxu0 0
      %2334 = vmatpush1.bf16.msra.mxu0 %v2328
      %2335 = vmatprep.subr.bf16.mxu0 0
      %2336 = vmatpush1.bf16.msra.mxu0 0
      %2337 = vmatprep.subr.bf16.mxu0 0
      %2338 = vmatpush1.bf16.msra.mxu0 0
      %2339 = vmatprep.subr.bf16.mxu0 0
      %2340 = vmatpush1.bf16.msra.mxu0 0
      %2341 = vmatprep.subr.bf16.mxu0 0
      %2342 = vmatpush1.bf16.msra.mxu0 0
      %2343 = vmatprep.subr.bf16.mxu0 0
      %2344 = vmatpush1.bf16.msra.mxu0 0
      %2345 = vmatprep.subr.bf16.mxu0 0
      %2346 = vmatpush1.bf16.msra.mxu0 0
      %2347 = vmatprep.subr.bf16.mxu0 0
      %2348 = vmatpush1.bf16.msra.mxu0 0
      %2349 = vmatprep.subr.bf16.mxu0 0
      %2350 = vmatpush1.bf16.msra.mxu0 0
      %2351 = vmatprep.subr.bf16.mxu0 0
      %2352 = vmatpush1.bf16.msra.mxu0 0
      %2353 = vmatprep.subr.bf16.mxu0 0
      %2354 = vmatpush1.bf16.msra.mxu0 0
      %2355 = vmatprep.subr.bf16.mxu0 0
      %2356 = vmatpush1.bf16.msra.mxu0 0
      %2357 = vmatprep.subr.bf16.mxu0 0
      %2358 = vmatpush1.bf16.msra.mxu0 0
      %2359 = vmatprep.subr.bf16.mxu0 0
      %2360 = vmatpush1.bf16.msra.mxu0 0
      %2361 = vmatprep.subr.bf16.mxu0 0
      %2362 = vmatpush1.bf16.msra.mxu0 0
      %2363 = vmatprep.mubr.bf16.mxu0 0
      %2364 = vmatmul.mubr.bf16.gmra.mrb[0].mxu0 %v944
      %v2365 = vpop.f32.mrb[0].mxu0
      %v2366 = vadd.f32 %v2317, %v2365
      %v2367 = vpop.f32.mrb[0].mxu0
      %v2368 = vpop.f32.mrb[0].mxu0
      %v2369 = vadd.f32 %v2317, %v2368
      %v2370 = vpop.f32.mrb[0].mxu0
      %2371 = vdwg.mxu0
      %s2372 = scalar_lea.vmem %s810, 48
      %v2373 = vld [vmem:[%s2372] sm:$0xf]
      %v2374 = vld [vmem:[%s2372 + $0x4] sm:$0xf]
      %v2375 = vld [vmem:[%s2372 + $0x8] sm:$0xf]
      %v2376 = vld [vmem:[%s2372 + $0xc] sm:$0xf]
      %s2377 = scalar_lea.vmem %s814, 3
      %v2378 = vld [vmem:[%s2377] sm:$0x1]
      %v2380 = vlaneseq
      %v2381 = vshrl.u32 %v2380, 7
      %v2382 = vsub.s32 0, %v2381
      %v2383 = vrot.slane %v2378, %v2382
      %v2389 = vunpack.c.l.b16 %v2373
      %v2390 = vunpack.c.l.b16 %v2374
      %v2391 = vunpack.c.l.b16 %v2375
      %v2392 = vunpack.c.l.b16 %v2376
      %v2393 = vpack.c.b16 %v2390, %v2389
      %v2394 = vpack.c.b16 %v2392, %v2391
      %2397 = vmatprep.subr.bf16.mxu0 0
      %2398 = vmatpush1.bf16.msra.mxu0 %v2393
      %2399 = vmatprep.subr.bf16.mxu0 0
      %2400 = vmatpush1.bf16.msra.mxu0 %v2394
      %2401 = vmatprep.subr.bf16.mxu0 0
      %2402 = vmatpush1.bf16.msra.mxu0 0
      %2403 = vmatprep.subr.bf16.mxu0 0
      %2404 = vmatpush1.bf16.msra.mxu0 0
      %2405 = vmatprep.subr.bf16.mxu0 0
      %2406 = vmatpush1.bf16.msra.mxu0 0
      %2407 = vmatprep.subr.bf16.mxu0 0
      %2408 = vmatpush1.bf16.msra.mxu0 0
      %2409 = vmatprep.subr.bf16.mxu0 0
      %2410 = vmatpush1.bf16.msra.mxu0 0
      %2411 = vmatprep.subr.bf16.mxu0 0
      %2412 = vmatpush1.bf16.msra.mxu0 0
      %2413 = vmatprep.subr.bf16.mxu0 0
      %2414 = vmatpush1.bf16.msra.mxu0 0
      %2415 = vmatprep.subr.bf16.mxu0 0
      %2416 = vmatpush1.bf16.msra.mxu0 0
      %2417 = vmatprep.subr.bf16.mxu0 0
      %2418 = vmatpush1.bf16.msra.mxu0 0
      %2419 = vmatprep.subr.bf16.mxu0 0
      %2420 = vmatpush1.bf16.msra.mxu0 0
      %2421 = vmatprep.subr.bf16.mxu0 0
      %2422 = vmatpush1.bf16.msra.mxu0 0
      %2423 = vmatprep.subr.bf16.mxu0 0
      %2424 = vmatpush1.bf16.msra.mxu0 0
      %2425 = vmatprep.subr.bf16.mxu0 0
      %2426 = vmatpush1.bf16.msra.mxu0 0
      %2427 = vmatprep.subr.bf16.mxu0 0
      %2428 = vmatpush1.bf16.msra.mxu0 0
      %2429 = vmatprep.mubr.bf16.mxu0 0
      %2430 = vmatmul.mubr.bf16.gmra.mrb[0].mxu0 %v944
      %v2431 = vpop.f32.mrb[0].mxu0
      %v2432 = vadd.f32 %v2383, %v2431
      %v2433 = vpop.f32.mrb[0].mxu0
      %v2434 = vpop.f32.mrb[0].mxu0
      %v2435 = vadd.f32 %v2383, %v2434
      %v2436 = vpop.f32.mrb[0].mxu0
      %2437 = vdwg.mxu0
      %s2438 = scalar_lea.vmem %s819, 48
      %v2439 = vld [vmem:[%s2438] sm:$0xf]
      %v2440 = vld [vmem:[%s2438 + $0x4] sm:$0xf]
      %v2441 = vld [vmem:[%s2438 + $0x8] sm:$0xf]
      %v2442 = vld [vmem:[%s2438 + $0xc] sm:$0xf]
      %s2443 = scalar_lea.vmem %s823, 3
      %v2444 = vld [vmem:[%s2443] sm:$0x1]
      %v2446 = vlaneseq
      %v2447 = vshrl.u32 %v2446, 7
      %v2448 = vsub.s32 0, %v2447
      %v2449 = vrot.slane %v2444, %v2448
      %v2455 = vunpack.c.l.b16 %v2439
      %v2456 = vunpack.c.l.b16 %v2440
      %v2457 = vunpack.c.l.b16 %v2441
      %v2458 = vunpack.c.l.b16 %v2442
      %v2459 = vpack.c.b16 %v2456, %v2455
      %v2460 = vpack.c.b16 %v2458, %v2457
      %2463 = vmatprep.subr.bf16.mxu0 0
      %2464 = vmatpush1.bf16.msra.mxu0 %v2459
      %2465 = vmatprep.subr.bf16.mxu0 0
      %2466 = vmatpush1.bf16.msra.mxu0 %v2460
      %2467 = vmatprep.subr.bf16.mxu0 0
      %2468 = vmatpush1.bf16.msra.mxu0 0
      %2469 = vmatprep.subr.bf16.mxu0 0
      %2470 = vmatpush1.bf16.msra.mxu0 0
      %2471 = vmatprep.subr.bf16.mxu0 0
      %2472 = vmatpush1.bf16.msra.mxu0 0
      %2473 = vmatprep.subr.bf16.mxu0 0
      %2474 = vmatpush1.bf16.msra.mxu0 0
      %2475 = vmatprep.subr.bf16.mxu0 0
      %2476 = vmatpush1.bf16.msra.mxu0 0
      %2477 = vmatprep.subr.bf16.mxu0 0
      %2478 = vmatpush1.bf16.msra.mxu0 0
      %2479 = vmatprep.subr.bf16.mxu0 0
      %2480 = vmatpush1.bf16.msra.mxu0 0
      %2481 = vmatprep.subr.bf16.mxu0 0
      %2482 = vmatpush1.bf16.msra.mxu0 0
      %2483 = vmatprep.subr.bf16.mxu0 0
      %2484 = vmatpush1.bf16.msra.mxu0 0
      %2485 = vmatprep.subr.bf16.mxu0 0
      %2486 = vmatpush1.bf16.msra.mxu0 0
      %2487 = vmatprep.subr.bf16.mxu0 0
      %2488 = vmatpush1.bf16.msra.mxu0 0
      %2489 = vmatprep.subr.bf16.mxu0 0
      %2490 = vmatpush1.bf16.msra.mxu0 0
      %2491 = vmatprep.subr.bf16.mxu0 0
      %2492 = vmatpush1.bf16.msra.mxu0 0
      %2493 = vmatprep.subr.bf16.mxu0 0
      %2494 = vmatpush1.bf16.msra.mxu0 0
      %2495 = vmatprep.mubr.bf16.mxu0 0
      %2496 = vmatmul.mubr.bf16.gmra.mrb[0].mxu0 %v944
      %v2497 = vpop.f32.mrb[0].mxu0
      %v2498 = vadd.f32 %v2449, %v2497
      %v2499 = vpop.f32.mrb[0].mxu0
      %v2500 = vpop.f32.mrb[0].mxu0
      %v2501 = vadd.f32 %v2449, %v2500
      %v2502 = vpop.f32.mrb[0].mxu0
      %2503 = vdwg.mxu0
      %v2504 = vpack.c.bf16 %v2366, %v2366
      %v2505 = vpack.c.bf16 %v2369, %v2369
      %v2506 = vpack.c.bf16 %v2432, %v2432
      %v2507 = vpack.c.bf16 %v2435, %v2435
      %v2508 = vpack.c.bf16 %v2498, %v2498
      %v2509 = vpack.c.bf16 %v2501, %v2501
      %v2511 = vsel %vm1121, %v2504, 0
      %v2514 = vsel %vm1121, %v2506, 0
      %2516 = vmatprep.subr.bf16.mxu0 0
      %2517 = vmatpush1.bf16.xpose.msra.mxu0 %v2514
      %2518 = vmatprep.subr.bf16.mxu0 0
      %2519 = vmatpush1.bf16.xpose.msra.mxu0 0
      %2520 = vmatprep.subr.bf16.mxu0 0
      %2521 = vmatpush1.bf16.xpose.msra.mxu0 0
      %2522 = vmatprep.subr.bf16.mxu0 0
      %2523 = vmatpush1.bf16.xpose.msra.mxu0 0
      %2524 = vmatprep.subr.bf16.mxu0 0
      %2525 = vmatpush1.bf16.xpose.msra.mxu0 0
      %2526 = vmatprep.subr.bf16.mxu0 0
      %2527 = vmatpush1.bf16.xpose.msra.mxu0 0
      %2528 = vmatprep.subr.bf16.mxu0 0
      %2529 = vmatpush1.bf16.xpose.msra.mxu0 0
      %2530 = vmatprep.subr.bf16.mxu0 0
      %2531 = vmatpush1.bf16.xpose.msra.mxu0 0
      %2532 = vmatprep.subr.bf16.mxu0 0
      %2533 = vmatpush1.bf16.xpose.msra.mxu0 0
      %2534 = vmatprep.subr.bf16.mxu0 0
      %2535 = vmatpush1.bf16.xpose.msra.mxu0 0
      %2536 = vmatprep.subr.bf16.mxu0 0
      %2537 = vmatpush1.bf16.xpose.msra.mxu0 0
      %2538 = vmatprep.subr.bf16.mxu0 0
      %2539 = vmatpush1.bf16.xpose.msra.mxu0 0
      %2540 = vmatprep.subr.bf16.mxu0 0
      %2541 = vmatpush1.bf16.xpose.msra.mxu0 0
      %2542 = vmatprep.subr.bf16.mxu0 0
      %2543 = vmatpush1.bf16.xpose.msra.mxu0 0
      %2544 = vmatprep.subr.bf16.mxu0 0
      %2545 = vmatpush1.bf16.xpose.msra.mxu0 0
      %2546 = vmatprep.subr.bf16.mxu0 0
      %2547 = vmatpush1.bf16.xpose.msra.mxu0 0
      %2548 = vmatprep.mubr.bf16.mxu0 0
      %2549 = vmatmul.mubr.bf16.gmra.mrb[0].mxu0 %v2511
      %v2550 = vpop.f32.mrb[0].mxu0
      %v2551 = vadd.f32 %v919, %v2550
      %v2552 = vpop.f32.mrb[0].mxu0
      %v2553 = vpop.f32.mrb[0].mxu0
      %v2554 = vpop.f32.mrb[0].mxu0
      %2555 = vdwg.mxu0
      %v2557 = vsel %vm1121, %v2505, 0
      %v2560 = vsel %vm1121, %v2507, 0
      %2562 = vmatprep.subr.bf16.mxu0 0
      %2563 = vmatpush1.bf16.xpose.msra.mxu0 %v2560
      %2564 = vmatprep.subr.bf16.mxu0 0
      %2565 = vmatpush1.bf16.xpose.msra.mxu0 0
      %2566 = vmatprep.subr.bf16.mxu0 0
      %2567 = vmatpush1.bf16.xpose.msra.mxu0 0
      %2568 = vmatprep.subr.bf16.mxu0 0
      %2569 = vmatpush1.bf16.xpose.msra.mxu0 0
      %2570 = vmatprep.subr.bf16.mxu0 0
      %2571 = vmatpush1.bf16.xpose.msra.mxu0 0
      %2572 = vmatprep.subr.bf16.mxu0 0
      %2573 = vmatpush1.bf16.xpose.msra.mxu0 0
      %2574 = vmatprep.subr.bf16.mxu0 0
      %2575 = vmatpush1.bf16.xpose.msra.mxu0 0
      %2576 = vmatprep.subr.bf16.mxu0 0
      %2577 = vmatpush1.bf16.xpose.msra.mxu0 0
      %2578 = vmatprep.subr.bf16.mxu0 0
      %2579 = vmatpush1.bf16.xpose.msra.mxu0 0
      %2580 = vmatprep.subr.bf16.mxu0 0
      %2581 = vmatpush1.bf16.xpose.msra.mxu0 0
      %2582 = vmatprep.subr.bf16.mxu0 0
      %2583 = vmatpush1.bf16.xpose.msra.mxu0 0
      %2584 = vmatprep.subr.bf16.mxu0 0
      %2585 = vmatpush1.bf16.xpose.msra.mxu0 0
      %2586 = vmatprep.subr.bf16.mxu0 0
      %2587 = vmatpush1.bf16.xpose.msra.mxu0 0
      %2588 = vmatprep.subr.bf16.mxu0 0
      %2589 = vmatpush1.bf16.xpose.msra.mxu0 0
      %2590 = vmatprep.subr.bf16.mxu0 0
      %2591 = vmatpush1.bf16.xpose.msra.mxu0 0
      %2592 = vmatprep.subr.bf16.mxu0 0
      %2593 = vmatpush1.bf16.xpose.msra.mxu0 0
      %2594 = vmatprep.mubr.bf16.mxu0 0
      %2595 = vmatmul.mubr.bf16.gmra.mrb[0].mxu0 %v2557
      %v2596 = vpop.f32.mrb[0].mxu0
      %v2597 = vadd.f32 %v919, %v2596
      %v2598 = vpop.f32.mrb[0].mxu0
      %v2599 = vpop.f32.mrb[0].mxu0
      %v2600 = vpop.f32.mrb[0].mxu0
      %2601 = vdwg.mxu0
      %v2602 = vsel %vm1121, %v2551, -inf
      %2603 = vmax.xlane.f32.xlu0 %v2602
      %v2604 = vpop.xlane.xlu0 %2603
      %v2605 = vsel %vm1121, %v2597, -inf
      %2606 = vmax.xlane.f32.xlu0 %v2605
      %v2607 = vpop.xlane.xlu0 %2606
      %v2608 = vsub.f32 %v2551, %v2604
      %v2609 = vsub.f32 %v2597, %v2607
      %v2610 = vmul.f32 %v2608, 1.442695
      %v2611 = vpow.pop %v2610
      %v2612 = vmul.f32 %v2609, 1.442695
      %v2613 = vpow.pop %v2612
      %v2614 = vsel %vm1121, %v2611, 0.0
      %2615 = vadd.xlane.f32.xlu0 %v2614
      %v2616 = vpop.xlane.xlu0 %2615
      %v2617 = vsel %vm1121, %v2613, 0.0
      %2618 = vadd.xlane.f32.xlu0 %v2617
      %v2619 = vpop.xlane.xlu0 %2618
      %v2620 = vrcp.pop %v2616
      %v2621 = vmul.f32 %v2611, %v2620
      %v2622 = vrcp.pop %v2619
      %v2623 = vmul.f32 %v2613, %v2622
      %v2624 = vpack.c.bf16 %v2621, %v2621
      %v2625 = vpack.c.bf16 %v2623, %v2623
      %v2627 = vsel %vm1121, %v2624, 0
      %v2630 = vsel %vm1241, %v2508, 0
      %2632 = vmatprep.subr.bf16.mxu0 0
      %2633 = vmatpush1.bf16.msra.mxu0 %v2630
      %2634 = vmatprep.subr.bf16.mxu0 0
      %2635 = vmatpush1.bf16.msra.mxu0 0
      %2636 = vmatprep.subr.bf16.mxu0 0
      %2637 = vmatpush1.bf16.msra.mxu0 0
      %2638 = vmatprep.subr.bf16.mxu0 0
      %2639 = vmatpush1.bf16.msra.mxu0 0
      %2640 = vmatprep.subr.bf16.mxu0 0
      %2641 = vmatpush1.bf16.msra.mxu0 0
      %2642 = vmatprep.subr.bf16.mxu0 0
      %2643 = vmatpush1.bf16.msra.mxu0 0
      %2644 = vmatprep.subr.bf16.mxu0 0
      %2645 = vmatpush1.bf16.msra.mxu0 0
      %2646 = vmatprep.subr.bf16.mxu0 0
      %2647 = vmatpush1.bf16.msra.mxu0 0
      %2648 = vmatprep.subr.bf16.mxu0 0
      %2649 = vmatpush1.bf16.msra.mxu0 0
      %2650 = vmatprep.subr.bf16.mxu0 0
      %2651 = vmatpush1.bf16.msra.mxu0 0
      %2652 = vmatprep.subr.bf16.mxu0 0
      %2653 = vmatpush1.bf16.msra.mxu0 0
      %2654 = vmatprep.subr.bf16.mxu0 0
      %2655 = vmatpush1.bf16.msra.mxu0 0
      %2656 = vmatprep.subr.bf16.mxu0 0
      %2657 = vmatpush1.bf16.msra.mxu0 0
      %2658 = vmatprep.subr.bf16.mxu0 0
      %2659 = vmatpush1.bf16.msra.mxu0 0
      %2660 = vmatprep.subr.bf16.mxu0 0
      %2661 = vmatpush1.bf16.msra.mxu0 0
      %2662 = vmatprep.subr.bf16.mxu0 0
      %2663 = vmatpush1.bf16.msra.mxu0 0
      %2664 = vmatprep.mubr.bf16.mxu0 0
      %2665 = vmatmul.mubr.bf16.gmra.mrb[0].mxu0 %v2627
      %v2666 = vpop.f32.mrb[0].mxu0
      %v2667 = vadd.f32 0.0, %v2666
      %v2668 = vpop.f32.mrb[0].mxu0
      %v2669 = vpop.f32.mrb[0].mxu0
      %v2670 = vpop.f32.mrb[0].mxu0
      %2671 = vdwg.mxu0
      %v2673 = vsel %vm1121, %v2625, 0
      %v2676 = vsel %vm1241, %v2509, 0
      %2678 = vmatprep.subr.bf16.mxu0 0
      %2679 = vmatpush1.bf16.msra.mxu0 %v2676
      %2680 = vmatprep.subr.bf16.mxu0 0
      %2681 = vmatpush1.bf16.msra.mxu0 0
      %2682 = vmatprep.subr.bf16.mxu0 0
      %2683 = vmatpush1.bf16.msra.mxu0 0
      %2684 = vmatprep.subr.bf16.mxu0 0
      %2685 = vmatpush1.bf16.msra.mxu0 0
      %2686 = vmatprep.subr.bf16.mxu0 0
      %2687 = vmatpush1.bf16.msra.mxu0 0
      %2688 = vmatprep.subr.bf16.mxu0 0
      %2689 = vmatpush1.bf16.msra.mxu0 0
      %2690 = vmatprep.subr.bf16.mxu0 0
      %2691 = vmatpush1.bf16.msra.mxu0 0
      %2692 = vmatprep.subr.bf16.mxu0 0
      %2693 = vmatpush1.bf16.msra.mxu0 0
      %2694 = vmatprep.subr.bf16.mxu0 0
      %2695 = vmatpush1.bf16.msra.mxu0 0
      %2696 = vmatprep.subr.bf16.mxu0 0
      %2697 = vmatpush1.bf16.msra.mxu0 0
      %2698 = vmatprep.subr.bf16.mxu0 0
      %2699 = vmatpush1.bf16.msra.mxu0 0
      %2700 = vmatprep.subr.bf16.mxu0 0
      %2701 = vmatpush1.bf16.msra.mxu0 0
      %2702 = vmatprep.subr.bf16.mxu0 0
      %2703 = vmatpush1.bf16.msra.mxu0 0
      %2704 = vmatprep.subr.bf16.mxu0 0
      %2705 = vmatpush1.bf16.msra.mxu0 0
      %2706 = vmatprep.subr.bf16.mxu0 0
      %2707 = vmatpush1.bf16.msra.mxu0 0
      %2708 = vmatprep.subr.bf16.mxu0 0
      %2709 = vmatpush1.bf16.msra.mxu0 0
      %2710 = vmatprep.mubr.bf16.mxu0 0
      %2711 = vmatmul.mubr.bf16.gmra.mrb[0].mxu0 %v2673
      %v2712 = vpop.f32.mrb[0].mxu0
      %v2713 = vadd.f32 0.0, %v2712
      %v2714 = vpop.f32.mrb[0].mxu0
      %v2715 = vpop.f32.mrb[0].mxu0
      %v2716 = vpop.f32.mrb[0].mxu0
      %2717 = vdwg.mxu0
      %v2718 = vpack.c.bf16 %v2713, %v2667
      %s2719 = scalar_lea.vmem %s828, 12
      %v2720 = vld [vmem:[%s2719] sm:$0xf]
      %v2722 = vsel %vm1121, %v2718, 0
      %v2725 = vsel %vm1241, %v2720, 0
      %2727 = vmatprep.subr.bf16.mxu0 0
      %2728 = vmatpush1.bf16.msra.mxu0 %v2725
      %2729 = vmatprep.subr.bf16.mxu0 0
      %2730 = vmatpush1.bf16.msra.mxu0 0
      %2731 = vmatprep.subr.bf16.mxu0 0
      %2732 = vmatpush1.bf16.msra.mxu0 0
      %2733 = vmatprep.subr.bf16.mxu0 0
      %2734 = vmatpush1.bf16.msra.mxu0 0
      %2735 = vmatprep.subr.bf16.mxu0 0
      %2736 = vmatpush1.bf16.msra.mxu0 0
      %2737 = vmatprep.subr.bf16.mxu0 0
      %2738 = vmatpush1.bf16.msra.mxu0 0
      %2739 = vmatprep.subr.bf16.mxu0 0
      %2740 = vmatpush1.bf16.msra.mxu0 0
      %2741 = vmatprep.subr.bf16.mxu0 0
      %2742 = vmatpush1.bf16.msra.mxu0 0
      %2743 = vmatprep.subr.bf16.mxu0 0
      %2744 = vmatpush1.bf16.msra.mxu0 0
      %2745 = vmatprep.subr.bf16.mxu0 0
      %2746 = vmatpush1.bf16.msra.mxu0 0
      %2747 = vmatprep.subr.bf16.mxu0 0
      %2748 = vmatpush1.bf16.msra.mxu0 0
      %2749 = vmatprep.subr.bf16.mxu0 0
      %2750 = vmatpush1.bf16.msra.mxu0 0
      %2751 = vmatprep.subr.bf16.mxu0 0
      %2752 = vmatpush1.bf16.msra.mxu0 0
      %2753 = vmatprep.subr.bf16.mxu0 0
      %2754 = vmatpush1.bf16.msra.mxu0 0
      %2755 = vmatprep.subr.bf16.mxu0 0
      %2756 = vmatpush1.bf16.msra.mxu0 0
      %2757 = vmatprep.subr.bf16.mxu0 0
      %2758 = vmatpush1.bf16.msra.mxu0 0
      %2759 = vmatprep.mubr.bf16.mxu0 0
      %2760 = vmatmul.mubr.bf16.gmra.mrb[0].mxu0 %v2722
      %v2761 = vpop.f32.mrb[0].mxu0
      %v2762 = vadd.f32 0.0, %v2761
      %v2763 = vpop.f32.mrb[0].mxu0
      %v2764 = vpop.f32.mrb[0].mxu0
      %v2765 = vadd.f32 0.0, %v2764
      %v2766 = vpop.f32.mrb[0].mxu0
      %2767 = vdwg.mxu0
      %v2768 = vadd.f32 %v2304, %v2762
      %v2769 = vadd.f32 %v2305, %v2765
      %v2770 = vadd.f32 %v870, %v2768
      %v2771 = vadd.f32 %v871, %v2769
      %v2772 = vld [vmem:[%s831] sm:$0x1]
      %v2774 = vlaneseq
      %v2775 = vshrl.u32 %v2774, 7
      %v2776 = vsub.s32 0, %v2775
      %v2777 = vrot.slane %v2772, %v2776
      %v2779 = vadd.f32 %v2770, %v2777
      %v2780 = vadd.f32 %v2771, %v2777
      %v2781 = vld [vmem:[%s834] sm:$0x1]
      %v2782 = vld [vmem:[%s837] sm:$0x1]
      %v2783 = vsel %vm874, %v2779, 0.0
      %2784 = vadd.xlane.f32.xlu0 %v2783
      %v2785 = vpop.xlane.xlu0 %2784
      %v2786 = vsel %vm874, %v2780, 0.0
      %2787 = vadd.xlane.f32.xlu0 %v2786
      %v2788 = vpop.xlane.xlu0 %2787
      %v2789 = vmul.f32 %v2785, %v881
      %v2790 = vmul.f32 %v2788, %v881
      %v2791 = vsub.f32 %v2779, %v2789
      %v2792 = vsub.f32 %v2780, %v2790
      %v2793 = vmul.f32 %v2791, %v2791
      %v2794 = vmul.f32 %v2792, %v2792
      %v2795 = vsel %vm874, %v2793, 0.0
      %2796 = vadd.xlane.f32.xlu0 %v2795
      %v2797 = vpop.xlane.xlu0 %2796
      %v2798 = vsel %vm874, %v2794, 0.0
      %2799 = vadd.xlane.f32.xlu0 %v2798
      %v2800 = vpop.xlane.xlu0 %2799
      %v2801 = vmul.f32 %v2797, %v881
      %v2802 = vmul.f32 %v2800, %v881
      %v2803 = vadd.f32 %v2801, 1e-05
      %v2804 = vadd.f32 %v2802, 1e-05
      %v2805 = vrsqrt.pop %v2803
      %v2806 = vrsqrt.pop %v2804
      %v2807 = vmul.f32 %v2791, %v2805
      %v2808 = vmul.f32 %v2792, %v2806
      %v2810 = vlaneseq
      %v2811 = vshrl.u32 %v2810, 7
      %v2812 = vsub.s32 0, %v2811
      %v2813 = vrot.slane %v2781, %v2812
      %v2815 = vmul.f32 %v2807, %v2813
      %v2816 = vmul.f32 %v2808, %v2813
      %v2818 = vlaneseq
      %v2819 = vshrl.u32 %v2818, 7
      %v2820 = vsub.s32 0, %v2819
      %v2821 = vrot.slane %v2782, %v2820
      %v2823 = vadd.f32 %v2815, %v2821
      %v2824 = vadd.f32 %v2816, %v2821
      %v2825 = vpack.c.bf16 %v2824, %v2823
      %v2826 = vld [vmem:[%s842] sm:$0xf]
      %v2827 = vld [vmem:[%s842 + $0x4] sm:$0xf]
      %v2828 = vld [vmem:[%s842 + $0x8] sm:$0xf]
      %v2829 = vld [vmem:[%s842 + $0xc] sm:$0xf]
      %v2830 = vld [vmem:[%s845] sm:$0x1]
      %v2832 = vlaneseq
      %v2833 = vshrl.u32 %v2832, 7
      %v2834 = vsub.s32 0, %v2833
      %v2835 = vrot.slane %v2830, %v2834
      %v2841 = vunpack.c.l.b16 %v2826
      %v2842 = vunpack.c.l.b16 %v2827
      %v2843 = vunpack.c.l.b16 %v2828
      %v2844 = vunpack.c.l.b16 %v2829
      %v2845 = vpack.c.b16 %v2842, %v2841
      %v2846 = vpack.c.b16 %v2844, %v2843
      %v2850 = vsel %vm874, %v2825, 0
      %2852 = vmatprep.subr.bf16.mxu0 0
      %2853 = vmatpush1.bf16.msra.mxu0 %v2845
      %2854 = vmatprep.subr.bf16.mxu0 0
      %2855 = vmatpush1.bf16.msra.mxu0 %v2846
      %2856 = vmatprep.subr.bf16.mxu0 0
      %2857 = vmatpush1.bf16.msra.mxu0 0
      %2858 = vmatprep.subr.bf16.mxu0 0
      %2859 = vmatpush1.bf16.msra.mxu0 0
      %2860 = vmatprep.subr.bf16.mxu0 0
      %2861 = vmatpush1.bf16.msra.mxu0 0
      %2862 = vmatprep.subr.bf16.mxu0 0
      %2863 = vmatpush1.bf16.msra.mxu0 0
      %2864 = vmatprep.subr.bf16.mxu0 0
      %2865 = vmatpush1.bf16.msra.mxu0 0
      %2866 = vmatprep.subr.bf16.mxu0 0
      %2867 = vmatpush1.bf16.msra.mxu0 0
      %2868 = vmatprep.subr.bf16.mxu0 0
      %2869 = vmatpush1.bf16.msra.mxu0 0
      %2870 = vmatprep.subr.bf16.mxu0 0
      %2871 = vmatpush1.bf16.msra.mxu0 0
      %2872 = vmatprep.subr.bf16.mxu0 0
      %2873 = vmatpush1.bf16.msra.mxu0 0
      %2874 = vmatprep.subr.bf16.mxu0 0
      %2875 = vmatpush1.bf16.msra.mxu0 0
      %2876 = vmatprep.subr.bf16.mxu0 0
      %2877 = vmatpush1.bf16.msra.mxu0 0
      %2878 = vmatprep.subr.bf16.mxu0 0
      %2879 = vmatpush1.bf16.msra.mxu0 0
      %2880 = vmatprep.subr.bf16.mxu0 0
      %2881 = vmatpush1.bf16.msra.mxu0 0
      %2882 = vmatprep.subr.bf16.mxu0 0
      %2883 = vmatpush1.bf16.msra.mxu0 0
      %2884 = vmatprep.mubr.bf16.mxu0 0
      %2885 = vmatmul.mubr.bf16.gmra.mrb[0].mxu0 %v2850
      %v2886 = vpop.f32.mrb[0].mxu0
      %v2887 = vadd.f32 %v2835, %v2886
      %v2888 = vpop.f32.mrb[0].mxu0
      %v2889 = vpop.f32.mrb[0].mxu0
      %v2890 = vadd.f32 %v2835, %v2889
      %v2891 = vpop.f32.mrb[0].mxu0
      %2892 = vdwg.mxu0
      %v2893 = vmul.f32 %v2887, %v2887
      %v2894 = vmul.f32 %v2890, %v2890
      %v2895 = vmul.f32 %v2887, %v2893
      %v2896 = vmul.f32 %v2890, %v2894
      %v2897 = vmul.f32 %v2895, 0.044715
      %v2898 = vmul.f32 %v2896, 0.044715
      %v2899 = vadd.f32 %v2887, %v2897
      %v2900 = vadd.f32 %v2890, %v2898
      %v2901 = vmul.f32 %v2899, 0.7978846
      %v2902 = vmul.f32 %v2900, 0.7978846
      %v2903 = vtanh.pop %v2901
      %v2904 = vtanh.pop %v2902
      %v2905 = vadd.f32 %v2903, 1.0
      %v2906 = vadd.f32 %v2904, 1.0
      %v2907 = vmul.f32 %v2905, 0.5
      %v2908 = vmul.f32 %v2906, 0.5
      %v2909 = vmul.f32 %v2887, %v2907
      %v2910 = vmul.f32 %v2890, %v2908
      %v2911 = vpack.c.bf16 %v2910, %v2909
      %v2912 = vld [vmem:[%s850] sm:$0xf]
      %v2913 = vld [vmem:[%s850 + $0x4] sm:$0xf]
      %v2914 = vld [vmem:[%s850 + $0x8] sm:$0xf]
      %v2915 = vld [vmem:[%s850 + $0xc] sm:$0xf]
      %v2916 = vld [vmem:[%s850 + $0x10] sm:$0xf]
      %v2917 = vld [vmem:[%s850 + $0x14] sm:$0xf]
      %v2918 = vld [vmem:[%s850 + $0x18] sm:$0xf]
      %v2919 = vld [vmem:[%s850 + $0x1c] sm:$0xf]
      %v2920 = vld [vmem:[%s850 + $0x20] sm:$0xf]
      %v2921 = vld [vmem:[%s850 + $0x24] sm:$0xf]
      %v2922 = vld [vmem:[%s850 + $0x28] sm:$0xf]
      %v2923 = vld [vmem:[%s850 + $0x2c] sm:$0xf]
      %v2924 = vld [vmem:[%s850 + $0x30] sm:$0xf]
      %v2925 = vld [vmem:[%s850 + $0x34] sm:$0xf]
      %v2926 = vld [vmem:[%s850 + $0x38] sm:$0xf]
      %v2927 = vld [vmem:[%s850 + $0x3c] sm:$0xf]
      %v2944 = vunpack.c.l.b16 %v2912
      %v2945 = vunpack.c.l.b16 %v2913
      %v2946 = vunpack.c.l.b16 %v2914
      %v2947 = vunpack.c.l.b16 %v2915
      %v2948 = vunpack.c.l.b16 %v2916
      %v2949 = vunpack.c.l.b16 %v2917
      %v2950 = vunpack.c.l.b16 %v2918
      %v2951 = vunpack.c.l.b16 %v2919
      %v2952 = vunpack.c.l.b16 %v2920
      %v2953 = vunpack.c.l.b16 %v2921
      %v2954 = vunpack.c.l.b16 %v2922
      %v2955 = vunpack.c.l.b16 %v2923
      %v2956 = vunpack.c.l.b16 %v2924
      %v2957 = vunpack.c.l.b16 %v2925
      %v2958 = vunpack.c.l.b16 %v2926
      %v2959 = vunpack.c.l.b16 %v2927
      %v2960 = vpack.c.b16 %v2945, %v2944
      %v2961 = vpack.c.b16 %v2947, %v2946
      %v2962 = vpack.c.b16 %v2949, %v2948
      %v2963 = vpack.c.b16 %v2951, %v2950
      %v2964 = vpack.c.b16 %v2953, %v2952
      %v2965 = vpack.c.b16 %v2955, %v2954
      %v2966 = vpack.c.b16 %v2957, %v2956
      %v2967 = vpack.c.b16 %v2959, %v2958
      %2976 = vmatprep.subr.bf16.mxu0 0
      %2977 = vmatpush1.bf16.msra.mxu0 %v2960
      %2978 = vmatprep.subr.bf16.mxu0 0
      %2979 = vmatpush1.bf16.msra.mxu0 %v2961
      %2980 = vmatprep.subr.bf16.mxu0 0
      %2981 = vmatpush1.bf16.msra.mxu0 %v2962
      %2982 = vmatprep.subr.bf16.mxu0 0
      %2983 = vmatpush1.bf16.msra.mxu0 %v2963
      %2984 = vmatprep.subr.bf16.mxu0 0
      %2985 = vmatpush1.bf16.msra.mxu0 %v2964
      %2986 = vmatprep.subr.bf16.mxu0 0
      %2987 = vmatpush1.bf16.msra.mxu0 %v2965
      %2988 = vmatprep.subr.bf16.mxu0 0
      %2989 = vmatpush1.bf16.msra.mxu0 %v2966
      %2990 = vmatprep.subr.bf16.mxu0 0
      %2991 = vmatpush1.bf16.msra.mxu0 %v2967
      %2992 = vmatprep.subr.bf16.mxu0 0
      %2993 = vmatpush1.bf16.msra.mxu0 0
      %2994 = vmatprep.subr.bf16.mxu0 0
      %2995 = vmatpush1.bf16.msra.mxu0 0
      %2996 = vmatprep.subr.bf16.mxu0 0
      %2997 = vmatpush1.bf16.msra.mxu0 0
      %2998 = vmatprep.subr.bf16.mxu0 0
      %2999 = vmatpush1.bf16.msra.mxu0 0
      %3000 = vmatprep.subr.bf16.mxu0 0
      %3001 = vmatpush1.bf16.msra.mxu0 0
      %3002 = vmatprep.subr.bf16.mxu0 0
      %3003 = vmatpush1.bf16.msra.mxu0 0
      %3004 = vmatprep.subr.bf16.mxu0 0
      %3005 = vmatpush1.bf16.msra.mxu0 0
      %3006 = vmatprep.subr.bf16.mxu0 0
      %3007 = vmatpush1.bf16.msra.mxu0 0
      %3008 = vmatprep.mubr.bf16.mxu0 0
      %3009 = vmatmul.mubr.bf16.gmra.mrb[0].mxu0 %v2911
      %v3010 = vpop.f32.mrb[0].mxu0
      %v3011 = vadd.f32 0.0, %v3010
      %v3012 = vpop.f32.mrb[0].mxu0
      %v3013 = vpop.f32.mrb[0].mxu0
      %v3014 = vadd.f32 0.0, %v3013
      %v3015 = vpop.f32.mrb[0].mxu0
      %3016 = vdwg.mxu0
      %v3017 = vadd.f32 %v2779, %v3011
      %v3018 = vadd.f32 %v2780, %v3014
      %v3019 = vld [vmem:[%s853] sm:$0x1]
      %v3021 = vlaneseq
      %v3022 = vshrl.u32 %v3021, 7
      %v3023 = vsub.s32 0, %v3022
      %v3024 = vrot.slane %v3019, %v3023
      %v3026 = vadd.f32 %v3017, %v3024
      %v3027 = vadd.f32 %v3018, %v3024
      %p3028 = scmp.lt.s32.totalorder %s34, 1
      // Predicated region
      $region97: #{cross_cond_gpt_head_forward.2} parent=91 // pred_check
        %p3029 = pneg %p3028
      $region98: #{cross_cond_gpt_head_forward.2} parent=91 // pred_check_branch
        %3031 = sbr.rel (%p3029) target = $region100
      $region99: #{cross_cond_gpt_head_forward.2} parent=91 // pred_region
        %3032 = vst.msk [vmem:[#allocation2] sm:$0xff] %vm874, %v3026
        %3033 = vst.msk [vmem:[#allocation2 + $0x8] sm:$0xff] %vm874, %v3027
      $region100: #{cross_cond_gpt_head_forward.2} parent=91 // pred_fallthru
        _
      %p3034 = scmp.eq.s32.totalorder %s34, 1
      // Predicated region
      $region101: #{cross_cond_gpt_head_forward.2} parent=91 // pred_check
        %p3035 = pneg %p3034
      $region102: #{cross_cond_gpt_head_forward.2} parent=91 // pred_check_branch
        %3037 = sbr.rel (%p3035) target = $region104
      $region103: #{cross_cond_gpt_head_forward.2} parent=91 // pred_region
        %3038 = vst.msk [vmem:[%s858] sm:$0xff] %vm874, %v3026
        %3039 = vst.msk [vmem:[%s858 + $0x8] sm:$0xff] %vm874, %v3027
      $region104: #{cross_cond_gpt_head_forward.2} parent=91 // pred_fallthru
        _
      %s3040 = smul.u32 2, %s33
      %p3041 = scmp.lt.s32.totalorder %s3040, 1
      %s3042 = scalar_select %p3041, %s3040, 1
      %s3043 = smul.addr %s3042, 8
      %s3044 = scalar_lea.vmem %s18, %s3043
      // Predicated region
      $region105: #{cross_cond_gpt_head_forward.2} parent=91 // pred_check
        %p3045 = pneg %p522
      $region106: #{cross_cond_gpt_head_forward.2} parent=91 // pred_check_branch
        %3047 = sbr.rel (%p3045) target = $region108
      $region107: #{cross_cond_gpt_head_forward.2} parent=91 // pred_region
        %s3048 = smul.u32 2, %s33
      $region108: #{cross_cond_gpt_head_forward.2} parent=91 // pred_fallthru
        _
      // Predicated region
      $region109: #{cross_cond_gpt_head_forward.2} parent=91 // pred_check
        %p3049 = pneg %p522
      $region110: #{cross_cond_gpt_head_forward.2} parent=91 // pred_check_branch
        %3051 = sbr.rel (%p3049) target = $region112
      $region111: #{cross_cond_gpt_head_forward.2} parent=91 // pred_region
        %s3052 = smul.u32 2, %s33
        %p3053 = scmp.lt.s32.totalorder %s3052, 1
        %s3054 = scalar_select %p3053, %s3052, 1
        %s3055 = smul.addr %s3054, 8
        %s3056 = scalar_lea.vmem %s18, %s3055
      $region112: #{cross_cond_gpt_head_forward.2} parent=91 // pred_fallthru
        _
    $region92: #{cross_cond_gpt_head_forward.2} parent=5 // pred_fallthru
      _
    %p3057 = scmp.le.s32.totalorder 2, %s24
    // Predicated region
    $region113: #{cross_cond_gpt_head_forward.2} parent=5 // pred_check
      %p3058 = pneg %p3057
    $region114: #{cross_cond_gpt_head_forward.2} parent=5 // pred_check_branch
      %3060 = sbr.rel (%p3058) target = $region116
    $region115: #{cross_cond_gpt_head_forward.2} parent=5 // pred_region
      %s3061 = ssub.s32 %s24, 2
    $region116: #{cross_cond_gpt_head_forward.2} parent=5 // pred_fallthru
      _
  $region6: #{cross_cond_gpt_head_forward.2} parent=0 // loop_footer
    %s28 = sadd.s32 1, %s24
  $region7: #{cross_cond_gpt_head_forward.2} parent=0 // loop_footer_branch
    %23 = sbr.rel target = $region3
  $region8: #{cross_cond_gpt_head_forward.2} parent=0 // loop_exit
    _

</llo_original>
